<compile_context>
chip_gen: v5e
topology: v5e:2x2
jax: 0.10.0
libtpu: 0.0.40
codegen_flags: <defaults>
</compile_context>

<pallas_src>
import math
from functools import partial

import jax
import jax.numpy as jnp
from jax.experimental import pallas as pl
from jax.experimental.pallas import tpu as pltpu

_VMEM_LIMIT = 48 * 1024 * 1024   # <= v7x physical VMEM (64 MiB); ample for these tiles


def _round_up(x, m):
    return (x + m - 1) // m * m


# --------------------------------------------------------------------------- kernels
def _mm_fused_kernel(*refs, has_affine, relu, has_skip):
    """Tiled matmul with fused epilogue.

    refs = (x, w, [scale, shift], [skip], out, acc_scratch)
      x: (tm, tk) bf16; w: (tk, Cout) bf16; scale/shift: (1, Cout) f32;
      skip: (tm, Cout); out: (tm, Cout); acc: (tm, Cout) f32 scratch (lives across K axis).
    """
    i = 0
    x_ref = refs[i]; i += 1
    w_ref = refs[i]; i += 1
    scale_ref = shift_ref = skip_ref = None
    if has_affine:
        scale_ref, shift_ref = refs[i], refs[i + 1]
        i += 2
    if has_skip:
        skip_ref = refs[i]
        i += 1
    o_ref, acc_ref = refs[i], refs[i + 1]

    k = pl.program_id(1)

    @pl.when(k == 0)
    def _():
        acc_ref[...] = jnp.zeros_like(acc_ref)

    acc_ref[...] += jnp.dot(x_ref[...], w_ref[...],
                            preferred_element_type=jnp.float32)

    @pl.when(k == pl.num_programs(1) - 1)
    def _():
        y = acc_ref[...]
        if has_affine:
            y = y * scale_ref[...] + shift_ref[...]
        if relu:
            y = jnp.maximum(y, 0.0)
        if has_skip:
            y = y + skip_ref[...].astype(jnp.float32)
        o_ref[...] = y.astype(o_ref.dtype)


def _conv3x3_bnrelu_kernel(ph_ref, w_ref, s_ref, t_ref, o_ref, *, stride, m_rows, pw):
    """3x3 conv + folded-BN affine + ReLU for one image.

    ph_ref: (1, stride*stride, L_in, Cin) phase-split, width-padded activation (bf16)
    w_ref : (9, Cin, Cout) bf16
    s/t   : (1, Cout) f32 folded BatchNorm scale / shift
    o_ref : (1, m_rows, Cout) where m_rows = Ho * PW (garbage cols j >= Wo cropped in glue)
    """
    cout = o_ref.shape[-1]
    acc = jnp.zeros((m_rows, cout), jnp.float32)
    t = 0
    for dh in range(3):
        for dw in range(3):
            phase = (dh % stride) * stride + (dw % stride)
            off = (dh // stride) * pw + (dw // stride)
            v = ph_ref[0, phase, off:off + m_rows, :]          # unit-stride 2D slice
            acc = acc + jnp.dot(v, w_ref[t], preferred_element_type=jnp.float32)
            t += 1
    y = jnp.maximum(acc * s_ref[...] + t_ref[...], 0.0)
    o_ref[0] = y.astype(o_ref.dtype)


# --------------------------------------------------------------------------- wrappers
def _matmul_fused(x, w, *, scale=None, shift=None, relu=False, skip=None,
                  out_dtype=jnp.bfloat16, tm=256, tk_max=512):
    """(M, K) @ (K, Cout) with fused BN-affine / ReLU / residual-add epilogue."""
    m, kdim = x.shape
    cout = w.shape[1]
    has_affine = scale is not None
    has_skip = skip is not None

    tm = min(tm, _round_up(m, 8))
    mp = _round_up(m, tm)
    tk = kdim if kdim <= tk_max else tk_max
    kp = _round_up(kdim, tk)

    xb = x.astype(jnp.bfloat16)
    wb = w.astype(jnp.bfloat16)
    if mp != m:
        xb = jnp.pad(xb, ((0, mp - m), (0, 0)))
    if kp != kdim:
        xb = jnp.pad(xb, ((0, 0), (0, kp - kdim)))
        wb = jnp.pad(wb, ((0, kp - kdim), (0, 0)))

    inputs = [xb, wb]
    in_specs = [
        pl.BlockSpec((tm, tk), lambda i, k: (i, k)),
        pl.BlockSpec((tk, cout), lambda i, k: (k, 0)),   # constant weight tile across M
    ]
    if has_affine:
        inputs += [scale.reshape(1, cout).astype(jnp.float32),
                   shift.reshape(1, cout).astype(jnp.float32)]
        in_specs += [pl.BlockSpec((1, cout), lambda i, k: (0, 0)),
                     pl.BlockSpec((1, cout), lambda i, k: (0, 0))]
    if has_skip:
        skb = skip.astype(jnp.bfloat16)
        if mp != m:
            skb = jnp.pad(skb, ((0, mp - m), (0, 0)))
        inputs.append(skb)
        in_specs.append(pl.BlockSpec((tm, cout), lambda i, k: (i, 0)))

    out = pl.pallas_call(
        partial(_mm_fused_kernel, has_affine=has_affine, relu=relu, has_skip=has_skip),
        out_shape=jax.ShapeDtypeStruct((mp, cout), out_dtype),
        grid=(mp // tm, kp // tk),
        in_specs=in_specs,
        out_specs=pl.BlockSpec((tm, cout), lambda i, k: (i, 0)),
        scratch_shapes=[pltpu.VMEM((tm, cout), jnp.float32)],
        compiler_params=pltpu.CompilerParams(
            dimension_semantics=("parallel", "arbitrary"),
            vmem_limit_bytes=_VMEM_LIMIT),
    )(*inputs)
    return out[:m] if mp != m else out


def conv1x1(x, w, *, stride=1, scale=None, shift=None, relu=False, skip=None,
            out_dtype=jnp.bfloat16):
    """1x1 conv (optionally strided) with fused epilogue. x: (N,H,W,Cin); w: (Cin,Cout)."""
    if stride != 1:
        x = x[:, ::stride, ::stride, :]
    n, h, wd, cin = x.shape
    cout = w.shape[-1]
    x2 = x.reshape(n * h * wd, cin)                      # pack batch+spatial into M
    skip2 = skip.reshape(n * h * wd, cout) if skip is not None else None
    y = _matmul_fused(x2, w, scale=scale, shift=shift, relu=relu, skip=skip2,
                      out_dtype=out_dtype)
    return y.reshape(n, h, wd, cout)


def conv3x3_bnrelu(x, w, scale, shift, *, stride, out_dtype=jnp.bfloat16):
    """3x3 conv (padding=1) fused with folded-BN affine + ReLU.

    x: (N,H,W,Cin); w: (3,3,Cin,Cout). The padded activation goes to VMEM once per image
    (no KH*KW im2col in HBM); stride>1 becomes unit-stride taps via a one-time phase split.
    """
    n, h, wd, cin = x.shape
    cout = w.shape[-1]
    ho = (h + 2 - 3) // stride + 1
    wo = (wd + 2 - 3) // stride + 1
    q = (3 - 1) // stride                 # max tap offset inside a phase
    ph_h, ph_w = ho + q, wo + q
    m_rows = ho * ph_w                    # compute on padded width; crop garbage cols later
    l_in = m_rows + q * ph_w + q          # rows needed by the furthest tap

    xp = jnp.pad(x, ((0, 0), (1, 1), (1, 1), (0, 0))).astype(jnp.bfloat16)
    phases = []
    for a in range(stride):
        for b in range(stride):
            p = xp[:, a::stride, b::stride, :][:, :ph_h, :ph_w, :]
            pad_h, pad_w = ph_h - p.shape[1], ph_w - p.shape[2]
            if pad_h or pad_w:
                p = jnp.pad(p, ((0, 0), (0, pad_h), (0, pad_w), (0, 0)))
            p = p.reshape(n, ph_h * ph_w, cin)
            phases.append(jnp.pad(p, ((0, 0), (0, l_in - ph_h * ph_w), (0, 0))))
    ph = jnp.stack(phases, axis=1)        # (N, s*s, L_in, Cin) -- 1x data, no im2col blowup

    wb = w.reshape(9, cin, cout).astype(jnp.bfloat16)
    out = pl.pallas_call(
        partial(_conv3x3_bnrelu_kernel, stride=stride, m_rows=m_rows, pw=ph_w),
        out_shape=jax.ShapeDtypeStruct((n, m_rows, cout), out_dtype),
        grid=(n,),
        in_specs=[
            pl.BlockSpec((1, stride * stride, l_in, cin), lambda i: (i, 0, 0, 0)),
            pl.BlockSpec((9, cin, cout), lambda i: (0, 0, 0)),
            pl.BlockSpec((1, cout), lambda i: (0, 0)),
            pl.BlockSpec((1, cout), lambda i: (0, 0)),
        ],
        out_specs=pl.BlockSpec((1, m_rows, cout), lambda i: (i, 0, 0)),
        compiler_params=pltpu.CompilerParams(
            dimension_semantics=("parallel",),
            vmem_limit_bytes=_VMEM_LIMIT),
    )(ph, wb, scale.reshape(1, cout).astype(jnp.float32),
      shift.reshape(1, cout).astype(jnp.float32))
    return out.reshape(n, ho, ph_w, cout)[:, :, :wo, :]


# --------------------------------------------------------------------------- module
def init_residual_unit(key, input_channels, output_channels, stride):
    """Parameters matching _HoVerNetResidualUnit (BatchNorm folded to inference affine)."""
    internal = output_channels // 4
    keys = jax.random.split(key, 8)

    def conv_w(k, kh, kw, cin, cout):
        fan_in = kh * kw * cin
        return jax.random.normal(k, (kh, kw, cin, cout), jnp.float32) * math.sqrt(2.0 / fan_in)

    def bn(k, c):
        kg, kb, km, kv = jax.random.split(k, 4)
        gamma = 1.0 + 0.05 * jax.random.normal(kg, (c,), jnp.float32)
        beta = 0.05 * jax.random.normal(kb, (c,), jnp.float32)
        mean = 0.05 * jax.random.normal(km, (c,), jnp.float32)
        var = 1.0 + 0.05 * jnp.abs(jax.random.normal(kv, (c,), jnp.float32))
        scale = gamma / jnp.sqrt(var + 1e-5)
        shift = beta - mean * scale
        return {"scale": scale, "shift": shift}

    p = {
        "conv1": conv_w(keys[0], 1, 1, input_channels, internal)[0, 0],   # (Cin, Cint)
        "bn1": bn(keys[1], internal),
        "conv2": conv_w(keys[2], 3, 3, internal, internal),               # (3,3,Cint,Cint)
        "bn2": bn(keys[3], internal),
        "conv3": conv_w(keys[4], 1, 1, internal, output_channels)[0, 0],  # (Cint, Cout)
    }
    if stride != 1 or input_channels != output_channels:
        p["shortcut"] = conv_w(keys[5], 1, 1, input_channels, output_channels)[0, 0]
    return p


@partial(jax.jit, static_argnames=("stride",))
def residual_unit_fwd(params, x_nchw, *, stride):
    """Forward of _HoVerNetResidualUnit. x: (N,Cin,H,W) f32 -> (N,Cout,Ho,Wo) f32."""
    x = jnp.transpose(x_nchw, (0, 2, 3, 1)).astype(jnp.bfloat16)   # NHWC, bf16 activations

    # shortcut branch (strided 1x1 conv) or identity skip
    if "shortcut" in params:
        skip = conv1x1(x, params["shortcut"], stride=stride)
    else:
        skip = x

    # conv1 (1x1) + BN1 + ReLU fused
    out = conv1x1(x, params["conv1"], scale=params["bn1"]["scale"],
                  shift=params["bn1"]["shift"], relu=True)
    # conv2 (3x3, stride, pad=1) + BN2 + ReLU fused
    out = conv3x3_bnrelu(out, params["conv2"], params["bn2"]["scale"],
                         params["bn2"]["shift"], stride=stride)
    # conv3 (1x1) + residual add fused; final output in f32
    out = conv1x1(out, params["conv3"], skip=skip, out_dtype=jnp.float32)

    return jnp.transpose(out, (0, 3, 1, 2))


# --------------------------------------------------------------------------- reference
def _reference_unit(params, x_nchw, *, stride):
    """Pure-JAX reference with the same bf16/f32 dtype pipeline as the Pallas path."""
    x = jnp.transpose(x_nchw, (0, 2, 3, 1)).astype(jnp.bfloat16)

    def conv(a, w, s, pad):
        return jax.lax.conv_general_dilated(
            a.astype(jnp.bfloat16), w.astype(jnp.bfloat16),
            window_strides=(s, s), padding=[(pad, pad), (pad, pad)],
            dimension_numbers=("NHWC", "HWIO", "NHWC"),
            preferred_element_type=jnp.float32)

    def bnrelu(a, bn):
        return jnp.maximum(a * bn["scale"] + bn["shift"], 0.0)

    if "shortcut" in params:
        skip = conv(x, params["shortcut"][None, None], stride, 0).astype(jnp.bfloat16)
    else:
        skip = x
    out = bnrelu(conv(x, params["conv1"][None, None], 1, 0), params["bn1"]).astype(jnp.bfloat16)
    out = bnrelu(conv(out, params["conv2"], stride, 1), params["bn2"]).astype(jnp.bfloat16)
    out = conv(out, params["conv3"][None, None], 1, 0) + skip.astype(jnp.float32)
    return jnp.transpose(out, (0, 3, 1, 2))


# --------------------------------------------------------------------------- main
if __name__ == "__main__":
    N, C_IN, H, W = 2, 32, 16, 16
    C_OUT, STRIDE = 64, 2

    key = jax.random.PRNGKey(0)
    kx, k1, k2 = jax.random.split(key, 3)
    x = jax.random.normal(kx, (N, C_IN, H, W), jnp.float32)

    # Unit A: strided + channel-changing  -> exercises the conv-shortcut branch.
    params_a = init_residual_unit(k1, C_IN, C_OUT, STRIDE)
    # Unit B: stride 1, same channels     -> exercises the identity-skip branch.
    params_b = init_residual_unit(k2, C_OUT, C_OUT, 1)

    out_a = residual_unit_fwd(params_a, x, stride=STRIDE)
    out_b = residual_unit_fwd(params_b, out_a, stride=1)
    out_a, out_b = jax.block_until_ready((out_a, out_b))

    assert out_a.shape == (N, C_OUT, H // STRIDE, W // STRIDE)
    assert out_b.shape == (N, C_OUT, H // STRIDE, W // STRIDE)
    assert bool(jnp.all(jnp.isfinite(out_a))) and bool(jnp.all(jnp.isfinite(out_b)))

    ref_a = _reference_unit(params_a, x, stride=STRIDE)
    ref_b = _reference_unit(params_b, ref_a, stride=1)
    assert jnp.allclose(out_a, ref_a, atol=2.5e-2, rtol=2.5e-2), \
        float(jnp.max(jnp.abs(out_a - ref_a)))
    assert jnp.allclose(out_b, ref_b, atol=2.5e-2, rtol=2.5e-2), \
        float(jnp.max(jnp.abs(out_b - ref_b)))

    print("KERNEL_OK")
</pallas_src>

<mosaic_0001>
module attributes {stable_mosaic.version = 11 : i64} {
  func.func @_mm_fused_kernel(%arg0: i32, %arg1: i32, %arg2: memref<256x32xbf16, #tpu.memory_space<vmem>>, %arg3: memref<32x16xbf16, #tpu.memory_space<vmem>>, %arg4: memref<1x16xf32, #tpu.memory_space<vmem>>, %arg5: memref<1x16xf32, #tpu.memory_space<vmem>>, %arg6: memref<256x16xbf16, #tpu.memory_space<vmem>>, %arg7: memref<256x16xf32, #tpu.memory_space<vmem>>) attributes {dimension_semantics = [#tpu.dimension_semantics<parallel>, #tpu.dimension_semantics<arbitrary>], iteration_bounds = array<i64: 2, 1>, scalar_prefetch = 0 : i64, scratch_operands = 1 : i64, tpu.core_type = #tpu.core_type<tc>, window_params = [{transform_indices = @transform_0, window_bounds = array<i64: 256, 32>}, {transform_indices = @transform_1, window_bounds = array<i64: 32, 16>}, {pipeline_mode = #tpu.pipeline_mode<synchronous>, transform_indices = @transform_2, window_bounds = array<i64: 1, 16>}, {pipeline_mode = #tpu.pipeline_mode<synchronous>, transform_indices = @transform_3, window_bounds = array<i64: 1, 16>}, {transform_indices = @transform_4, window_bounds = array<i64: 256, 16>}]} {
    %c0_i32 = arith.constant 0 : i32
    %0 = arith.cmpi eq, %arg1, %c0_i32 : i32
    %1 = arith.extui %0 : i1 to i32
    %c0_i32_0 = arith.constant 0 : i32
    %2 = arith.cmpi ne, %1, %c0_i32_0 : i32
    scf.if %2 {
      %cst_10 = arith.constant 0.000000e+00 : f32
      %12 = vector.broadcast %cst_10 : f32 to vector<256x16xf32>
      %c0_11 = arith.constant 0 : index
      %c0_12 = arith.constant 0 : index
      %13 = vector.load %arg7[%c0_11, %c0_12] : memref<256x16xf32, #tpu.memory_space<vmem>>, vector<256x16xf32>
      tpu.vector_store %arg7[%c0_11, %c0_12], %12 {strides = array<i32>} : memref<256x16xf32, #tpu.memory_space<vmem>>, vector<256x16xf32>,
    } else {
    }
    %c0 = arith.constant 0 : index
    %c0_1 = arith.constant 0 : index
    %3 = vector.load %arg7[%c0, %c0_1] : memref<256x16xf32, #tpu.memory_space<vmem>>, vector<256x16xf32>
    %c0_2 = arith.constant 0 : index
    %c0_3 = arith.constant 0 : index
    %4 = vector.load %arg2[%c0_2, %c0_3] : memref<256x32xbf16, #tpu.memory_space<vmem>>, vector<256x32xbf16>
    %c0_4 = arith.constant 0 : index
    %c0_5 = arith.constant 0 : index
    %5 = vector.load %arg3[%c0_4, %c0_5] : memref<32x16xbf16, #tpu.memory_space<vmem>>, vector<32x16xbf16>
    %cst = arith.constant dense<0.000000e+00> : vector<256x16xf32>
    %6 = tpu.matmul %4, %5, %cst {dimension_numbers = #tpu.dot_dimension_numbers<[1], [0], [0], [1], [0, 0, 1, 1], [], []>} : vector<256x32xbf16>, vector<32x16xbf16>, vector<256x16xf32> -> vector<256x16xf32>
    %7 = arith.addf %3, %6 : vector<256x16xf32>
    %c0_6 = arith.constant 0 : index
    %c0_7 = arith.constant 0 : index
    %8 = vector.load %arg7[%c0_6, %c0_7] : memref<256x16xf32, #tpu.memory_space<vmem>>, vector<256x16xf32>
    tpu.vector_store %arg7[%c0_6, %c0_7], %7 {strides = array<i32>} : memref<256x16xf32, #tpu.memory_space<vmem>>, vector<256x16xf32>,
    %c0_i32_8 = arith.constant 0 : i32
    %9 = arith.cmpi eq, %arg1, %c0_i32_8 : i32
    %10 = arith.extui %9 : i1 to i32
    %c0_i32_9 = arith.constant 0 : i32
    %11 = arith.cmpi ne, %10, %c0_i32_9 : i32
    scf.if %11 {
      %c0_10 = arith.constant 0 : index
      %c0_11 = arith.constant 0 : index
      %12 = vector.load %arg7[%c0_10, %c0_11] : memref<256x16xf32, #tpu.memory_space<vmem>>, vector<256x16xf32>
      %c0_12 = arith.constant 0 : index
      %c0_13 = arith.constant 0 : index
      %13 = vector.load %arg4[%c0_12, %c0_13] : memref<1x16xf32, #tpu.memory_space<vmem>>, vector<1x16xf32>
      %14 = vector.broadcast %13 : vector<1x16xf32> to vector<256x16xf32>
      %15 = arith.mulf %12, %14 : vector<256x16xf32>
      %c0_14 = arith.constant 0 : index
      %c0_15 = arith.constant 0 : index
      %16 = vector.load %arg5[%c0_14, %c0_15] : memref<1x16xf32, #tpu.memory_space<vmem>>, vector<1x16xf32>
      %17 = vector.broadcast %16 : vector<1x16xf32> to vector<256x16xf32>
      %18 = arith.addf %15, %17 : vector<256x16xf32>
      %cst_16 = arith.constant 0.000000e+00 : f32
      %19 = vector.broadcast %cst_16 : f32 to vector<256x16xf32>
      %20 = arith.maximumf %18, %19 : vector<256x16xf32>
      %21 = arith.truncf %20 : vector<256x16xf32> to vector<256x16xbf16>
      %c0_17 = arith.constant 0 : index
      %c0_18 = arith.constant 0 : index
      %22 = vector.load %arg6[%c0_17, %c0_18] : memref<256x16xbf16, #tpu.memory_space<vmem>>, vector<256x16xbf16>
      tpu.vector_store %arg6[%c0_17, %c0_18], %21 {strides = array<i32>} : memref<256x16xbf16, #tpu.memory_space<vmem>>, vector<256x16xbf16>,
    } else {
    }
    return
  }
  func.func @transform_0(%arg0: i32, %arg1: i32) -> (i32, i32) {
    %c0_i32 = arith.constant 0 : i32
    return %arg0, %arg1 : i32, i32
  }
  func.func @transform_1(%arg0: i32, %arg1: i32) -> (i32, i32) {
    %c0_i32 = arith.constant 0 : i32
    %c0_i32_0 = arith.constant 0 : i32
    return %arg1, %c0_i32 : i32, i32
  }
  func.func @transform_2(%arg0: i32, %arg1: i32) -> (i32, i32) {
    %c0_i32 = arith.constant 0 : i32
    %c0_i32_0 = arith.constant 0 : i32
    %c0_i32_1 = arith.constant 0 : i32
    return %c0_i32, %c0_i32_0 : i32, i32
  }
  func.func @transform_3(%arg0: i32, %arg1: i32) -> (i32, i32) {
    %c0_i32 = arith.constant 0 : i32
    %c0_i32_0 = arith.constant 0 : i32
    %c0_i32_1 = arith.constant 0 : i32
    return %c0_i32, %c0_i32_0 : i32, i32
  }
  func.func @transform_4(%arg0: i32, %arg1: i32) -> (i32, i32) {
    %c0_i32 = arith.constant 0 : i32
    %c0_i32_0 = arith.constant 0 : i32
    return %arg0, %c0_i32 : i32, i32
  }
}

module attributes {stable_mosaic.version = 11 : i64} {
  func.func @_conv3x3_bnrelu_kernel(%arg0: i32, %arg1: memref<1x4x82x16xbf16, #tpu.memory_space<vmem>>, %arg2: memref<9x16x16xbf16, #tpu.memory_space<vmem>>, %arg3: memref<1x16xf32, #tpu.memory_space<vmem>>, %arg4: memref<1x16xf32, #tpu.memory_space<vmem>>, %arg5: memref<1x72x16xbf16, #tpu.memory_space<vmem>>) attributes {dimension_semantics = [#tpu.dimension_semantics<parallel>], iteration_bounds = array<i64: 2>, scalar_prefetch = 0 : i64, scratch_operands = 0 : i64, tpu.core_type = #tpu.core_type<tc>, window_params = [{transform_indices = @transform_0, window_bounds = array<i64: 1, 4, 82, 16>}, {pipeline_mode = #tpu.pipeline_mode<synchronous>, transform_indices = @transform_1, window_bounds = array<i64: 9, 16, 16>}, {pipeline_mode = #tpu.pipeline_mode<synchronous>, transform_indices = @transform_2, window_bounds = array<i64: 1, 16>}, {pipeline_mode = #tpu.pipeline_mode<synchronous>, transform_indices = @transform_3, window_bounds = array<i64: 1, 16>}, {transform_indices = @transform_4, window_bounds = array<i64: 1, 72, 16>}]} {
    %cst = arith.constant 0.000000e+00 : f32
    %0 = vector.broadcast %cst : f32 to vector<72x16xf32>
    %c0 = arith.constant 0 : index
    %c0_0 = arith.constant 0 : index
    %c0_1 = arith.constant 0 : index
    %c0_2 = arith.constant 0 : index
    %1 = vector.load %arg1[%c0, %c0_0, %c0_1, %c0_2] : memref<1x4x82x16xbf16, #tpu.memory_space<vmem>>, vector<1x1x72x16xbf16>
    %2 = vector.shape_cast %1 : vector<1x1x72x16xbf16> to vector<72x16xbf16>
    %c0_3 = arith.constant 0 : index
    %c0_4 = arith.constant 0 : index
    %c0_5 = arith.constant 0 : index
    %3 = vector.load %arg2[%c0_3, %c0_4, %c0_5] : memref<9x16x16xbf16, #tpu.memory_space<vmem>>, vector<1x16x16xbf16>
    %4 = vector.shape_cast %3 : vector<1x16x16xbf16> to vector<16x16xbf16>
    %cst_6 = arith.constant dense<0.000000e+00> : vector<72x16xf32>
    %5 = tpu.matmul %2, %4, %cst_6 {dimension_numbers = #tpu.dot_dimension_numbers<[1], [0], [0], [1], [0, 0, 1, 1], [], []>} : vector<72x16xbf16>, vector<16x16xbf16>, vector<72x16xf32> -> vector<72x16xf32>
    %6 = arith.addf %0, %5 : vector<72x16xf32>
    %c0_7 = arith.constant 0 : index
    %c1 = arith.constant 1 : index
    %c0_8 = arith.constant 0 : index
    %c0_9 = arith.constant 0 : index
    %7 = vector.load %arg1[%c0_7, %c1, %c0_8, %c0_9] : memref<1x4x82x16xbf16, #tpu.memory_space<vmem>>, vector<1x1x72x16xbf16>
    %8 = vector.shape_cast %7 : vector<1x1x72x16xbf16> to vector<72x16xbf16>
    %c1_10 = arith.constant 1 : index
    %c0_11 = arith.constant 0 : index
    %c0_12 = arith.constant 0 : index
    %9 = vector.load %arg2[%c1_10, %c0_11, %c0_12] : memref<9x16x16xbf16, #tpu.memory_space<vmem>>, vector<1x16x16xbf16>
    %10 = vector.shape_cast %9 : vector<1x16x16xbf16> to vector<16x16xbf16>
    %cst_13 = arith.constant dense<0.000000e+00> : vector<72x16xf32>
    %11 = tpu.matmul %8, %10, %cst_13 {dimension_numbers = #tpu.dot_dimension_numbers<[1], [0], [0], [1], [0, 0, 1, 1], [], []>} : vector<72x16xbf16>, vector<16x16xbf16>, vector<72x16xf32> -> vector<72x16xf32>
    %12 = arith.addf %6, %11 : vector<72x16xf32>
    %c0_14 = arith.constant 0 : index
    %c0_15 = arith.constant 0 : index
    %c1_16 = arith.constant 1 : index
    %c0_17 = arith.constant 0 : index
    %13 = vector.load %arg1[%c0_14, %c0_15, %c1_16, %c0_17] : memref<1x4x82x16xbf16, #tpu.memory_space<vmem>>, vector<1x1x72x16xbf16>
    %14 = vector.shape_cast %13 : vector<1x1x72x16xbf16> to vector<72x16xbf16>
    %c2 = arith.constant 2 : index
    %c0_18 = arith.constant 0 : index
    %c0_19 = arith.constant 0 : index
    %15 = vector.load %arg2[%c2, %c0_18, %c0_19] : memref<9x16x16xbf16, #tpu.memory_space<vmem>>, vector<1x16x16xbf16>
    %16 = vector.shape_cast %15 : vector<1x16x16xbf16> to vector<16x16xbf16>
    %cst_20 = arith.constant dense<0.000000e+00> : vector<72x16xf32>
    %17 = tpu.matmul %14, %16, %cst_20 {dimension_numbers = #tpu.dot_dimension_numbers<[1], [0], [0], [1], [0, 0, 1, 1], [], []>} : vector<72x16xbf16>, vector<16x16xbf16>, vector<72x16xf32> -> vector<72x16xf32>
    %18 = arith.addf %12, %17 : vector<72x16xf32>
    %c0_21 = arith.constant 0 : index
    %c2_22 = arith.constant 2 : index
    %c0_23 = arith.constant 0 : index
    %c0_24 = arith.constant 0 : index
    %19 = vector.load %arg1[%c0_21, %c2_22, %c0_23, %c0_24] : memref<1x4x82x16xbf16, #tpu.memory_space<vmem>>, vector<1x1x72x16xbf16>
    %20 = vector.shape_cast %19 : vector<1x1x72x16xbf16> to vector<72x16xbf16>
    %c3 = arith.constant 3 : index
    %c0_25 = arith.constant 0 : index
    %c0_26 = arith.constant 0 : index
    %21 = vector.load %arg2[%c3, %c0_25, %c0_26] : memref<9x16x16xbf16, #tpu.memory_space<vmem>>, vector<1x16x16xbf16>
    %22 = vector.shape_cast %21 : vector<1x16x16xbf16> to vector<16x16xbf16>
    %cst_27 = arith.constant dense<0.000000e+00> : vector<72x16xf32>
    %23 = tpu.matmul %20, %22, %cst_27 {dimension_numbers = #tpu.dot_dimension_numbers<[1], [0], [0], [1], [0, 0, 1, 1], [], []>} : vector<72x16xbf16>, vector<16x16xbf16>, vector<72x16xf32> -> vector<72x16xf32>
    %24 = arith.addf %18, %23 : vector<72x16xf32>
    %c0_28 = arith.constant 0 : index
    %c3_29 = arith.constant 3 : index
    %c0_30 = arith.constant 0 : index
    %c0_31 = arith.constant 0 : index
    %25 = vector.load %arg1[%c0_28, %c3_29, %c0_30, %c0_31] : memref<1x4x82x16xbf16, #tpu.memory_space<vmem>>, vector<1x1x72x16xbf16>
    %26 = vector.shape_cast %25 : vector<1x1x72x16xbf16> to vector<72x16xbf16>
    %c4 = arith.constant 4 : index
    %c0_32 = arith.constant 0 : index
    %c0_33 = arith.constant 0 : index
    %27 = vector.load %arg2[%c4, %c0_32, %c0_33] : memref<9x16x16xbf16, #tpu.memory_space<vmem>>, vector<1x16x16xbf16>
    %28 = vector.shape_cast %27 : vector<1x16x16xbf16> to vector<16x16xbf16>
    %cst_34 = arith.constant dense<0.000000e+00> : vector<72x16xf32>
    %29 = tpu.matmul %26, %28, %cst_34 {dimension_numbers = #tpu.dot_dimension_numbers<[1], [0], [0], [1], [0, 0, 1, 1], [], []>} : vector<72x16xbf16>, vector<16x16xbf16>, vector<72x16xf32> -> vector<72x16xf32>
    %30 = arith.addf %24, %29 : vector<72x16xf32>
    %c0_35 = arith.constant 0 : index
    %c2_36 = arith.constant 2 : index
    %c1_37 = arith.constant 1 : index
    %c0_38 = arith.constant 0 : index
    %31 = vector.load %arg1[%c0_35, %c2_36, %c1_37, %c0_38] : memref<1x4x82x16xbf16, #tpu.memory_space<vmem>>, vector<1x1x72x16xbf16>
    %32 = vector.shape_cast %31 : vector<1x1x72x16xbf16> to vector<72x16xbf16>
    %c5 = arith.constant 5 : index
    %c0_39 = arith.constant 0 : index
    %c0_40 = arith.constant 0 : index
    %33 = vector.load %arg2[%c5, %c0_39, %c0_40] : memref<9x16x16xbf16, #tpu.memory_space<vmem>>, vector<1x16x16xbf16>
    %34 = vector.shape_cast %33 : vector<1x16x16xbf16> to vector<16x16xbf16>
    %cst_41 = arith.constant dense<0.000000e+00> : vector<72x16xf32>
    %35 = tpu.matmul %32, %34, %cst_41 {dimension_numbers = #tpu.dot_dimension_numbers<[1], [0], [0], [1], [0, 0, 1, 1], [], []>} : vector<72x16xbf16>, vector<16x16xbf16>, vector<72x16xf32> -> vector<72x16xf32>
    %36 = arith.addf %30, %35 : vector<72x16xf32>
    %c0_42 = arith.constant 0 : index
    %c0_43 = arith.constant 0 : index
    %c9 = arith.constant 9 : index
    %c0_44 = arith.constant 0 : index
    %37 = vector.load %arg1[%c0_42, %c0_43, %c9, %c0_44] : memref<1x4x82x16xbf16, #tpu.memory_space<vmem>>, vector<1x1x72x16xbf16>
    %38 = vector.shape_cast %37 : vector<1x1x72x16xbf16> to vector<72x16xbf16>
    %c6 = arith.constant 6 : index
    %c0_45 = arith.constant 0 : index
    %c0_46 = arith.constant 0 : index
    %39 = vector.load %arg2[%c6, %c0_45, %c0_46] : memref<9x16x16xbf16, #tpu.memory_space<vmem>>, vector<1x16x16xbf16>
    %40 = vector.shape_cast %39 : vector<1x16x16xbf16> to vector<16x16xbf16>
    %cst_47 = arith.constant dense<0.000000e+00> : vector<72x16xf32>
    %41 = tpu.matmul %38, %40, %cst_47 {dimension_numbers = #tpu.dot_dimension_numbers<[1], [0], [0], [1], [0, 0, 1, 1], [], []>} : vector<72x16xbf16>, vector<16x16xbf16>, vector<72x16xf32> -> vector<72x16xf32>
    %42 = arith.addf %36, %41 : vector<72x16xf32>
    %c0_48 = arith.constant 0 : index
    %c1_49 = arith.constant 1 : index
    %c9_50 = arith.constant 9 : index
    %c0_51 = arith.constant 0 : index
    %43 = vector.load %arg1[%c0_48, %c1_49, %c9_50, %c0_51] : memref<1x4x82x16xbf16, #tpu.memory_space<vmem>>, vector<1x1x72x16xbf16>
    %44 = vector.shape_cast %43 : vector<1x1x72x16xbf16> to vector<72x16xbf16>
    %c7 = arith.constant 7 : index
    %c0_52 = arith.constant 0 : index
    %c0_53 = arith.constant 0 : index
    %45 = vector.load %arg2[%c7, %c0_52, %c0_53] : memref<9x16x16xbf16, #tpu.memory_space<vmem>>, vector<1x16x16xbf16>
    %46 = vector.shape_cast %45 : vector<1x16x16xbf16> to vector<16x16xbf16>
    %cst_54 = arith.constant dense<0.000000e+00> : vector<72x16xf32>
    %47 = tpu.matmul %44, %46, %cst_54 {dimension_numbers = #tpu.dot_dimension_numbers<[1], [0], [0], [1], [0, 0, 1, 1], [], []>} : vector<72x16xbf16>, vector<16x16xbf16>, vector<72x16xf32> -> vector<72x16xf32>
    %48 = arith.addf %42, %47 : vector<72x16xf32>
    %c0_55 = arith.constant 0 : index
    %c0_56 = arith.constant 0 : index
    %c10 = arith.constant 10 : index
    %c0_57 = arith.constant 0 : index
    %49 = vector.load %arg1[%c0_55, %c0_56, %c10, %c0_57] : memref<1x4x82x16xbf16, #tpu.memory_space<vmem>>, vector<1x1x72x16xbf16>
    %50 = vector.shape_cast %49 : vector<1x1x72x16xbf16> to vector<72x16xbf16>
    %c8 = arith.constant 8 : index
    %c0_58 = arith.constant 0 : index
    %c0_59 = arith.constant 0 : index
    %51 = vector.load %arg2[%c8, %c0_58, %c0_59] : memref<9x16x16xbf16, #tpu.memory_space<vmem>>, vector<1x16x16xbf16>
    %52 = vector.shape_cast %51 : vector<1x16x16xbf16> to vector<16x16xbf16>
    %cst_60 = arith.constant dense<0.000000e+00> : vector<72x16xf32>
    %53 = tpu.matmul %50, %52, %cst_60 {dimension_numbers = #tpu.dot_dimension_numbers<[1], [0], [0], [1], [0, 0, 1, 1], [], []>} : vector<72x16xbf16>, vector<16x16xbf16>, vector<72x16xf32> -> vector<72x16xf32>
    %54 = arith.addf %48, %53 : vector<72x16xf32>
    %c0_61 = arith.constant 0 : index
    %c0_62 = arith.constant 0 : index
    %55 = vector.load %arg3[%c0_61, %c0_62] : memref<1x16xf32, #tpu.memory_space<vmem>>, vector<1x16xf32>
    %56 = vector.broadcast %55 : vector<1x16xf32> to vector<72x16xf32>
    %57 = arith.mulf %54, %56 : vector<72x16xf32>
    %c0_63 = arith.constant 0 : index
    %c0_64 = arith.constant 0 : index
    %58 = vector.load %arg4[%c0_63, %c0_64] : memref<1x16xf32, #tpu.memory_space<vmem>>, vector<1x16xf32>
    %59 = vector.broadcast %58 : vector<1x16xf32> to vector<72x16xf32>
    %60 = arith.addf %57, %59 : vector<72x16xf32>
    %cst_65 = arith.constant 0.000000e+00 : f32
    %61 = vector.broadcast %cst_65 : f32 to vector<72x16xf32>
    %62 = arith.maximumf %60, %61 : vector<72x16xf32>
    %63 = arith.truncf %62 : vector<72x16xf32> to vector<72x16xbf16>
    %c0_66 = arith.constant 0 : index
    %c0_67 = arith.constant 0 : index
    %c0_68 = arith.constant 0 : index
    %64 = vector.load %arg5[%c0_66, %c0_67, %c0_68] : memref<1x72x16xbf16, #tpu.memory_space<vmem>>, vector<1x72x16xbf16>
    %65 = vector.shape_cast %64 : vector<1x72x16xbf16> to vector<72x16xbf16>
    %66 = vector.shape_cast %63 : vector<72x16xbf16> to vector<1x72x16xbf16>
    tpu.vector_store %arg5[%c0_66, %c0_67, %c0_68], %66 {strides = array<i32>} : memref<1x72x16xbf16, #tpu.memory_space<vmem>>, vector<1x72x16xbf16>,
    return
  }
  func.func @transform_0(%arg0: i32) -> (i32, i32, i32, i32) {
    %c0_i32 = arith.constant 0 : i32
    %c0_i32_0 = arith.constant 0 : i32
    %c0_i32_1 = arith.constant 0 : i32
    %c0_i32_2 = arith.constant 0 : i32
    return %arg0, %c0_i32, %c0_i32_0, %c0_i32_1 : i32, i32, i32, i32
  }
  func.func @transform_1(%arg0: i32) -> (i32, i32, i32) {
    %c0_i32 = arith.constant 0 : i32
    %c0_i32_0 = arith.constant 0 : i32
    %c0_i32_1 = arith.constant 0 : i32
    %c0_i32_2 = arith.constant 0 : i32
    return %c0_i32, %c0_i32_0, %c0_i32_1 : i32, i32, i32
  }
  func.func @transform_2(%arg0: i32) -> (i32, i32) {
    %c0_i32 = arith.constant 0 : i32
    %c0_i32_0 = arith.constant 0 : i32
    %c0_i32_1 = arith.constant 0 : i32
    return %c0_i32, %c0_i32_0 : i32, i32
  }
  func.func @transform_3(%arg0: i32) -> (i32, i32) {
    %c0_i32 = arith.constant 0 : i32
    %c0_i32_0 = arith.constant 0 : i32
    %c0_i32_1 = arith.constant 0 : i32
    return %c0_i32, %c0_i32_0 : i32, i32
  }
  func.func @transform_4(%arg0: i32) -> (i32, i32, i32) {
    %c0_i32 = arith.constant 0 : i32
    %c0_i32_0 = arith.constant 0 : i32
    %c0_i32_1 = arith.constant 0 : i32
    return %arg0, %c0_i32, %c0_i32_0 : i32, i32, i32
  }
}

module attributes {stable_mosaic.version = 11 : i64} {
  func.func @_mm_fused_kernel(%arg0: i32, %arg1: i32, %arg2: memref<128x32xbf16, #tpu.memory_space<vmem>>, %arg3: memref<32x64xbf16, #tpu.memory_space<vmem>>, %arg4: memref<128x64xbf16, #tpu.memory_space<vmem>>, %arg5: memref<128x64xf32, #tpu.memory_space<vmem>>) attributes {dimension_semantics = [#tpu.dimension_semantics<parallel>, #tpu.dimension_semantics<arbitrary>], iteration_bounds = array<i64: 1, 1>, scalar_prefetch = 0 : i64, scratch_operands = 1 : i64, tpu.core_type = #tpu.core_type<tc>, window_params = [{transform_indices = @transform_0, window_bounds = array<i64: 128, 32>}, {transform_indices = @transform_1, window_bounds = array<i64: 32, 64>}, {transform_indices = @transform_2, window_bounds = array<i64: 128, 64>}]} {
    %c0_i32 = arith.constant 0 : i32
    %0 = arith.cmpi eq, %arg1, %c0_i32 : i32
    %1 = arith.extui %0 : i1 to i32
    %c0_i32_0 = arith.constant 0 : i32
    %2 = arith.cmpi ne, %1, %c0_i32_0 : i32
    scf.if %2 {
      %cst_10 = arith.constant 0.000000e+00 : f32
      %12 = vector.broadcast %cst_10 : f32 to vector<128x64xf32>
      %c0_11 = arith.constant 0 : index
      %c0_12 = arith.constant 0 : index
      %13 = vector.load %arg5[%c0_11, %c0_12] : memref<128x64xf32, #tpu.memory_space<vmem>>, vector<128x64xf32>
      tpu.vector_store %arg5[%c0_11, %c0_12], %12 {strides = array<i32>} : memref<128x64xf32, #tpu.memory_space<vmem>>, vector<128x64xf32>,
    } else {
    }
    %c0 = arith.constant 0 : index
    %c0_1 = arith.constant 0 : index
    %3 = vector.load %arg5[%c0, %c0_1] : memref<128x64xf32, #tpu.memory_space<vmem>>, vector<128x64xf32>
    %c0_2 = arith.constant 0 : index
    %c0_3 = arith.constant 0 : index
    %4 = vector.load %arg2[%c0_2, %c0_3] : memref<128x32xbf16, #tpu.memory_space<vmem>>, vector<128x32xbf16>
    %c0_4 = arith.constant 0 : index
    %c0_5 = arith.constant 0 : index
    %5 = vector.load %arg3[%c0_4, %c0_5] : memref<32x64xbf16, #tpu.memory_space<vmem>>, vector<32x64xbf16>
    %cst = arith.constant dense<0.000000e+00> : vector<128x64xf32>
    %6 = tpu.matmul %4, %5, %cst {dimension_numbers = #tpu.dot_dimension_numbers<[1], [0], [0], [1], [0, 0, 1, 1], [], []>} : vector<128x32xbf16>, vector<32x64xbf16>, vector<128x64xf32> -> vector<128x64xf32>
    %7 = arith.addf %3, %6 : vector<128x64xf32>
    %c0_6 = arith.constant 0 : index
    %c0_7 = arith.constant 0 : index
    %8 = vector.load %arg5[%c0_6, %c0_7] : memref<128x64xf32, #tpu.memory_space<vmem>>, vector<128x64xf32>
    tpu.vector_store %arg5[%c0_6, %c0_7], %7 {strides = array<i32>} : memref<128x64xf32, #tpu.memory_space<vmem>>, vector<128x64xf32>,
    %c0_i32_8 = arith.constant 0 : i32
    %9 = arith.cmpi eq, %arg1, %c0_i32_8 : i32
    %10 = arith.extui %9 : i1 to i32
    %c0_i32_9 = arith.constant 0 : i32
    %11 = arith.cmpi ne, %10, %c0_i32_9 : i32
    scf.if %11 {
      %c0_10 = arith.constant 0 : index
      %c0_11 = arith.constant 0 : index
      %12 = vector.load %arg5[%c0_10, %c0_11] : memref<128x64xf32, #tpu.memory_space<vmem>>, vector<128x64xf32>
      %13 = arith.truncf %12 : vector<128x64xf32> to vector<128x64xbf16>
      %c0_12 = arith.constant 0 : index
      %c0_13 = arith.constant 0 : index
      %14 = vector.load %arg4[%c0_12, %c0_13] : memref<128x64xbf16, #tpu.memory_space<vmem>>, vector<128x64xbf16>
      tpu.vector_store %arg4[%c0_12, %c0_13], %13 {strides = array<i32>} : memref<128x64xbf16, #tpu.memory_space<vmem>>, vector<128x64xbf16>,
    } else {
    }
    return
  }
  func.func @transform_0(%arg0: i32, %arg1: i32) -> (i32, i32) {
    %c0_i32 = arith.constant 0 : i32
    return %arg0, %arg1 : i32, i32
  }
  func.func @transform_1(%arg0: i32, %arg1: i32) -> (i32, i32) {
    %c0_i32 = arith.constant 0 : i32
    %c0_i32_0 = arith.constant 0 : i32
    return %arg1, %c0_i32 : i32, i32
  }
  func.func @transform_2(%arg0: i32, %arg1: i32) -> (i32, i32) {
    %c0_i32 = arith.constant 0 : i32
    %c0_i32_0 = arith.constant 0 : i32
    return %arg0, %c0_i32 : i32, i32
  }
}

module attributes {stable_mosaic.version = 11 : i64} {
  func.func @_mm_fused_kernel(%arg0: i32, %arg1: i32, %arg2: memref<128x16xbf16, #tpu.memory_space<vmem>>, %arg3: memref<16x64xbf16, #tpu.memory_space<vmem>>, %arg4: memref<128x64xbf16, #tpu.memory_space<vmem>>, %arg5: memref<128x64xf32, #tpu.memory_space<vmem>>, %arg6: memref<128x64xf32, #tpu.memory_space<vmem>>) attributes {dimension_semantics = [#tpu.dimension_semantics<parallel>, #tpu.dimension_semantics<arbitrary>], iteration_bounds = array<i64: 1, 1>, scalar_prefetch = 0 : i64, scratch_operands = 1 : i64, tpu.core_type = #tpu.core_type<tc>, window_params = [{transform_indices = @transform_0, window_bounds = array<i64: 128, 16>}, {transform_indices = @transform_1, window_bounds = array<i64: 16, 64>}, {transform_indices = @transform_2, window_bounds = array<i64: 128, 64>}, {transform_indices = @transform_3, window_bounds = array<i64: 128, 64>}]} {
    %c0_i32 = arith.constant 0 : i32
    %0 = arith.cmpi eq, %arg1, %c0_i32 : i32
    %1 = arith.extui %0 : i1 to i32
    %c0_i32_0 = arith.constant 0 : i32
    %2 = arith.cmpi ne, %1, %c0_i32_0 : i32
    scf.if %2 {
      %cst_10 = arith.constant 0.000000e+00 : f32
      %12 = vector.broadcast %cst_10 : f32 to vector<128x64xf32>
      %c0_11 = arith.constant 0 : index
      %c0_12 = arith.constant 0 : index
      %13 = vector.load %arg6[%c0_11, %c0_12] : memref<128x64xf32, #tpu.memory_space<vmem>>, vector<128x64xf32>
      tpu.vector_store %arg6[%c0_11, %c0_12], %12 {strides = array<i32>} : memref<128x64xf32, #tpu.memory_space<vmem>>, vector<128x64xf32>,
    } else {
    }
    %c0 = arith.constant 0 : index
    %c0_1 = arith.constant 0 : index
    %3 = vector.load %arg6[%c0, %c0_1] : memref<128x64xf32, #tpu.memory_space<vmem>>, vector<128x64xf32>
    %c0_2 = arith.constant 0 : index
    %c0_3 = arith.constant 0 : index
    %4 = vector.load %arg2[%c0_2, %c0_3] : memref<128x16xbf16, #tpu.memory_space<vmem>>, vector<128x16xbf16>
    %c0_4 = arith.constant 0 : index
    %c0_5 = arith.constant 0 : index
    %5 = vector.load %arg3[%c0_4, %c0_5] : memref<16x64xbf16, #tpu.memory_space<vmem>>, vector<16x64xbf16>
    %cst = arith.constant dense<0.000000e+00> : vector<128x64xf32>
    %6 = tpu.matmul %4, %5, %cst {dimension_numbers = #tpu.dot_dimension_numbers<[1], [0], [0], [1], [0, 0, 1, 1], [], []>} : vector<128x16xbf16>, vector<16x64xbf16>, vector<128x64xf32> -> vector<128x64xf32>
    %7 = arith.addf %3, %6 : vector<128x64xf32>
    %c0_6 = arith.constant 0 : index
    %c0_7 = arith.constant 0 : index
    %8 = vector.load %arg6[%c0_6, %c0_7] : memref<128x64xf32, #tpu.memory_space<vmem>>, vector<128x64xf32>
    tpu.vector_store %arg6[%c0_6, %c0_7], %7 {strides = array<i32>} : memref<128x64xf32, #tpu.memory_space<vmem>>, vector<128x64xf32>,
    %c0_i32_8 = arith.constant 0 : i32
    %9 = arith.cmpi eq, %arg1, %c0_i32_8 : i32
    %10 = arith.extui %9 : i1 to i32
    %c0_i32_9 = arith.constant 0 : i32
    %11 = arith.cmpi ne, %10, %c0_i32_9 : i32
    scf.if %11 {
      %c0_10 = arith.constant 0 : index
      %c0_11 = arith.constant 0 : index
      %12 = vector.load %arg6[%c0_10, %c0_11] : memref<128x64xf32, #tpu.memory_space<vmem>>, vector<128x64xf32>
      %c0_12 = arith.constant 0 : index
      %c0_13 = arith.constant 0 : index
      %13 = vector.load %arg4[%c0_12, %c0_13] : memref<128x64xbf16, #tpu.memory_space<vmem>>, vector<128x64xbf16>
      %14 = arith.extf %13 : vector<128x64xbf16> to vector<128x64xf32>
      %15 = arith.addf %12, %14 : vector<128x64xf32>
      %c0_14 = arith.constant 0 : index
      %c0_15 = arith.constant 0 : index
      %16 = vector.load %arg5[%c0_14, %c0_15] : memref<128x64xf32, #tpu.memory_space<vmem>>, vector<128x64xf32>
      tpu.vector_store %arg5[%c0_14, %c0_15], %15 {strides = array<i32>} : memref<128x64xf32, #tpu.memory_space<vmem>>, vector<128x64xf32>,
    } else {
    }
    return
  }
  func.func @transform_0(%arg0: i32, %arg1: i32) -> (i32, i32) {
    %c0_i32 = arith.constant 0 : i32
    return %arg0, %arg1 : i32, i32
  }
  func.func @transform_1(%arg0: i32, %arg1: i32) -> (i32, i32) {
    %c0_i32 = arith.constant 0 : i32
    %c0_i32_0 = arith.constant 0 : i32
    return %arg1, %c0_i32 : i32, i32
  }
  func.func @transform_2(%arg0: i32, %arg1: i32) -> (i32, i32) {
    %c0_i32 = arith.constant 0 : i32
    %c0_i32_0 = arith.constant 0 : i32
    return %arg0, %c0_i32 : i32, i32
  }
  func.func @transform_3(%arg0: i32, %arg1: i32) -> (i32, i32) {
    %c0_i32 = arith.constant 0 : i32
    %c0_i32_0 = arith.constant 0 : i32
    return %arg0, %c0_i32 : i32, i32
  }
}

</mosaic_0001>

<llo_original>
// kernel: residual_unit_fwd.5
$region0: #{residual_unit_fwd.5}
  #allocation0 [shape = 'u32[]', space=smem, size = 0x4, offset = 0x4, fixed_abs, tag = 'smem constant byte address 0x4 - core index']
  #allocation1 [shape = 'u32[72,128]{1,0:T(1,128)}', space=vmem, size = 0x9000, scoped, tag = 'internal scratch']
  #allocation2 [shape = 'f32[256,16]{1,0:T(8,128)}', space=vmem, size = 0x20000, scoped, tag = 'scratch operand']
  %s0 = inlined_call_operand.vmem [shape: bf16[512,32], index: 0, kind: input, shape index: {}]
  %s1 = inlined_call_operand.vmem [shape: bf16[32,16], index: 1, kind: input, shape index: {}]
  %s2 = inlined_call_operand.vmem [shape: f32[1,16], index: 2, kind: input, shape index: {}]
  %s3 = inlined_call_operand.vmem [shape: f32[1,16], index: 3, kind: input, shape index: {}]
  %s4 = inlined_call_operand.vmem [shape: bf16[512,16], index: 4, kind: output, shape index: {}]
  %s5 = sld [smem:[#allocation0]]
  $region57: #{residual_unit_fwd.5} parent=0
    _
  %s7 = ssub.s32 1, %s5
  %s8 = scalar_select 0, %s7, %s5
  loop: start=0, step=1, limit=4
  $region2: #{residual_unit_fwd.5} parent=0 // loop_pre_header
    _
  $region3: #{residual_unit_fwd.5} parent=0 // loop_header
    %s10 = sphi 0, %s14
    %p11 = scmp.ge.s32.totalorder %s10, 4
    %s17 = sphi 0, %s29
    %s18 = sphi 0, %s25
    %s19 = sphi 0, %s17
    %s20 = sphi 0, %s18
    %s21 = sphi 0, %s19
    %s22 = sphi 0, %s20
    %s34 = sphi 0, %s36
    %s37 = sphi 0, %s34
    %s38 = sphi 0, %s37
    %s54 = sphi 0, %s38
    %s60 = sphi 0, %s62
    %s63 = sphi 0, %s60
    %s64 = sphi 0, %s63
    %s80 = sphi 0, %s64
    %s84 = sphi 0, %s84
    %s86 = sphi 0, %s84
    %s87 = sphi 0, %s86
    %s101 = sphi 0, %s87
    %s105 = sphi 0, %s105
    %s107 = sphi 0, %s105
    %s108 = sphi 0, %s107
    %s122 = sphi 0, %s108
    %s128 = sphi 0, %s130
    %s131 = sphi 0, %s128
    %s132 = sphi 0, %s131
    %s148 = sphi 0, %s132
  $region4: #{residual_unit_fwd.5} parent=0 // loop_header_branch
    %13 = sbr.rel (%p11) target = $region8
  $region5: #{residual_unit_fwd.5} parent=0 // loop_body
    %s15 = ssub.s32 %s10, 1
    %s16 = ssub.s32 %s10, 2
    %s23 = sadd.s32 1, %s18
    %p24 = scmp.ge.s32.totalorder %s23, 1
    %s25 = scalar_select %p24, 0, %s23
    %s26 = sadd.s32 1, %s17
    %s27 = scalar_select %p24, %s26, %s17
    %p28 = scmp.ge.s32.totalorder %s27, 2
    %s29 = scalar_select %p28, 0, %s27
    %s30 = ssub.s32 %s17, %s29
    %s31 = ssub.s32 %s18, %s25
    %s32 = sor.u32 %s30, %s31
    %p33 = scmp.eq.s32.totalorder %s32, 0
    %s35 = sadd.s32 %s34, 1
    %s36 = scalar_select %p33, %s34, %s35
    %p39 = pneg %p33
    %p40 = scmp.eq.s32.totalorder %s10, 1
    %p41 = por %p39, %p40
    %p42 = scmp.ne.s32.totalorder %s34, %s37
    %p43 = scmp.eq.s32.totalorder %s10, 0
    %p44 = por %p42, %p43
    %p45 = scmp.ne.s32.totalorder %s34, %s37
    %p46 = scmp.eq.s32.totalorder %s15, 1
    %p47 = por %p45, %p46
    %p48 = scmp.ne.s32.totalorder %s37, %s38
    %p49 = scmp.eq.s32.totalorder %s15, 0
    %p50 = por %p48, %p49
    %p51 = scmp.ne.s32.totalorder %s37, %s38
    %p52 = scmp.eq.s32.totalorder %s16, 1
    %p53 = por %p51, %p52
    %p55 = scmp.ne.s32.totalorder %s38, %s54
    %p56 = scmp.eq.s32.totalorder %s16, 0
    %p57 = por %p55, %p56
    %s58 = ssub.s32 %s18, %s25
    %p59 = scmp.eq.s32.totalorder %s58, 0
    %s61 = sadd.s32 %s60, 1
    %s62 = scalar_select %p59, %s60, %s61
    %p65 = pneg %p59
    %p66 = scmp.eq.s32.totalorder %s10, 1
    %p67 = por %p65, %p66
    %p68 = scmp.ne.s32.totalorder %s60, %s63
    %p69 = scmp.eq.s32.totalorder %s10, 0
    %p70 = por %p68, %p69
    %p71 = scmp.ne.s32.totalorder %s60, %s63
    %p72 = scmp.eq.s32.totalorder %s15, 1
    %p73 = por %p71, %p72
    %p74 = scmp.ne.s32.totalorder %s63, %s64
    %p75 = scmp.eq.s32.totalorder %s15, 0
    %p76 = por %p74, %p75
    %p77 = scmp.ne.s32.totalorder %s63, %s64
    %p78 = scmp.eq.s32.totalorder %s16, 1
    %p79 = por %p77, %p78
    %p81 = scmp.ne.s32.totalorder %s64, %s80
    %p82 = scmp.eq.s32.totalorder %s16, 0
    %p83 = por %p81, %p82
    %s85 = sadd.s32 %s84, 1
    %p88 = scmp.eq.s32.totalorder %s10, 1
    %p89 = scmp.ne.s32.totalorder %s84, %s86
    %p90 = scmp.eq.s32.totalorder %s10, 0
    %p91 = por %p89, %p90
    %p92 = scmp.ne.s32.totalorder %s84, %s86
    %p93 = scmp.eq.s32.totalorder %s15, 1
    %p94 = por %p92, %p93
    %p95 = scmp.ne.s32.totalorder %s86, %s87
    %p96 = scmp.eq.s32.totalorder %s15, 0
    %p97 = por %p95, %p96
    %p98 = scmp.ne.s32.totalorder %s86, %s87
    %p99 = scmp.eq.s32.totalorder %s16, 1
    %p100 = por %p98, %p99
    %p102 = scmp.ne.s32.totalorder %s87, %s101
    %p103 = scmp.eq.s32.totalorder %s16, 0
    %p104 = por %p102, %p103
    %s106 = sadd.s32 %s105, 1
    %p109 = scmp.eq.s32.totalorder %s10, 1
    %p110 = scmp.ne.s32.totalorder %s105, %s107
    %p111 = scmp.eq.s32.totalorder %s10, 0
    %p112 = por %p110, %p111
    %p113 = scmp.ne.s32.totalorder %s105, %s107
    %p114 = scmp.eq.s32.totalorder %s15, 1
    %p115 = por %p113, %p114
    %p116 = scmp.ne.s32.totalorder %s107, %s108
    %p117 = scmp.eq.s32.totalorder %s15, 0
    %p118 = por %p116, %p117
    %p119 = scmp.ne.s32.totalorder %s107, %s108
    %p120 = scmp.eq.s32.totalorder %s16, 1
    %p121 = por %p119, %p120
    %p123 = scmp.ne.s32.totalorder %s108, %s122
    %p124 = scmp.eq.s32.totalorder %s16, 0
    %p125 = por %p123, %p124
    %s126 = ssub.s32 %s17, %s29
    %p127 = scmp.eq.s32.totalorder %s126, 0
    %s129 = sadd.s32 %s128, 1
    %s130 = scalar_select %p127, %s128, %s129
    %p133 = pneg %p127
    %p134 = scmp.eq.s32.totalorder %s10, 1
    %p135 = por %p133, %p134
    %p136 = scmp.ne.s32.totalorder %s128, %s131
    %p137 = scmp.eq.s32.totalorder %s10, 0
    %p138 = por %p136, %p137
    %p139 = scmp.ne.s32.totalorder %s128, %s131
    %p140 = scmp.eq.s32.totalorder %s15, 1
    %p141 = por %p139, %p140
    %p142 = scmp.ne.s32.totalorder %s131, %s132
    %p143 = scmp.eq.s32.totalorder %s15, 0
    %p144 = por %p142, %p143
    %p145 = scmp.ne.s32.totalorder %s131, %s132
    %p146 = scmp.eq.s32.totalorder %s16, 1
    %p147 = por %p145, %p146
    %p149 = scmp.ne.s32.totalorder %s132, %s148
    %p150 = scmp.eq.s32.totalorder %s16, 0
    %p151 = por %p149, %p150
    %p152 = scmp.le.s32.totalorder 1, %s10
    %p153 = scmp.lt.s32.totalorder %s10, 3
    %p154 = pnand %p152, %p153
    %p155 = pneg %p154
    // Predicated region
    $region9: #{residual_unit_fwd.5} parent=5 // pred_check
      _
    $region10: #{residual_unit_fwd.5} parent=5 // pred_check_branch
      %157 = sbr.rel (%p154) target = $region12
    $region11: #{residual_unit_fwd.5} parent=5 // pred_region
      %s158 = ssub.s32 %s10, 1
      // Predicated region
      $region13: #{residual_unit_fwd.5} parent=11 // pred_check
        %p159 = pneg %p76
      $region14: #{residual_unit_fwd.5} parent=11 // pred_check_branch
        %161 = sbr.rel (%p159) target = $region16
      $region15: #{residual_unit_fwd.5} parent=11 // pred_region
        %s162 = smul.u32 4, %s20
        %p163 = scmp.lt.s32.totalorder %s162, 3
        %s164 = scalar_select %p163, %s162, 3
        %s165 = smul.addr %s164, 4
        %s166 = scalar_lea.vmem %s1, %s165
        %s167 = smul.u32 4, %s20
      $region16: #{residual_unit_fwd.5} parent=11 // pred_fallthru
        _
      // Predicated region
      $region17: #{residual_unit_fwd.5} parent=11 // pred_check
        %p168 = pneg %p97
      $region18: #{residual_unit_fwd.5} parent=11 // pred_check_branch
        %170 = sbr.rel (%p168) target = $region20
      $region19: #{residual_unit_fwd.5} parent=11 // pred_region
        _
      $region20: #{residual_unit_fwd.5} parent=11 // pred_fallthru
        _
      // Predicated region
      $region21: #{residual_unit_fwd.5} parent=11 // pred_check
        %p171 = pneg %p118
      $region22: #{residual_unit_fwd.5} parent=11 // pred_check_branch
        %173 = sbr.rel (%p171) target = $region24
      $region23: #{residual_unit_fwd.5} parent=11 // pred_region
        _
      $region24: #{residual_unit_fwd.5} parent=11 // pred_fallthru
        _
    $region12: #{residual_unit_fwd.5} parent=5 // pred_fallthru
      _
    %p174 = scmp.lt.s32.totalorder %s10, 2
    // Predicated region
    $region25: #{residual_unit_fwd.5} parent=5 // pred_check
      %p175 = pneg %p174
    $region26: #{residual_unit_fwd.5} parent=5 // pred_check_branch
      %177 = sbr.rel (%p175) target = $region28
    $region27: #{residual_unit_fwd.5} parent=5 // pred_region
      // Predicated region
      $region29: #{residual_unit_fwd.5} parent=27 // pred_check
        %p178 = pneg %p44
      $region30: #{residual_unit_fwd.5} parent=27 // pred_check_branch
        %180 = sbr.rel (%p178) target = $region32
      $region31: #{residual_unit_fwd.5} parent=27 // pred_region
        %s181 = smul.u32 32, %s17
        %p182 = scmp.lt.s32.totalorder %s181, 63
        %s183 = scalar_select %p182, %s181, 63
        %p184 = scmp.lt.s32.totalorder %s18, 0
        %s185 = scalar_select %p184, %s18, 0
        %s186 = sadd.s32 %s185, %s183
        %s187 = smul.addr %s186, 4
        %s188 = scalar_lea.vmem %s0, %s187
        %s189 = smul.u32 32, %s17
      $region32: #{residual_unit_fwd.5} parent=27 // pred_fallthru
        _
    $region28: #{residual_unit_fwd.5} parent=5 // pred_fallthru
      _
    %p190 = scmp.le.s32.totalorder 1, %s10
    %p191 = scmp.lt.s32.totalorder %s10, 3
    %p192 = pnand %p190, %p191
    %p193 = pneg %p192
    // Predicated region
    $region33: #{residual_unit_fwd.5} parent=5 // pred_check
      _
    $region34: #{residual_unit_fwd.5} parent=5 // pred_check_branch
      %195 = sbr.rel (%p192) target = $region36
    $region35: #{residual_unit_fwd.5} parent=5 // pred_region
      %s196 = ssub.s32 %s10, 1
      %s197 = smul.u32 32, %s19
      %p198 = scmp.lt.s32.totalorder %s197, 63
      %s199 = scalar_select %p198, %s197, 63
      %p200 = scmp.lt.s32.totalorder %s20, 0
      %s201 = scalar_select %p200, %s20, 0
      %s202 = sadd.s32 %s201, %s199
      %s203 = smul.addr %s202, 4
      %s204 = scalar_lea.vmem %s0, %s203
      %p205 = pneg %p50
      %p206 = pneg %p47
      %s207 = smul.u32 4, %s20
      %p208 = scmp.lt.s32.totalorder %s207, 3
      %s209 = scalar_select %p208, %s207, 3
      %s210 = smul.addr %s209, 4
      %s211 = scalar_lea.vmem %s1, %s210
      %p212 = pneg %p76
      %p213 = pneg %p73
      %p214 = pneg %p97
      %p215 = pneg %p94
      %p216 = pneg %p118
      %p217 = pneg %p115
      %p218 = pneg %p144
      %p219 = pneg %p141
      %s220 = smul.u32 32, %s19
      %p221 = scmp.lt.s32.totalorder %s220, 63
      %s222 = scalar_select %p221, %s220, 63
      %s223 = smul.addr %s222, 4
      %s224 = scalar_lea.vmem %s4, %s223
      %s225 = smul.u32 32, %s19
      %p226 = scmp.lt.s32.totalorder %s225, 63
      %s227 = scalar_select %p226, %s225, 63
      %p228 = scmp.lt.s32.totalorder %s20, 0
      %s229 = scalar_select %p228, %s20, 0
      %s230 = sadd.s32 %s229, %s227
      %s231 = smul.addr %s230, 4
      %s232 = scalar_lea.vmem %s0, %s231
      %s233 = smul.u32 32, %s19
      %s234 = smul.u32 4, %s20
      %p235 = scmp.lt.s32.totalorder %s234, 3
      %s236 = scalar_select %p235, %s234, 3
      %s237 = smul.addr %s236, 4
      %s238 = scalar_lea.vmem %s1, %s237
      %s239 = smul.u32 4, %s20
      %s240 = smul.u32 32, %s19
      %p241 = scmp.lt.s32.totalorder %s240, 63
      %s242 = scalar_select %p241, %s240, 63
      %s243 = smul.addr %s242, 4
      %s244 = scalar_lea.vmem %s4, %s243
      %s245 = smul.u32 32, %s19
      %p247 = scmp.eq.s32.totalorder %s20, 0
      // Predicated region
      $region37: #{residual_unit_fwd.5} parent=35 // pred_check
        %p248 = pneg %p247
      $region38: #{residual_unit_fwd.5} parent=35 // pred_check_branch
        %250 = sbr.rel (%p248) target = $region40
      $region39: #{residual_unit_fwd.5} parent=35 // pred_region
        %vm251 = vcmask 130048
        %252 = vst.msk [vmem:[#allocation2] sm:$0xff] %vm251, 0.0
        %253 = vst.msk [vmem:[#allocation2 + $0x8] sm:$0xff] %vm251, 0.0
        %254 = vst.msk [vmem:[#allocation2 + $0x10] sm:$0xff] %vm251, 0.0
        %255 = vst.msk [vmem:[#allocation2 + $0x18] sm:$0xff] %vm251, 0.0
        %256 = vst.msk [vmem:[#allocation2 + $0x20] sm:$0xff] %vm251, 0.0
        %257 = vst.msk [vmem:[#allocation2 + $0x28] sm:$0xff] %vm251, 0.0
        %258 = vst.msk [vmem:[#allocation2 + $0x30] sm:$0xff] %vm251, 0.0
        %259 = vst.msk [vmem:[#allocation2 + $0x38] sm:$0xff] %vm251, 0.0
        %260 = vst.msk [vmem:[#allocation2 + $0x40] sm:$0xff] %vm251, 0.0
        %261 = vst.msk [vmem:[#allocation2 + $0x48] sm:$0xff] %vm251, 0.0
        %262 = vst.msk [vmem:[#allocation2 + $0x50] sm:$0xff] %vm251, 0.0
        %263 = vst.msk [vmem:[#allocation2 + $0x58] sm:$0xff] %vm251, 0.0
        %264 = vst.msk [vmem:[#allocation2 + $0x60] sm:$0xff] %vm251, 0.0
        %265 = vst.msk [vmem:[#allocation2 + $0x68] sm:$0xff] %vm251, 0.0
        %266 = vst.msk [vmem:[#allocation2 + $0x70] sm:$0xff] %vm251, 0.0
        %267 = vst.msk [vmem:[#allocation2 + $0x78] sm:$0xff] %vm251, 0.0
        %268 = vst.msk [vmem:[#allocation2 + $0x80] sm:$0xff] %vm251, 0.0
        %269 = vst.msk [vmem:[#allocation2 + $0x88] sm:$0xff] %vm251, 0.0
        %270 = vst.msk [vmem:[#allocation2 + $0x90] sm:$0xff] %vm251, 0.0
        %271 = vst.msk [vmem:[#allocation2 + $0x98] sm:$0xff] %vm251, 0.0
        %272 = vst.msk [vmem:[#allocation2 + $0xa0] sm:$0xff] %vm251, 0.0
        %273 = vst.msk [vmem:[#allocation2 + $0xa8] sm:$0xff] %vm251, 0.0
        %274 = vst.msk [vmem:[#allocation2 + $0xb0] sm:$0xff] %vm251, 0.0
        %275 = vst.msk [vmem:[#allocation2 + $0xb8] sm:$0xff] %vm251, 0.0
        %276 = vst.msk [vmem:[#allocation2 + $0xc0] sm:$0xff] %vm251, 0.0
        %277 = vst.msk [vmem:[#allocation2 + $0xc8] sm:$0xff] %vm251, 0.0
        %278 = vst.msk [vmem:[#allocation2 + $0xd0] sm:$0xff] %vm251, 0.0
        %279 = vst.msk [vmem:[#allocation2 + $0xd8] sm:$0xff] %vm251, 0.0
        %280 = vst.msk [vmem:[#allocation2 + $0xe0] sm:$0xff] %vm251, 0.0
        %281 = vst.msk [vmem:[#allocation2 + $0xe8] sm:$0xff] %vm251, 0.0
        %282 = vst.msk [vmem:[#allocation2 + $0xf0] sm:$0xff] %vm251, 0.0
        %283 = vst.msk [vmem:[#allocation2 + $0xf8] sm:$0xff] %vm251, 0.0
      $region40: #{residual_unit_fwd.5} parent=35 // pred_fallthru
        _
      %v284 = vld [vmem:[#allocation2] sm:$0xff]
      %v285 = vld [vmem:[#allocation2 + $0x8] sm:$0xff]
      %v286 = vld [vmem:[#allocation2 + $0x10] sm:$0xff]
      %v287 = vld [vmem:[#allocation2 + $0x18] sm:$0xff]
      %v288 = vld [vmem:[#allocation2 + $0x20] sm:$0xff]
      %v289 = vld [vmem:[#allocation2 + $0x28] sm:$0xff]
      %v290 = vld [vmem:[#allocation2 + $0x30] sm:$0xff]
      %v291 = vld [vmem:[#allocation2 + $0x38] sm:$0xff]
      %v292 = vld [vmem:[#allocation2 + $0x40] sm:$0xff]
      %v293 = vld [vmem:[#allocation2 + $0x48] sm:$0xff]
      %v294 = vld [vmem:[#allocation2 + $0x50] sm:$0xff]
      %v295 = vld [vmem:[#allocation2 + $0x58] sm:$0xff]
      %v296 = vld [vmem:[#allocation2 + $0x60] sm:$0xff]
      %v297 = vld [vmem:[#allocation2 + $0x68] sm:$0xff]
      %v298 = vld [vmem:[#allocation2 + $0x70] sm:$0xff]
      %v299 = vld [vmem:[#allocation2 + $0x78] sm:$0xff]
      %v300 = vld [vmem:[#allocation2 + $0x80] sm:$0xff]
      %v301 = vld [vmem:[#allocation2 + $0x88] sm:$0xff]
      %v302 = vld [vmem:[#allocation2 + $0x90] sm:$0xff]
      %v303 = vld [vmem:[#allocation2 + $0x98] sm:$0xff]
      %v304 = vld [vmem:[#allocation2 + $0xa0] sm:$0xff]
      %v305 = vld [vmem:[#allocation2 + $0xa8] sm:$0xff]
      %v306 = vld [vmem:[#allocation2 + $0xb0] sm:$0xff]
      %v307 = vld [vmem:[#allocation2 + $0xb8] sm:$0xff]
      %v308 = vld [vmem:[#allocation2 + $0xc0] sm:$0xff]
      %v309 = vld [vmem:[#allocation2 + $0xc8] sm:$0xff]
      %v310 = vld [vmem:[#allocation2 + $0xd0] sm:$0xff]
      %v311 = vld [vmem:[#allocation2 + $0xd8] sm:$0xff]
      %v312 = vld [vmem:[#allocation2 + $0xe0] sm:$0xff]
      %v313 = vld [vmem:[#allocation2 + $0xe8] sm:$0xff]
      %v314 = vld [vmem:[#allocation2 + $0xf0] sm:$0xff]
      %v315 = vld [vmem:[#allocation2 + $0xf8] sm:$0xff]
      %v316 = vld [vmem:[%s232] sm:$0xf]
      %v317 = vld [vmem:[%s232 + $0x4] sm:$0xf]
      %v318 = vld [vmem:[%s232 + $0x8] sm:$0xf]
      %v319 = vld [vmem:[%s232 + $0xc] sm:$0xf]
      %v320 = vld [vmem:[%s232 + $0x10] sm:$0xf]
      %v321 = vld [vmem:[%s232 + $0x14] sm:$0xf]
      %v322 = vld [vmem:[%s232 + $0x18] sm:$0xf]
      %v323 = vld [vmem:[%s232 + $0x1c] sm:$0xf]
      %v324 = vld [vmem:[%s232 + $0x20] sm:$0xf]
      %v325 = vld [vmem:[%s232 + $0x24] sm:$0xf]
      %v326 = vld [vmem:[%s232 + $0x28] sm:$0xf]
      %v327 = vld [vmem:[%s232 + $0x2c] sm:$0xf]
      %v328 = vld [vmem:[%s232 + $0x30] sm:$0xf]
      %v329 = vld [vmem:[%s232 + $0x34] sm:$0xf]
      %v330 = vld [vmem:[%s232 + $0x38] sm:$0xf]
      %v331 = vld [vmem:[%s232 + $0x3c] sm:$0xf]
      %v332 = vld [vmem:[%s232 + $0x40] sm:$0xf]
      %v333 = vld [vmem:[%s232 + $0x44] sm:$0xf]
      %v334 = vld [vmem:[%s232 + $0x48] sm:$0xf]
      %v335 = vld [vmem:[%s232 + $0x4c] sm:$0xf]
      %v336 = vld [vmem:[%s232 + $0x50] sm:$0xf]
      %v337 = vld [vmem:[%s232 + $0x54] sm:$0xf]
      %v338 = vld [vmem:[%s232 + $0x58] sm:$0xf]
      %v339 = vld [vmem:[%s232 + $0x5c] sm:$0xf]
      %v340 = vld [vmem:[%s232 + $0x60] sm:$0xf]
      %v341 = vld [vmem:[%s232 + $0x64] sm:$0xf]
      %v342 = vld [vmem:[%s232 + $0x68] sm:$0xf]
      %v343 = vld [vmem:[%s232 + $0x6c] sm:$0xf]
      %v344 = vld [vmem:[%s232 + $0x70] sm:$0xf]
      %v345 = vld [vmem:[%s232 + $0x74] sm:$0xf]
      %v346 = vld [vmem:[%s232 + $0x78] sm:$0xf]
      %v347 = vld [vmem:[%s232 + $0x7c] sm:$0xf]
      %v348 = vld [vmem:[%s238] sm:$0xf]
      %v349 = vld [vmem:[%s238 + $0x4] sm:$0xf]
      %v350 = vld [vmem:[%s238 + $0x8] sm:$0xf]
      %v351 = vld [vmem:[%s238 + $0xc] sm:$0xf]
      %v384 = vunpack.c.l.b16 %v316
      %v385 = vunpack.c.l.b16 %v317
      %v386 = vunpack.c.l.b16 %v318
      %v387 = vunpack.c.l.b16 %v319
      %v388 = vunpack.c.l.b16 %v320
      %v389 = vunpack.c.l.b16 %v321
      %v390 = vunpack.c.l.b16 %v322
      %v391 = vunpack.c.l.b16 %v323
      %v392 = vunpack.c.l.b16 %v324
      %v393 = vunpack.c.l.b16 %v325
      %v394 = vunpack.c.l.b16 %v326
      %v395 = vunpack.c.l.b16 %v327
      %v396 = vunpack.c.l.b16 %v328
      %v397 = vunpack.c.l.b16 %v329
      %v398 = vunpack.c.l.b16 %v330
      %v399 = vunpack.c.l.b16 %v331
      %v400 = vunpack.c.l.b16 %v332
      %v401 = vunpack.c.l.b16 %v333
      %v402 = vunpack.c.l.b16 %v334
      %v403 = vunpack.c.l.b16 %v335
      %v404 = vunpack.c.l.b16 %v336
      %v405 = vunpack.c.l.b16 %v337
      %v406 = vunpack.c.l.b16 %v338
      %v407 = vunpack.c.l.b16 %v339
      %v408 = vunpack.c.l.b16 %v340
      %v409 = vunpack.c.l.b16 %v341
      %v410 = vunpack.c.l.b16 %v342
      %v411 = vunpack.c.l.b16 %v343
      %v412 = vunpack.c.l.b16 %v344
      %v413 = vunpack.c.l.b16 %v345
      %v414 = vunpack.c.l.b16 %v346
      %v415 = vunpack.c.l.b16 %v347
      %v416 = vpack.c.b16 %v385, %v384
      %v417 = vpack.c.b16 %v387, %v386
      %v418 = vpack.c.b16 %v389, %v388
      %v419 = vpack.c.b16 %v391, %v390
      %v420 = vpack.c.b16 %v393, %v392
      %v421 = vpack.c.b16 %v395, %v394
      %v422 = vpack.c.b16 %v397, %v396
      %v423 = vpack.c.b16 %v399, %v398
      %v424 = vpack.c.b16 %v401, %v400
      %v425 = vpack.c.b16 %v403, %v402
      %v426 = vpack.c.b16 %v405, %v404
      %v427 = vpack.c.b16 %v407, %v406
      %v428 = vpack.c.b16 %v409, %v408
      %v429 = vpack.c.b16 %v411, %v410
      %v430 = vpack.c.b16 %v413, %v412
      %v431 = vpack.c.b16 %v415, %v414
      %v436 = vunpack.c.l.b16 %v348
      %v437 = vunpack.c.l.b16 %v349
      %v438 = vunpack.c.l.b16 %v350
      %v439 = vunpack.c.l.b16 %v351
      %v440 = vpack.c.b16 %v437, %v436
      %v441 = vpack.c.b16 %v439, %v438
      %vm444 = vcmask 261120
      %v446 = vsel %vm444, %v416, 0
      %v449 = vsel %vm444, %v417, 0
      %v452 = vsel %vm444, %v418, 0
      %v455 = vsel %vm444, %v419, 0
      %v458 = vsel %vm444, %v420, 0
      %v461 = vsel %vm444, %v421, 0
      %v464 = vsel %vm444, %v422, 0
      %v467 = vsel %vm444, %v423, 0
      %v470 = vsel %vm444, %v424, 0
      %v473 = vsel %vm444, %v425, 0
      %v476 = vsel %vm444, %v426, 0
      %v479 = vsel %vm444, %v427, 0
      %v482 = vsel %vm444, %v428, 0
      %v485 = vsel %vm444, %v429, 0
      %v488 = vsel %vm444, %v430, 0
      %v491 = vsel %vm444, %v431, 0
      %493 = vmatpush.bf16.msra.mxu0 0
      %494 = vmatpush.bf16.msra.mxu0 0
      %495 = vmatpush.bf16.msra.mxu0 0
      %496 = vmatpush.bf16.msra.mxu0 0
      %497 = vmatpush.bf16.msra.mxu0 0
      %498 = vmatpush.bf16.msra.mxu0 0
      %499 = vmatpush.bf16.msra.mxu0 %v441
      %500 = vmatpush.bf16.msra.mxu0 %v440
      %501 = vmatmul.bf16.gmra.mxu0 %v446
      %v502 = vpop.f32.mrf.mxu0
      %v503 = vadd.f32 0.0, %v502
      %v504 = vpop.f32.mrf.mxu0
      %v505 = vadd.f32 0.0, %v504
      %506 = vmatmul.bf16.gmra.mxu0 %v449
      %v507 = vpop.f32.mrf.mxu0
      %v508 = vadd.f32 0.0, %v507
      %v509 = vpop.f32.mrf.mxu0
      %v510 = vadd.f32 0.0, %v509
      %511 = vmatmul.bf16.gmra.mxu0 %v452
      %v512 = vpop.f32.mrf.mxu0
      %v513 = vadd.f32 0.0, %v512
      %v514 = vpop.f32.mrf.mxu0
      %v515 = vadd.f32 0.0, %v514
      %516 = vmatmul.bf16.gmra.mxu0 %v455
      %v517 = vpop.f32.mrf.mxu0
      %v518 = vadd.f32 0.0, %v517
      %v519 = vpop.f32.mrf.mxu0
      %v520 = vadd.f32 0.0, %v519
      %521 = vmatmul.bf16.gmra.mxu0 %v458
      %v522 = vpop.f32.mrf.mxu0
      %v523 = vadd.f32 0.0, %v522
      %v524 = vpop.f32.mrf.mxu0
      %v525 = vadd.f32 0.0, %v524
      %526 = vmatmul.bf16.gmra.mxu0 %v461
      %v527 = vpop.f32.mrf.mxu0
      %v528 = vadd.f32 0.0, %v527
      %v529 = vpop.f32.mrf.mxu0
      %v530 = vadd.f32 0.0, %v529
      %531 = vmatmul.bf16.gmra.mxu0 %v464
      %v532 = vpop.f32.mrf.mxu0
      %v533 = vadd.f32 0.0, %v532
      %v534 = vpop.f32.mrf.mxu0
      %v535 = vadd.f32 0.0, %v534
      %536 = vmatmul.bf16.gmra.mxu0 %v467
      %v537 = vpop.f32.mrf.mxu0
      %v538 = vadd.f32 0.0, %v537
      %v539 = vpop.f32.mrf.mxu0
      %v540 = vadd.f32 0.0, %v539
      %541 = vmatmul.bf16.gmra.mxu0 %v470
      %v542 = vpop.f32.mrf.mxu0
      %v543 = vadd.f32 0.0, %v542
      %v544 = vpop.f32.mrf.mxu0
      %v545 = vadd.f32 0.0, %v544
      %546 = vmatmul.bf16.gmra.mxu0 %v473
      %v547 = vpop.f32.mrf.mxu0
      %v548 = vadd.f32 0.0, %v547
      %v549 = vpop.f32.mrf.mxu0
      %v550 = vadd.f32 0.0, %v549
      %551 = vmatmul.bf16.gmra.mxu0 %v476
      %v552 = vpop.f32.mrf.mxu0
      %v553 = vadd.f32 0.0, %v552
      %v554 = vpop.f32.mrf.mxu0
      %v555 = vadd.f32 0.0, %v554
      %556 = vmatmul.bf16.gmra.mxu0 %v479
      %v557 = vpop.f32.mrf.mxu0
      %v558 = vadd.f32 0.0, %v557
      %v559 = vpop.f32.mrf.mxu0
      %v560 = vadd.f32 0.0, %v559
      %561 = vmatmul.bf16.gmra.mxu0 %v482
      %v562 = vpop.f32.mrf.mxu0
      %v563 = vadd.f32 0.0, %v562
      %v564 = vpop.f32.mrf.mxu0
      %v565 = vadd.f32 0.0, %v564
      %566 = vmatmul.bf16.gmra.mxu0 %v485
      %v567 = vpop.f32.mrf.mxu0
      %v568 = vadd.f32 0.0, %v567
      %v569 = vpop.f32.mrf.mxu0
      %v570 = vadd.f32 0.0, %v569
      %571 = vmatmul.bf16.gmra.mxu0 %v488
      %v572 = vpop.f32.mrf.mxu0
      %v573 = vadd.f32 0.0, %v572
      %v574 = vpop.f32.mrf.mxu0
      %v575 = vadd.f32 0.0, %v574
      %576 = vmatmul.bf16.gmra.mxu0 %v491
      %v577 = vpop.f32.mrf.mxu0
      %v578 = vadd.f32 0.0, %v577
      %v579 = vpop.f32.mrf.mxu0
      %v580 = vadd.f32 0.0, %v579
      %581 = vdwg.mxu0
      %v582 = vadd.f32 %v284, %v503
      %v583 = vadd.f32 %v285, %v505
      %v584 = vadd.f32 %v286, %v508
      %v585 = vadd.f32 %v287, %v510
      %v586 = vadd.f32 %v288, %v513
      %v587 = vadd.f32 %v289, %v515
      %v588 = vadd.f32 %v290, %v518
      %v589 = vadd.f32 %v291, %v520
      %v590 = vadd.f32 %v292, %v523
      %v591 = vadd.f32 %v293, %v525
      %v592 = vadd.f32 %v294, %v528
      %v593 = vadd.f32 %v295, %v530
      %v594 = vadd.f32 %v296, %v533
      %v595 = vadd.f32 %v297, %v535
      %v596 = vadd.f32 %v298, %v538
      %v597 = vadd.f32 %v299, %v540
      %v598 = vadd.f32 %v300, %v543
      %v599 = vadd.f32 %v301, %v545
      %v600 = vadd.f32 %v302, %v548
      %v601 = vadd.f32 %v303, %v550
      %v602 = vadd.f32 %v304, %v553
      %v603 = vadd.f32 %v305, %v555
      %v604 = vadd.f32 %v306, %v558
      %v605 = vadd.f32 %v307, %v560
      %v606 = vadd.f32 %v308, %v563
      %v607 = vadd.f32 %v309, %v565
      %v608 = vadd.f32 %v310, %v568
      %v609 = vadd.f32 %v311, %v570
      %v610 = vadd.f32 %v312, %v573
      %v611 = vadd.f32 %v313, %v575
      %v612 = vadd.f32 %v314, %v578
      %v613 = vadd.f32 %v315, %v580
      %vm614 = vcmask 130048
      %615 = vst.msk [vmem:[#allocation2] sm:$0xff] %vm614, %v582
      %616 = vst.msk [vmem:[#allocation2 + $0x8] sm:$0xff] %vm614, %v583
      %617 = vst.msk [vmem:[#allocation2 + $0x10] sm:$0xff] %vm614, %v584
      %618 = vst.msk [vmem:[#allocation2 + $0x18] sm:$0xff] %vm614, %v585
      %619 = vst.msk [vmem:[#allocation2 + $0x20] sm:$0xff] %vm614, %v586
      %620 = vst.msk [vmem:[#allocation2 + $0x28] sm:$0xff] %vm614, %v587
      %621 = vst.msk [vmem:[#allocation2 + $0x30] sm:$0xff] %vm614, %v588
      %622 = vst.msk [vmem:[#allocation2 + $0x38] sm:$0xff] %vm614, %v589
      %623 = vst.msk [vmem:[#allocation2 + $0x40] sm:$0xff] %vm614, %v590
      %624 = vst.msk [vmem:[#allocation2 + $0x48] sm:$0xff] %vm614, %v591
      %625 = vst.msk [vmem:[#allocation2 + $0x50] sm:$0xff] %vm614, %v592
      %626 = vst.msk [vmem:[#allocation2 + $0x58] sm:$0xff] %vm614, %v593
      %627 = vst.msk [vmem:[#allocation2 + $0x60] sm:$0xff] %vm614, %v594
      %628 = vst.msk [vmem:[#allocation2 + $0x68] sm:$0xff] %vm614, %v595
      %629 = vst.msk [vmem:[#allocation2 + $0x70] sm:$0xff] %vm614, %v596
      %630 = vst.msk [vmem:[#allocation2 + $0x78] sm:$0xff] %vm614, %v597
      %631 = vst.msk [vmem:[#allocation2 + $0x80] sm:$0xff] %vm614, %v598
      %632 = vst.msk [vmem:[#allocation2 + $0x88] sm:$0xff] %vm614, %v599
      %633 = vst.msk [vmem:[#allocation2 + $0x90] sm:$0xff] %vm614, %v600
      %634 = vst.msk [vmem:[#allocation2 + $0x98] sm:$0xff] %vm614, %v601
      %635 = vst.msk [vmem:[#allocation2 + $0xa0] sm:$0xff] %vm614, %v602
      %636 = vst.msk [vmem:[#allocation2 + $0xa8] sm:$0xff] %vm614, %v603
      %637 = vst.msk [vmem:[#allocation2 + $0xb0] sm:$0xff] %vm614, %v604
      %638 = vst.msk [vmem:[#allocation2 + $0xb8] sm:$0xff] %vm614, %v605
      %639 = vst.msk [vmem:[#allocation2 + $0xc0] sm:$0xff] %vm614, %v606
      %640 = vst.msk [vmem:[#allocation2 + $0xc8] sm:$0xff] %vm614, %v607
      %641 = vst.msk [vmem:[#allocation2 + $0xd0] sm:$0xff] %vm614, %v608
      %642 = vst.msk [vmem:[#allocation2 + $0xd8] sm:$0xff] %vm614, %v609
      %643 = vst.msk [vmem:[#allocation2 + $0xe0] sm:$0xff] %vm614, %v610
      %644 = vst.msk [vmem:[#allocation2 + $0xe8] sm:$0xff] %vm614, %v611
      %645 = vst.msk [vmem:[#allocation2 + $0xf0] sm:$0xff] %vm614, %v612
      %646 = vst.msk [vmem:[#allocation2 + $0xf8] sm:$0xff] %vm614, %v613
      // Predicated region
      $region41: #{residual_unit_fwd.5} parent=35 // pred_check
        %p647 = pneg %p247
      $region42: #{residual_unit_fwd.5} parent=35 // pred_check_branch
        %649 = sbr.rel (%p647) target = $region44
      $region43: #{residual_unit_fwd.5} parent=35 // pred_region
        %v650 = vld [vmem:[#allocation2] sm:$0xff]
        %v651 = vld [vmem:[#allocation2 + $0x8] sm:$0xff]
        %v652 = vld [vmem:[#allocation2 + $0x10] sm:$0xff]
        %v653 = vld [vmem:[#allocation2 + $0x18] sm:$0xff]
        %v654 = vld [vmem:[#allocation2 + $0x20] sm:$0xff]
        %v655 = vld [vmem:[#allocation2 + $0x28] sm:$0xff]
        %v656 = vld [vmem:[#allocation2 + $0x30] sm:$0xff]
        %v657 = vld [vmem:[#allocation2 + $0x38] sm:$0xff]
        %v658 = vld [vmem:[#allocation2 + $0x40] sm:$0xff]
        %v659 = vld [vmem:[#allocation2 + $0x48] sm:$0xff]
        %v660 = vld [vmem:[#allocation2 + $0x50] sm:$0xff]
        %v661 = vld [vmem:[#allocation2 + $0x58] sm:$0xff]
        %v662 = vld [vmem:[#allocation2 + $0x60] sm:$0xff]
        %v663 = vld [vmem:[#allocation2 + $0x68] sm:$0xff]
        %v664 = vld [vmem:[#allocation2 + $0x70] sm:$0xff]
        %v665 = vld [vmem:[#allocation2 + $0x78] sm:$0xff]
        %v666 = vld [vmem:[#allocation2 + $0x80] sm:$0xff]
        %v667 = vld [vmem:[#allocation2 + $0x88] sm:$0xff]
        %v668 = vld [vmem:[#allocation2 + $0x90] sm:$0xff]
        %v669 = vld [vmem:[#allocation2 + $0x98] sm:$0xff]
        %v670 = vld [vmem:[#allocation2 + $0xa0] sm:$0xff]
        %v671 = vld [vmem:[#allocation2 + $0xa8] sm:$0xff]
        %v672 = vld [vmem:[#allocation2 + $0xb0] sm:$0xff]
        %v673 = vld [vmem:[#allocation2 + $0xb8] sm:$0xff]
        %v674 = vld [vmem:[#allocation2 + $0xc0] sm:$0xff]
        %v675 = vld [vmem:[#allocation2 + $0xc8] sm:$0xff]
        %v676 = vld [vmem:[#allocation2 + $0xd0] sm:$0xff]
        %v677 = vld [vmem:[#allocation2 + $0xd8] sm:$0xff]
        %v678 = vld [vmem:[#allocation2 + $0xe0] sm:$0xff]
        %v679 = vld [vmem:[#allocation2 + $0xe8] sm:$0xff]
        %v680 = vld [vmem:[#allocation2 + $0xf0] sm:$0xff]
        %v681 = vld [vmem:[#allocation2 + $0xf8] sm:$0xff]
        %v682 = vld [vmem:[%s2] sm:$0x1]
        %v684 = vperm.slane %v682, 0
        %v686 = vmul.f32 %v650, %v684
        %v687 = vmul.f32 %v651, %v684
        %v688 = vmul.f32 %v652, %v684
        %v689 = vmul.f32 %v653, %v684
        %v690 = vmul.f32 %v654, %v684
        %v691 = vmul.f32 %v655, %v684
        %v692 = vmul.f32 %v656, %v684
        %v693 = vmul.f32 %v657, %v684
        %v694 = vmul.f32 %v658, %v684
        %v695 = vmul.f32 %v659, %v684
        %v696 = vmul.f32 %v660, %v684
        %v697 = vmul.f32 %v661, %v684
        %v698 = vmul.f32 %v662, %v684
        %v699 = vmul.f32 %v663, %v684
        %v700 = vmul.f32 %v664, %v684
        %v701 = vmul.f32 %v665, %v684
        %v702 = vmul.f32 %v666, %v684
        %v703 = vmul.f32 %v667, %v684
        %v704 = vmul.f32 %v668, %v684
        %v705 = vmul.f32 %v669, %v684
        %v706 = vmul.f32 %v670, %v684
        %v707 = vmul.f32 %v671, %v684
        %v708 = vmul.f32 %v672, %v684
        %v709 = vmul.f32 %v673, %v684
        %v710 = vmul.f32 %v674, %v684
        %v711 = vmul.f32 %v675, %v684
        %v712 = vmul.f32 %v676, %v684
        %v713 = vmul.f32 %v677, %v684
        %v714 = vmul.f32 %v678, %v684
        %v715 = vmul.f32 %v679, %v684
        %v716 = vmul.f32 %v680, %v684
        %v717 = vmul.f32 %v681, %v684
        %v718 = vld [vmem:[%s3] sm:$0x1]
        %v720 = vperm.slane %v718, 0
        %v722 = vadd.f32 %v686, %v720
        %v723 = vadd.f32 %v687, %v720
        %v724 = vadd.f32 %v688, %v720
        %v725 = vadd.f32 %v689, %v720
        %v726 = vadd.f32 %v690, %v720
        %v727 = vadd.f32 %v691, %v720
        %v728 = vadd.f32 %v692, %v720
        %v729 = vadd.f32 %v693, %v720
        %v730 = vadd.f32 %v694, %v720
        %v731 = vadd.f32 %v695, %v720
        %v732 = vadd.f32 %v696, %v720
        %v733 = vadd.f32 %v697, %v720
        %v734 = vadd.f32 %v698, %v720
        %v735 = vadd.f32 %v699, %v720
        %v736 = vadd.f32 %v700, %v720
        %v737 = vadd.f32 %v701, %v720
        %v738 = vadd.f32 %v702, %v720
        %v739 = vadd.f32 %v703, %v720
        %v740 = vadd.f32 %v704, %v720
        %v741 = vadd.f32 %v705, %v720
        %v742 = vadd.f32 %v706, %v720
        %v743 = vadd.f32 %v707, %v720
        %v744 = vadd.f32 %v708, %v720
        %v745 = vadd.f32 %v709, %v720
        %v746 = vadd.f32 %v710, %v720
        %v747 = vadd.f32 %v711, %v720
        %v748 = vadd.f32 %v712, %v720
        %v749 = vadd.f32 %v713, %v720
        %v750 = vadd.f32 %v714, %v720
        %v751 = vadd.f32 %v715, %v720
        %v752 = vadd.f32 %v716, %v720
        %v753 = vadd.f32 %v717, %v720
        %v754 = vmax.f32 %v722, 0.0
        %v755 = vmax.f32 %v723, 0.0
        %v756 = vmax.f32 %v724, 0.0
        %v757 = vmax.f32 %v725, 0.0
        %v758 = vmax.f32 %v726, 0.0
        %v759 = vmax.f32 %v727, 0.0
        %v760 = vmax.f32 %v728, 0.0
        %v761 = vmax.f32 %v729, 0.0
        %v762 = vmax.f32 %v730, 0.0
        %v763 = vmax.f32 %v731, 0.0
        %v764 = vmax.f32 %v732, 0.0
        %v765 = vmax.f32 %v733, 0.0
        %v766 = vmax.f32 %v734, 0.0
        %v767 = vmax.f32 %v735, 0.0
        %v768 = vmax.f32 %v736, 0.0
        %v769 = vmax.f32 %v737, 0.0
        %v770 = vmax.f32 %v738, 0.0
        %v771 = vmax.f32 %v739, 0.0
        %v772 = vmax.f32 %v740, 0.0
        %v773 = vmax.f32 %v741, 0.0
        %v774 = vmax.f32 %v742, 0.0
        %v775 = vmax.f32 %v743, 0.0
        %v776 = vmax.f32 %v744, 0.0
        %v777 = vmax.f32 %v745, 0.0
        %v778 = vmax.f32 %v746, 0.0
        %v779 = vmax.f32 %v747, 0.0
        %v780 = vmax.f32 %v748, 0.0
        %v781 = vmax.f32 %v749, 0.0
        %v782 = vmax.f32 %v750, 0.0
        %v783 = vmax.f32 %v751, 0.0
        %v784 = vmax.f32 %v752, 0.0
        %v785 = vmax.f32 %v753, 0.0
        %v786 = vpack.c.bf16 %v754, %v754
        %v787 = vpack.c.bf16 %v755, %v755
        %v788 = vpack.c.bf16 %v756, %v756
        %v789 = vpack.c.bf16 %v757, %v757
        %v790 = vpack.c.bf16 %v758, %v758
        %v791 = vpack.c.bf16 %v759, %v759
        %v792 = vpack.c.bf16 %v760, %v760
        %v793 = vpack.c.bf16 %v761, %v761
        %v794 = vpack.c.bf16 %v762, %v762
        %v795 = vpack.c.bf16 %v763, %v763
        %v796 = vpack.c.bf16 %v764, %v764
        %v797 = vpack.c.bf16 %v765, %v765
        %v798 = vpack.c.bf16 %v766, %v766
        %v799 = vpack.c.bf16 %v767, %v767
        %v800 = vpack.c.bf16 %v768, %v768
        %v801 = vpack.c.bf16 %v769, %v769
        %v802 = vpack.c.bf16 %v770, %v770
        %v803 = vpack.c.bf16 %v771, %v771
        %v804 = vpack.c.bf16 %v772, %v772
        %v805 = vpack.c.bf16 %v773, %v773
        %v806 = vpack.c.bf16 %v774, %v774
        %v807 = vpack.c.bf16 %v775, %v775
        %v808 = vpack.c.bf16 %v776, %v776
        %v809 = vpack.c.bf16 %v777, %v777
        %v810 = vpack.c.bf16 %v778, %v778
        %v811 = vpack.c.bf16 %v779, %v779
        %v812 = vpack.c.bf16 %v780, %v780
        %v813 = vpack.c.bf16 %v781, %v781
        %v814 = vpack.c.bf16 %v782, %v782
        %v815 = vpack.c.bf16 %v783, %v783
        %v816 = vpack.c.bf16 %v784, %v784
        %v817 = vpack.c.bf16 %v785, %v785
        %vm818 = vcmask 125952
        %819 = vst.msk [vmem:[%s244] sm:$0xf] %vm818, %v786
        %820 = vst.msk [vmem:[%s244 + $0x4] sm:$0xf] %vm818, %v787
        %821 = vst.msk [vmem:[%s244 + $0x8] sm:$0xf] %vm818, %v788
        %822 = vst.msk [vmem:[%s244 + $0xc] sm:$0xf] %vm818, %v789
        %823 = vst.msk [vmem:[%s244 + $0x10] sm:$0xf] %vm818, %v790
        %824 = vst.msk [vmem:[%s244 + $0x14] sm:$0xf] %vm818, %v791
        %825 = vst.msk [vmem:[%s244 + $0x18] sm:$0xf] %vm818, %v792
        %826 = vst.msk [vmem:[%s244 + $0x1c] sm:$0xf] %vm818, %v793
        %827 = vst.msk [vmem:[%s244 + $0x20] sm:$0xf] %vm818, %v794
        %828 = vst.msk [vmem:[%s244 + $0x24] sm:$0xf] %vm818, %v795
        %829 = vst.msk [vmem:[%s244 + $0x28] sm:$0xf] %vm818, %v796
        %830 = vst.msk [vmem:[%s244 + $0x2c] sm:$0xf] %vm818, %v797
        %831 = vst.msk [vmem:[%s244 + $0x30] sm:$0xf] %vm818, %v798
        %832 = vst.msk [vmem:[%s244 + $0x34] sm:$0xf] %vm818, %v799
        %833 = vst.msk [vmem:[%s244 + $0x38] sm:$0xf] %vm818, %v800
        %834 = vst.msk [vmem:[%s244 + $0x3c] sm:$0xf] %vm818, %v801
        %835 = vst.msk [vmem:[%s244 + $0x40] sm:$0xf] %vm818, %v802
        %836 = vst.msk [vmem:[%s244 + $0x44] sm:$0xf] %vm818, %v803
        %837 = vst.msk [vmem:[%s244 + $0x48] sm:$0xf] %vm818, %v804
        %838 = vst.msk [vmem:[%s244 + $0x4c] sm:$0xf] %vm818, %v805
        %839 = vst.msk [vmem:[%s244 + $0x50] sm:$0xf] %vm818, %v806
        %840 = vst.msk [vmem:[%s244 + $0x54] sm:$0xf] %vm818, %v807
        %841 = vst.msk [vmem:[%s244 + $0x58] sm:$0xf] %vm818, %v808
        %842 = vst.msk [vmem:[%s244 + $0x5c] sm:$0xf] %vm818, %v809
        %843 = vst.msk [vmem:[%s244 + $0x60] sm:$0xf] %vm818, %v810
        %844 = vst.msk [vmem:[%s244 + $0x64] sm:$0xf] %vm818, %v811
        %845 = vst.msk [vmem:[%s244 + $0x68] sm:$0xf] %vm818, %v812
        %846 = vst.msk [vmem:[%s244 + $0x6c] sm:$0xf] %vm818, %v813
        %847 = vst.msk [vmem:[%s244 + $0x70] sm:$0xf] %vm818, %v814
        %848 = vst.msk [vmem:[%s244 + $0x74] sm:$0xf] %vm818, %v815
        %849 = vst.msk [vmem:[%s244 + $0x78] sm:$0xf] %vm818, %v816
        %850 = vst.msk [vmem:[%s244 + $0x7c] sm:$0xf] %vm818, %v817
      $region44: #{residual_unit_fwd.5} parent=35 // pred_fallthru
        _
      %s851 = smul.u32 32, %s19
      %p852 = scmp.lt.s32.totalorder %s851, 63
      %s853 = scalar_select %p852, %s851, 63
      %s854 = smul.addr %s853, 4
      %s855 = scalar_lea.vmem %s4, %s854
      // Predicated region
      $region45: #{residual_unit_fwd.5} parent=35 // pred_check
        %p856 = pneg %p141
      $region46: #{residual_unit_fwd.5} parent=35 // pred_check_branch
        %858 = sbr.rel (%p856) target = $region48
      $region47: #{residual_unit_fwd.5} parent=35 // pred_region
        %s859 = smul.u32 32, %s19
      $region48: #{residual_unit_fwd.5} parent=35 // pred_fallthru
        _
    $region36: #{residual_unit_fwd.5} parent=5 // pred_fallthru
      _
    %p860 = scmp.le.s32.totalorder 2, %s10
    // Predicated region
    $region49: #{residual_unit_fwd.5} parent=5 // pred_check
      %p861 = pneg %p860
    $region50: #{residual_unit_fwd.5} parent=5 // pred_check_branch
      %863 = sbr.rel (%p861) target = $region52
    $region51: #{residual_unit_fwd.5} parent=5 // pred_region
      %s864 = ssub.s32 %s10, 2
      // Predicated region
      $region53: #{residual_unit_fwd.5} parent=51 // pred_check
        %p865 = pneg %p147
      $region54: #{residual_unit_fwd.5} parent=51 // pred_check_branch
        %867 = sbr.rel (%p865) target = $region56
      $region55: #{residual_unit_fwd.5} parent=51 // pred_region
        %s868 = smul.u32 32, %s21
        %p869 = scmp.lt.s32.totalorder %s868, 63
        %s870 = scalar_select %p869, %s868, 63
        %s871 = smul.addr %s870, 4
        %s872 = scalar_lea.vmem %s4, %s871
      $region56: #{residual_unit_fwd.5} parent=51 // pred_fallthru
        _
    $region52: #{residual_unit_fwd.5} parent=5 // pred_fallthru
      _
  $region6: #{residual_unit_fwd.5} parent=0 // loop_footer
    %s14 = sadd.s32 1, %s10
  $region7: #{residual_unit_fwd.5} parent=0 // loop_footer_branch
    %9 = sbr.rel target = $region3
  $region8: #{residual_unit_fwd.5} parent=0 // loop_exit
    _

// kernel: residual_unit_fwd.4
$region0: #{residual_unit_fwd.4}
  #allocation0 [shape = 'u32[]', space=smem, size = 0x4, offset = 0x4, fixed_abs, tag = 'smem constant byte address 0x4 - core index']
  #allocation1 [shape = 'u32[72,128]{1,0:T(1,128)}', space=vmem, size = 0x9000, scoped, tag = 'internal scratch']
  #allocation2 [shape = 'f32[128,64]{1,0:T(8,128)}', space=vmem, size = 0x10000, scoped, tag = 'scratch operand']
  %s0 = inlined_call_operand.vmem [shape: bf16[128,32], index: 0, kind: input, shape index: {}]
  %s1 = inlined_call_operand.vmem [shape: bf16[32,64], index: 1, kind: input, shape index: {}]
  %s2 = inlined_call_operand.vmem [shape: bf16[128,64], index: 2, kind: output, shape index: {}]
  %s3 = sld [smem:[#allocation0]]
  $region26: #{residual_unit_fwd.4} parent=0
    _
  %s5 = ssub.s32 1, %s3
  %s6 = scalar_select 0, %s5, %s3
  // Predicated region
  $region2: #{residual_unit_fwd.4} parent=0 // pred_check
    _
  $region3: #{residual_unit_fwd.4} parent=0 // pred_check_branch
    %8 = sbr.rel (0) target = $region5
  $region4: #{residual_unit_fwd.4} parent=0 // pred_region
    _
  $region5: #{residual_unit_fwd.4} parent=0 // pred_fallthru
    _
  // Predicated region
  $region6: #{residual_unit_fwd.4} parent=0 // pred_check
    _
  $region7: #{residual_unit_fwd.4} parent=0 // pred_check_branch
    %10 = sbr.rel (0) target = $region9
  $region8: #{residual_unit_fwd.4} parent=0 // pred_region
    _
  $region9: #{residual_unit_fwd.4} parent=0 // pred_fallthru
    _
  %p12 = scmp.eq.s32.totalorder 0, 0
  // Predicated region
  $region10: #{residual_unit_fwd.4} parent=0 // pred_check
    %p13 = pneg %p12
  $region11: #{residual_unit_fwd.4} parent=0 // pred_check_branch
    %15 = sbr.rel (%p13) target = $region13
  $region12: #{residual_unit_fwd.4} parent=0 // pred_region
    %vm16 = vcmask 523264
    %17 = vst.msk [vmem:[#allocation2] sm:$0xff] %vm16, 0.0
    %18 = vst.msk [vmem:[#allocation2 + $0x8] sm:$0xff] %vm16, 0.0
    %19 = vst.msk [vmem:[#allocation2 + $0x10] sm:$0xff] %vm16, 0.0
    %20 = vst.msk [vmem:[#allocation2 + $0x18] sm:$0xff] %vm16, 0.0
    %21 = vst.msk [vmem:[#allocation2 + $0x20] sm:$0xff] %vm16, 0.0
    %22 = vst.msk [vmem:[#allocation2 + $0x28] sm:$0xff] %vm16, 0.0
    %23 = vst.msk [vmem:[#allocation2 + $0x30] sm:$0xff] %vm16, 0.0
    %24 = vst.msk [vmem:[#allocation2 + $0x38] sm:$0xff] %vm16, 0.0
    %25 = vst.msk [vmem:[#allocation2 + $0x40] sm:$0xff] %vm16, 0.0
    %26 = vst.msk [vmem:[#allocation2 + $0x48] sm:$0xff] %vm16, 0.0
    %27 = vst.msk [vmem:[#allocation2 + $0x50] sm:$0xff] %vm16, 0.0
    %28 = vst.msk [vmem:[#allocation2 + $0x58] sm:$0xff] %vm16, 0.0
    %29 = vst.msk [vmem:[#allocation2 + $0x60] sm:$0xff] %vm16, 0.0
    %30 = vst.msk [vmem:[#allocation2 + $0x68] sm:$0xff] %vm16, 0.0
    %31 = vst.msk [vmem:[#allocation2 + $0x70] sm:$0xff] %vm16, 0.0
    %32 = vst.msk [vmem:[#allocation2 + $0x78] sm:$0xff] %vm16, 0.0
  $region13: #{residual_unit_fwd.4} parent=0 // pred_fallthru
    _
  %v33 = vld [vmem:[#allocation2] sm:$0xff]
  %v34 = vld [vmem:[#allocation2 + $0x8] sm:$0xff]
  %v35 = vld [vmem:[#allocation2 + $0x10] sm:$0xff]
  %v36 = vld [vmem:[#allocation2 + $0x18] sm:$0xff]
  %v37 = vld [vmem:[#allocation2 + $0x20] sm:$0xff]
  %v38 = vld [vmem:[#allocation2 + $0x28] sm:$0xff]
  %v39 = vld [vmem:[#allocation2 + $0x30] sm:$0xff]
  %v40 = vld [vmem:[#allocation2 + $0x38] sm:$0xff]
  %v41 = vld [vmem:[#allocation2 + $0x40] sm:$0xff]
  %v42 = vld [vmem:[#allocation2 + $0x48] sm:$0xff]
  %v43 = vld [vmem:[#allocation2 + $0x50] sm:$0xff]
  %v44 = vld [vmem:[#allocation2 + $0x58] sm:$0xff]
  %v45 = vld [vmem:[#allocation2 + $0x60] sm:$0xff]
  %v46 = vld [vmem:[#allocation2 + $0x68] sm:$0xff]
  %v47 = vld [vmem:[#allocation2 + $0x70] sm:$0xff]
  %v48 = vld [vmem:[#allocation2 + $0x78] sm:$0xff]
  %v49 = vld [vmem:[%s0] sm:$0xf]
  %v50 = vld [vmem:[%s0 + $0x4] sm:$0xf]
  %v51 = vld [vmem:[%s0 + $0x8] sm:$0xf]
  %v52 = vld [vmem:[%s0 + $0xc] sm:$0xf]
  %v53 = vld [vmem:[%s0 + $0x10] sm:$0xf]
  %v54 = vld [vmem:[%s0 + $0x14] sm:$0xf]
  %v55 = vld [vmem:[%s0 + $0x18] sm:$0xf]
  %v56 = vld [vmem:[%s0 + $0x1c] sm:$0xf]
  %v57 = vld [vmem:[%s0 + $0x20] sm:$0xf]
  %v58 = vld [vmem:[%s0 + $0x24] sm:$0xf]
  %v59 = vld [vmem:[%s0 + $0x28] sm:$0xf]
  %v60 = vld [vmem:[%s0 + $0x2c] sm:$0xf]
  %v61 = vld [vmem:[%s0 + $0x30] sm:$0xf]
  %v62 = vld [vmem:[%s0 + $0x34] sm:$0xf]
  %v63 = vld [vmem:[%s0 + $0x38] sm:$0xf]
  %v64 = vld [vmem:[%s0 + $0x3c] sm:$0xf]
  %v65 = vld [vmem:[%s1] sm:$0xf]
  %v66 = vld [vmem:[%s1 + $0x4] sm:$0xf]
  %v67 = vld [vmem:[%s1 + $0x8] sm:$0xf]
  %v68 = vld [vmem:[%s1 + $0xc] sm:$0xf]
  %v85 = vunpack.c.l.b16 %v49
  %v86 = vunpack.c.l.b16 %v50
  %v87 = vunpack.c.l.b16 %v51
  %v88 = vunpack.c.l.b16 %v52
  %v89 = vunpack.c.l.b16 %v53
  %v90 = vunpack.c.l.b16 %v54
  %v91 = vunpack.c.l.b16 %v55
  %v92 = vunpack.c.l.b16 %v56
  %v93 = vunpack.c.l.b16 %v57
  %v94 = vunpack.c.l.b16 %v58
  %v95 = vunpack.c.l.b16 %v59
  %v96 = vunpack.c.l.b16 %v60
  %v97 = vunpack.c.l.b16 %v61
  %v98 = vunpack.c.l.b16 %v62
  %v99 = vunpack.c.l.b16 %v63
  %v100 = vunpack.c.l.b16 %v64
  %v101 = vpack.c.b16 %v86, %v85
  %v102 = vpack.c.b16 %v88, %v87
  %v103 = vpack.c.b16 %v90, %v89
  %v104 = vpack.c.b16 %v92, %v91
  %v105 = vpack.c.b16 %v94, %v93
  %v106 = vpack.c.b16 %v96, %v95
  %v107 = vpack.c.b16 %v98, %v97
  %v108 = vpack.c.b16 %v100, %v99
  %v113 = vunpack.c.l.b16 %v65
  %v114 = vunpack.c.l.b16 %v66
  %v115 = vunpack.c.l.b16 %v67
  %v116 = vunpack.c.l.b16 %v68
  %v117 = vpack.c.b16 %v114, %v113
  %v118 = vpack.c.b16 %v116, %v115
  %vm121 = vcmask 261120
  %v123 = vsel %vm121, %v101, 0
  %v126 = vsel %vm121, %v102, 0
  %v129 = vsel %vm121, %v103, 0
  %v132 = vsel %vm121, %v104, 0
  %v135 = vsel %vm121, %v105, 0
  %v138 = vsel %vm121, %v106, 0
  %v141 = vsel %vm121, %v107, 0
  %v144 = vsel %vm121, %v108, 0
  %146 = vmatpush.bf16.msra.mxu0 0
  %147 = vmatpush.bf16.msra.mxu0 0
  %148 = vmatpush.bf16.msra.mxu0 0
  %149 = vmatpush.bf16.msra.mxu0 0
  %150 = vmatpush.bf16.msra.mxu0 0
  %151 = vmatpush.bf16.msra.mxu0 0
  %152 = vmatpush.bf16.msra.mxu0 %v118
  %153 = vmatpush.bf16.msra.mxu0 %v117
  %154 = vmatmul.bf16.gmra.mxu0 %v123
  %v155 = vpop.f32.mrf.mxu0
  %v156 = vadd.f32 0.0, %v155
  %v157 = vpop.f32.mrf.mxu0
  %v158 = vadd.f32 0.0, %v157
  %159 = vmatmul.bf16.gmra.mxu0 %v126
  %v160 = vpop.f32.mrf.mxu0
  %v161 = vadd.f32 0.0, %v160
  %v162 = vpop.f32.mrf.mxu0
  %v163 = vadd.f32 0.0, %v162
  %164 = vmatmul.bf16.gmra.mxu0 %v129
  %v165 = vpop.f32.mrf.mxu0
  %v166 = vadd.f32 0.0, %v165
  %v167 = vpop.f32.mrf.mxu0
  %v168 = vadd.f32 0.0, %v167
  %169 = vmatmul.bf16.gmra.mxu0 %v132
  %v170 = vpop.f32.mrf.mxu0
  %v171 = vadd.f32 0.0, %v170
  %v172 = vpop.f32.mrf.mxu0
  %v173 = vadd.f32 0.0, %v172
  %174 = vmatmul.bf16.gmra.mxu0 %v135
  %v175 = vpop.f32.mrf.mxu0
  %v176 = vadd.f32 0.0, %v175
  %v177 = vpop.f32.mrf.mxu0
  %v178 = vadd.f32 0.0, %v177
  %179 = vmatmul.bf16.gmra.mxu0 %v138
  %v180 = vpop.f32.mrf.mxu0
  %v181 = vadd.f32 0.0, %v180
  %v182 = vpop.f32.mrf.mxu0
  %v183 = vadd.f32 0.0, %v182
  %184 = vmatmul.bf16.gmra.mxu0 %v141
  %v185 = vpop.f32.mrf.mxu0
  %v186 = vadd.f32 0.0, %v185
  %v187 = vpop.f32.mrf.mxu0
  %v188 = vadd.f32 0.0, %v187
  %189 = vmatmul.bf16.gmra.mxu0 %v144
  %v190 = vpop.f32.mrf.mxu0
  %v191 = vadd.f32 0.0, %v190
  %v192 = vpop.f32.mrf.mxu0
  %v193 = vadd.f32 0.0, %v192
  %194 = vdwg.mxu0
  %v195 = vadd.f32 %v33, %v156
  %v196 = vadd.f32 %v34, %v158
  %v197 = vadd.f32 %v35, %v161
  %v198 = vadd.f32 %v36, %v163
  %v199 = vadd.f32 %v37, %v166
  %v200 = vadd.f32 %v38, %v168
  %v201 = vadd.f32 %v39, %v171
  %v202 = vadd.f32 %v40, %v173
  %v203 = vadd.f32 %v41, %v176
  %v204 = vadd.f32 %v42, %v178
  %v205 = vadd.f32 %v43, %v181
  %v206 = vadd.f32 %v44, %v183
  %v207 = vadd.f32 %v45, %v186
  %v208 = vadd.f32 %v46, %v188
  %v209 = vadd.f32 %v47, %v191
  %v210 = vadd.f32 %v48, %v193
  %vm211 = vcmask 523264
  %212 = vst.msk [vmem:[#allocation2] sm:$0xff] %vm211, %v195
  %213 = vst.msk [vmem:[#allocation2 + $0x8] sm:$0xff] %vm211, %v196
  %214 = vst.msk [vmem:[#allocation2 + $0x10] sm:$0xff] %vm211, %v197
  %215 = vst.msk [vmem:[#allocation2 + $0x18] sm:$0xff] %vm211, %v198
  %216 = vst.msk [vmem:[#allocation2 + $0x20] sm:$0xff] %vm211, %v199
  %217 = vst.msk [vmem:[#allocation2 + $0x28] sm:$0xff] %vm211, %v200
  %218 = vst.msk [vmem:[#allocation2 + $0x30] sm:$0xff] %vm211, %v201
  %219 = vst.msk [vmem:[#allocation2 + $0x38] sm:$0xff] %vm211, %v202
  %220 = vst.msk [vmem:[#allocation2 + $0x40] sm:$0xff] %vm211, %v203
  %221 = vst.msk [vmem:[#allocation2 + $0x48] sm:$0xff] %vm211, %v204
  %222 = vst.msk [vmem:[#allocation2 + $0x50] sm:$0xff] %vm211, %v205
  %223 = vst.msk [vmem:[#allocation2 + $0x58] sm:$0xff] %vm211, %v206
  %224 = vst.msk [vmem:[#allocation2 + $0x60] sm:$0xff] %vm211, %v207
  %225 = vst.msk [vmem:[#allocation2 + $0x68] sm:$0xff] %vm211, %v208
  %226 = vst.msk [vmem:[#allocation2 + $0x70] sm:$0xff] %vm211, %v209
  %227 = vst.msk [vmem:[#allocation2 + $0x78] sm:$0xff] %vm211, %v210
  // Predicated region
  $region14: #{residual_unit_fwd.4} parent=0 // pred_check
    %p228 = pneg %p12
  $region15: #{residual_unit_fwd.4} parent=0 // pred_check_branch
    %230 = sbr.rel (%p228) target = $region17
  $region16: #{residual_unit_fwd.4} parent=0 // pred_region
    %v231 = vld [vmem:[#allocation2] sm:$0xff]
    %v232 = vld [vmem:[#allocation2 + $0x8] sm:$0xff]
    %v233 = vld [vmem:[#allocation2 + $0x10] sm:$0xff]
    %v234 = vld [vmem:[#allocation2 + $0x18] sm:$0xff]
    %v235 = vld [vmem:[#allocation2 + $0x20] sm:$0xff]
    %v236 = vld [vmem:[#allocation2 + $0x28] sm:$0xff]
    %v237 = vld [vmem:[#allocation2 + $0x30] sm:$0xff]
    %v238 = vld [vmem:[#allocation2 + $0x38] sm:$0xff]
    %v239 = vld [vmem:[#allocation2 + $0x40] sm:$0xff]
    %v240 = vld [vmem:[#allocation2 + $0x48] sm:$0xff]
    %v241 = vld [vmem:[#allocation2 + $0x50] sm:$0xff]
    %v242 = vld [vmem:[#allocation2 + $0x58] sm:$0xff]
    %v243 = vld [vmem:[#allocation2 + $0x60] sm:$0xff]
    %v244 = vld [vmem:[#allocation2 + $0x68] sm:$0xff]
    %v245 = vld [vmem:[#allocation2 + $0x70] sm:$0xff]
    %v246 = vld [vmem:[#allocation2 + $0x78] sm:$0xff]
    %v247 = vpack.c.bf16 %v231, %v231
    %v248 = vpack.c.bf16 %v232, %v232
    %v249 = vpack.c.bf16 %v233, %v233
    %v250 = vpack.c.bf16 %v234, %v234
    %v251 = vpack.c.bf16 %v235, %v235
    %v252 = vpack.c.bf16 %v236, %v236
    %v253 = vpack.c.bf16 %v237, %v237
    %v254 = vpack.c.bf16 %v238, %v238
    %v255 = vpack.c.bf16 %v239, %v239
    %v256 = vpack.c.bf16 %v240, %v240
    %v257 = vpack.c.bf16 %v241, %v241
    %v258 = vpack.c.bf16 %v242, %v242
    %v259 = vpack.c.bf16 %v243, %v243
    %v260 = vpack.c.bf16 %v244, %v244
    %v261 = vpack.c.bf16 %v245, %v245
    %v262 = vpack.c.bf16 %v246, %v246
    %vm263 = vcmask 519168
    %264 = vst.msk [vmem:[%s2] sm:$0xf] %vm263, %v247
    %265 = vst.msk [vmem:[%s2 + $0x4] sm:$0xf] %vm263, %v248
    %266 = vst.msk [vmem:[%s2 + $0x8] sm:$0xf] %vm263, %v249
    %267 = vst.msk [vmem:[%s2 + $0xc] sm:$0xf] %vm263, %v250
    %268 = vst.msk [vmem:[%s2 + $0x10] sm:$0xf] %vm263, %v251
    %269 = vst.msk [vmem:[%s2 + $0x14] sm:$0xf] %vm263, %v252
    %270 = vst.msk [vmem:[%s2 + $0x18] sm:$0xf] %vm263, %v253
    %271 = vst.msk [vmem:[%s2 + $0x1c] sm:$0xf] %vm263, %v254
    %272 = vst.msk [vmem:[%s2 + $0x20] sm:$0xf] %vm263, %v255
    %273 = vst.msk [vmem:[%s2 + $0x24] sm:$0xf] %vm263, %v256
    %274 = vst.msk [vmem:[%s2 + $0x28] sm:$0xf] %vm263, %v257
    %275 = vst.msk [vmem:[%s2 + $0x2c] sm:$0xf] %vm263, %v258
    %276 = vst.msk [vmem:[%s2 + $0x30] sm:$0xf] %vm263, %v259
    %277 = vst.msk [vmem:[%s2 + $0x34] sm:$0xf] %vm263, %v260
    %278 = vst.msk [vmem:[%s2 + $0x38] sm:$0xf] %vm263, %v261
    %279 = vst.msk [vmem:[%s2 + $0x3c] sm:$0xf] %vm263, %v262
  $region17: #{residual_unit_fwd.4} parent=0 // pred_fallthru
    _
  // Predicated region
  $region18: #{residual_unit_fwd.4} parent=0 // pred_check
    _
  $region19: #{residual_unit_fwd.4} parent=0 // pred_check_branch
    %281 = sbr.rel (0) target = $region21
  $region20: #{residual_unit_fwd.4} parent=0 // pred_region
    _
  $region21: #{residual_unit_fwd.4} parent=0 // pred_fallthru
    _
  // Predicated region
  $region22: #{residual_unit_fwd.4} parent=0 // pred_check
    _
  $region23: #{residual_unit_fwd.4} parent=0 // pred_check_branch
    %283 = sbr.rel (0) target = $region25
  $region24: #{residual_unit_fwd.4} parent=0 // pred_region
    _
  $region25: #{residual_unit_fwd.4} parent=0 // pred_fallthru
    _

// kernel: residual_unit_fwd.7
$region0: #{residual_unit_fwd.7}
  #allocation0 [shape = 'u32[]', space=smem, size = 0x4, offset = 0x4, fixed_abs, tag = 'smem constant byte address 0x4 - core index']
  #allocation1 [shape = 'u32[72,128]{1,0:T(1,128)}', space=vmem, size = 0x9000, scoped, tag = 'internal scratch']
  #allocation2 [shape = 'f32[128,64]{1,0:T(8,128)}', space=vmem, size = 0x10000, scoped, tag = 'scratch operand']
  %s0 = inlined_call_operand.vmem [shape: bf16[128,16], index: 0, kind: input, shape index: {}]
  %s1 = inlined_call_operand.vmem [shape: bf16[16,64], index: 1, kind: input, shape index: {}]
  %s2 = inlined_call_operand.vmem [shape: bf16[128,64], index: 2, kind: input, shape index: {}]
  %s3 = inlined_call_operand.hbm [shape: f32[128,64], index: 3, kind: output, shape index: {}]
  %s4 = sld [smem:[#allocation0]]
  $region30: #{residual_unit_fwd.7} parent=0
    _
  %s6 = ssub.s32 1, %s4
  %s7 = scalar_select 0, %s6, %s4
  $region1: #{residual_unit_fwd.7} parent=0
    #allocation3 [shape = 'u8[65536]{0}', space=vmem, size = 0x10000, scoped, tag = 'output window, operand 0, single buffered']
    #allocation4 [shape = 's32[1]{0}', space=sflag, size = 0x4, scoped, tag = 'scoped memory for residual_unit_fwd.7']
    %8 = vsyncpa [#allocation4], 0
    // Predicated region
    $region2: #{residual_unit_fwd.7} parent=1 // pred_check
      _
    $region3: #{residual_unit_fwd.7} parent=1 // pred_check_branch
      %10 = sbr.rel (0) target = $region5
    $region4: #{residual_unit_fwd.7} parent=1 // pred_region
      _
    $region5: #{residual_unit_fwd.7} parent=1 // pred_fallthru
      _
    // Predicated region
    $region6: #{residual_unit_fwd.7} parent=1 // pred_check
      _
    $region7: #{residual_unit_fwd.7} parent=1 // pred_check_branch
      %12 = sbr.rel (0) target = $region9
    $region8: #{residual_unit_fwd.7} parent=1 // pred_region
      _
    $region9: #{residual_unit_fwd.7} parent=1 // pred_fallthru
      _
    // Predicated region
    $region10: #{residual_unit_fwd.7} parent=1 // pred_check
      _
    $region11: #{residual_unit_fwd.7} parent=1 // pred_check_branch
      %14 = sbr.rel (0) target = $region13
    $region12: #{residual_unit_fwd.7} parent=1 // pred_region
      _
    $region13: #{residual_unit_fwd.7} parent=1 // pred_fallthru
      _
    %p16 = scmp.eq.s32.totalorder 0, 0
    // Predicated region
    $region14: #{residual_unit_fwd.7} parent=1 // pred_check
      %p17 = pneg %p16
    $region15: #{residual_unit_fwd.7} parent=1 // pred_check_branch
      %19 = sbr.rel (%p17) target = $region17
    $region16: #{residual_unit_fwd.7} parent=1 // pred_region
      %vm20 = vcmask 523264
      %21 = vst.msk [vmem:[#allocation2] sm:$0xff] %vm20, 0.0
      %22 = vst.msk [vmem:[#allocation2 + $0x8] sm:$0xff] %vm20, 0.0
      %23 = vst.msk [vmem:[#allocation2 + $0x10] sm:$0xff] %vm20, 0.0
      %24 = vst.msk [vmem:[#allocation2 + $0x18] sm:$0xff] %vm20, 0.0
      %25 = vst.msk [vmem:[#allocation2 + $0x20] sm:$0xff] %vm20, 0.0
      %26 = vst.msk [vmem:[#allocation2 + $0x28] sm:$0xff] %vm20, 0.0
      %27 = vst.msk [vmem:[#allocation2 + $0x30] sm:$0xff] %vm20, 0.0
      %28 = vst.msk [vmem:[#allocation2 + $0x38] sm:$0xff] %vm20, 0.0
      %29 = vst.msk [vmem:[#allocation2 + $0x40] sm:$0xff] %vm20, 0.0
      %30 = vst.msk [vmem:[#allocation2 + $0x48] sm:$0xff] %vm20, 0.0
      %31 = vst.msk [vmem:[#allocation2 + $0x50] sm:$0xff] %vm20, 0.0
      %32 = vst.msk [vmem:[#allocation2 + $0x58] sm:$0xff] %vm20, 0.0
      %33 = vst.msk [vmem:[#allocation2 + $0x60] sm:$0xff] %vm20, 0.0
      %34 = vst.msk [vmem:[#allocation2 + $0x68] sm:$0xff] %vm20, 0.0
      %35 = vst.msk [vmem:[#allocation2 + $0x70] sm:$0xff] %vm20, 0.0
      %36 = vst.msk [vmem:[#allocation2 + $0x78] sm:$0xff] %vm20, 0.0
    $region17: #{residual_unit_fwd.7} parent=1 // pred_fallthru
      _
    %v37 = vld [vmem:[#allocation2] sm:$0xff]
    %v38 = vld [vmem:[#allocation2 + $0x8] sm:$0xff]
    %v39 = vld [vmem:[#allocation2 + $0x10] sm:$0xff]
    %v40 = vld [vmem:[#allocation2 + $0x18] sm:$0xff]
    %v41 = vld [vmem:[#allocation2 + $0x20] sm:$0xff]
    %v42 = vld [vmem:[#allocation2 + $0x28] sm:$0xff]
    %v43 = vld [vmem:[#allocation2 + $0x30] sm:$0xff]
    %v44 = vld [vmem:[#allocation2 + $0x38] sm:$0xff]
    %v45 = vld [vmem:[#allocation2 + $0x40] sm:$0xff]
    %v46 = vld [vmem:[#allocation2 + $0x48] sm:$0xff]
    %v47 = vld [vmem:[#allocation2 + $0x50] sm:$0xff]
    %v48 = vld [vmem:[#allocation2 + $0x58] sm:$0xff]
    %v49 = vld [vmem:[#allocation2 + $0x60] sm:$0xff]
    %v50 = vld [vmem:[#allocation2 + $0x68] sm:$0xff]
    %v51 = vld [vmem:[#allocation2 + $0x70] sm:$0xff]
    %v52 = vld [vmem:[#allocation2 + $0x78] sm:$0xff]
    %v53 = vld [vmem:[%s0] sm:$0xf]
    %v54 = vld [vmem:[%s0 + $0x4] sm:$0xf]
    %v55 = vld [vmem:[%s0 + $0x8] sm:$0xf]
    %v56 = vld [vmem:[%s0 + $0xc] sm:$0xf]
    %v57 = vld [vmem:[%s0 + $0x10] sm:$0xf]
    %v58 = vld [vmem:[%s0 + $0x14] sm:$0xf]
    %v59 = vld [vmem:[%s0 + $0x18] sm:$0xf]
    %v60 = vld [vmem:[%s0 + $0x1c] sm:$0xf]
    %v61 = vld [vmem:[%s0 + $0x20] sm:$0xf]
    %v62 = vld [vmem:[%s0 + $0x24] sm:$0xf]
    %v63 = vld [vmem:[%s0 + $0x28] sm:$0xf]
    %v64 = vld [vmem:[%s0 + $0x2c] sm:$0xf]
    %v65 = vld [vmem:[%s0 + $0x30] sm:$0xf]
    %v66 = vld [vmem:[%s0 + $0x34] sm:$0xf]
    %v67 = vld [vmem:[%s0 + $0x38] sm:$0xf]
    %v68 = vld [vmem:[%s0 + $0x3c] sm:$0xf]
    %v69 = vld [vmem:[%s1] sm:$0xf]
    %v70 = vld [vmem:[%s1 + $0x4] sm:$0xf]
    %v87 = vunpack.c.l.b16 %v53
    %v88 = vunpack.c.l.b16 %v54
    %v89 = vunpack.c.l.b16 %v55
    %v90 = vunpack.c.l.b16 %v56
    %v91 = vunpack.c.l.b16 %v57
    %v92 = vunpack.c.l.b16 %v58
    %v93 = vunpack.c.l.b16 %v59
    %v94 = vunpack.c.l.b16 %v60
    %v95 = vunpack.c.l.b16 %v61
    %v96 = vunpack.c.l.b16 %v62
    %v97 = vunpack.c.l.b16 %v63
    %v98 = vunpack.c.l.b16 %v64
    %v99 = vunpack.c.l.b16 %v65
    %v100 = vunpack.c.l.b16 %v66
    %v101 = vunpack.c.l.b16 %v67
    %v102 = vunpack.c.l.b16 %v68
    %v103 = vpack.c.b16 %v88, %v87
    %v104 = vpack.c.b16 %v90, %v89
    %v105 = vpack.c.b16 %v92, %v91
    %v106 = vpack.c.b16 %v94, %v93
    %v107 = vpack.c.b16 %v96, %v95
    %v108 = vpack.c.b16 %v98, %v97
    %v109 = vpack.c.b16 %v100, %v99
    %v110 = vpack.c.b16 %v102, %v101
    %v113 = vunpack.c.l.b16 %v69
    %v114 = vunpack.c.l.b16 %v70
    %v115 = vpack.c.b16 %v114, %v113
    %vm117 = vcmask 130048
    %v119 = vsel %vm117, %v103, 0
    %v122 = vsel %vm117, %v104, 0
    %v125 = vsel %vm117, %v105, 0
    %v128 = vsel %vm117, %v106, 0
    %v131 = vsel %vm117, %v107, 0
    %v134 = vsel %vm117, %v108, 0
    %v137 = vsel %vm117, %v109, 0
    %v140 = vsel %vm117, %v110, 0
    %142 = vmatpush.bf16.msra.mxu0 0
    %143 = vmatpush.bf16.msra.mxu0 0
    %144 = vmatpush.bf16.msra.mxu0 0
    %145 = vmatpush.bf16.msra.mxu0 0
    %146 = vmatpush.bf16.msra.mxu0 0
    %147 = vmatpush.bf16.msra.mxu0 0
    %148 = vmatpush.bf16.msra.mxu0 0
    %149 = vmatpush.bf16.msra.mxu0 %v115
    %150 = vmatmul.bf16.gmra.mxu0 %v119
    %v151 = vpop.f32.mrf.mxu0
    %v152 = vadd.f32 0.0, %v151
    %v153 = vpop.f32.mrf.mxu0
    %v154 = vadd.f32 0.0, %v153
    %155 = vmatmul.bf16.gmra.mxu0 %v122
    %v156 = vpop.f32.mrf.mxu0
    %v157 = vadd.f32 0.0, %v156
    %v158 = vpop.f32.mrf.mxu0
    %v159 = vadd.f32 0.0, %v158
    %160 = vmatmul.bf16.gmra.mxu0 %v125
    %v161 = vpop.f32.mrf.mxu0
    %v162 = vadd.f32 0.0, %v161
    %v163 = vpop.f32.mrf.mxu0
    %v164 = vadd.f32 0.0, %v163
    %165 = vmatmul.bf16.gmra.mxu0 %v128
    %v166 = vpop.f32.mrf.mxu0
    %v167 = vadd.f32 0.0, %v166
    %v168 = vpop.f32.mrf.mxu0
    %v169 = vadd.f32 0.0, %v168
    %170 = vmatmul.bf16.gmra.mxu0 %v131
    %v171 = vpop.f32.mrf.mxu0
    %v172 = vadd.f32 0.0, %v171
    %v173 = vpop.f32.mrf.mxu0
    %v174 = vadd.f32 0.0, %v173
    %175 = vmatmul.bf16.gmra.mxu0 %v134
    %v176 = vpop.f32.mrf.mxu0
    %v177 = vadd.f32 0.0, %v176
    %v178 = vpop.f32.mrf.mxu0
    %v179 = vadd.f32 0.0, %v178
    %180 = vmatmul.bf16.gmra.mxu0 %v137
    %v181 = vpop.f32.mrf.mxu0
    %v182 = vadd.f32 0.0, %v181
    %v183 = vpop.f32.mrf.mxu0
    %v184 = vadd.f32 0.0, %v183
    %185 = vmatmul.bf16.gmra.mxu0 %v140
    %v186 = vpop.f32.mrf.mxu0
    %v187 = vadd.f32 0.0, %v186
    %v188 = vpop.f32.mrf.mxu0
    %v189 = vadd.f32 0.0, %v188
    %190 = vdwg.mxu0
    %v191 = vadd.f32 %v37, %v152
    %v192 = vadd.f32 %v38, %v154
    %v193 = vadd.f32 %v39, %v157
    %v194 = vadd.f32 %v40, %v159
    %v195 = vadd.f32 %v41, %v162
    %v196 = vadd.f32 %v42, %v164
    %v197 = vadd.f32 %v43, %v167
    %v198 = vadd.f32 %v44, %v169
    %v199 = vadd.f32 %v45, %v172
    %v200 = vadd.f32 %v46, %v174
    %v201 = vadd.f32 %v47, %v177
    %v202 = vadd.f32 %v48, %v179
    %v203 = vadd.f32 %v49, %v182
    %v204 = vadd.f32 %v50, %v184
    %v205 = vadd.f32 %v51, %v187
    %v206 = vadd.f32 %v52, %v189
    %vm207 = vcmask 523264
    %208 = vst.msk [vmem:[#allocation2] sm:$0xff] %vm207, %v191
    %209 = vst.msk [vmem:[#allocation2 + $0x8] sm:$0xff] %vm207, %v192
    %210 = vst.msk [vmem:[#allocation2 + $0x10] sm:$0xff] %vm207, %v193
    %211 = vst.msk [vmem:[#allocation2 + $0x18] sm:$0xff] %vm207, %v194
    %212 = vst.msk [vmem:[#allocation2 + $0x20] sm:$0xff] %vm207, %v195
    %213 = vst.msk [vmem:[#allocation2 + $0x28] sm:$0xff] %vm207, %v196
    %214 = vst.msk [vmem:[#allocation2 + $0x30] sm:$0xff] %vm207, %v197
    %215 = vst.msk [vmem:[#allocation2 + $0x38] sm:$0xff] %vm207, %v198
    %216 = vst.msk [vmem:[#allocation2 + $0x40] sm:$0xff] %vm207, %v199
    %217 = vst.msk [vmem:[#allocation2 + $0x48] sm:$0xff] %vm207, %v200
    %218 = vst.msk [vmem:[#allocation2 + $0x50] sm:$0xff] %vm207, %v201
    %219 = vst.msk [vmem:[#allocation2 + $0x58] sm:$0xff] %vm207, %v202
    %220 = vst.msk [vmem:[#allocation2 + $0x60] sm:$0xff] %vm207, %v203
    %221 = vst.msk [vmem:[#allocation2 + $0x68] sm:$0xff] %vm207, %v204
    %222 = vst.msk [vmem:[#allocation2 + $0x70] sm:$0xff] %vm207, %v205
    %223 = vst.msk [vmem:[#allocation2 + $0x78] sm:$0xff] %vm207, %v206
    // Predicated region
    $region18: #{residual_unit_fwd.7} parent=1 // pred_check
      %p224 = pneg %p16
    $region19: #{residual_unit_fwd.7} parent=1 // pred_check_branch
      %226 = sbr.rel (%p224) target = $region21
    $region20: #{residual_unit_fwd.7} parent=1 // pred_region
      %v227 = vld [vmem:[#allocation2] sm:$0xff]
      %v228 = vld [vmem:[#allocation2 + $0x8] sm:$0xff]
      %v229 = vld [vmem:[#allocation2 + $0x10] sm:$0xff]
      %v230 = vld [vmem:[#allocation2 + $0x18] sm:$0xff]
      %v231 = vld [vmem:[#allocation2 + $0x20] sm:$0xff]
      %v232 = vld [vmem:[#allocation2 + $0x28] sm:$0xff]
      %v233 = vld [vmem:[#allocation2 + $0x30] sm:$0xff]
      %v234 = vld [vmem:[#allocation2 + $0x38] sm:$0xff]
      %v235 = vld [vmem:[#allocation2 + $0x40] sm:$0xff]
      %v236 = vld [vmem:[#allocation2 + $0x48] sm:$0xff]
      %v237 = vld [vmem:[#allocation2 + $0x50] sm:$0xff]
      %v238 = vld [vmem:[#allocation2 + $0x58] sm:$0xff]
      %v239 = vld [vmem:[#allocation2 + $0x60] sm:$0xff]
      %v240 = vld [vmem:[#allocation2 + $0x68] sm:$0xff]
      %v241 = vld [vmem:[#allocation2 + $0x70] sm:$0xff]
      %v242 = vld [vmem:[#allocation2 + $0x78] sm:$0xff]
      %v243 = vld [vmem:[%s2] sm:$0xf]
      %v244 = vld [vmem:[%s2 + $0x4] sm:$0xf]
      %v245 = vld [vmem:[%s2 + $0x8] sm:$0xf]
      %v246 = vld [vmem:[%s2 + $0xc] sm:$0xf]
      %v247 = vld [vmem:[%s2 + $0x10] sm:$0xf]
      %v248 = vld [vmem:[%s2 + $0x14] sm:$0xf]
      %v249 = vld [vmem:[%s2 + $0x18] sm:$0xf]
      %v250 = vld [vmem:[%s2 + $0x1c] sm:$0xf]
      %v251 = vld [vmem:[%s2 + $0x20] sm:$0xf]
      %v252 = vld [vmem:[%s2 + $0x24] sm:$0xf]
      %v253 = vld [vmem:[%s2 + $0x28] sm:$0xf]
      %v254 = vld [vmem:[%s2 + $0x2c] sm:$0xf]
      %v255 = vld [vmem:[%s2 + $0x30] sm:$0xf]
      %v256 = vld [vmem:[%s2 + $0x34] sm:$0xf]
      %v257 = vld [vmem:[%s2 + $0x38] sm:$0xf]
      %v258 = vld [vmem:[%s2 + $0x3c] sm:$0xf]
      %v259 = vunpack.c.l.bf16 %v243
      %v260 = vunpack.c.l.bf16 %v244
      %v261 = vunpack.c.l.bf16 %v245
      %v262 = vunpack.c.l.bf16 %v246
      %v263 = vunpack.c.l.bf16 %v247
      %v264 = vunpack.c.l.bf16 %v248
      %v265 = vunpack.c.l.bf16 %v249
      %v266 = vunpack.c.l.bf16 %v250
      %v267 = vunpack.c.l.bf16 %v251
      %v268 = vunpack.c.l.bf16 %v252
      %v269 = vunpack.c.l.bf16 %v253
      %v270 = vunpack.c.l.bf16 %v254
      %v271 = vunpack.c.l.bf16 %v255
      %v272 = vunpack.c.l.bf16 %v256
      %v273 = vunpack.c.l.bf16 %v257
      %v274 = vunpack.c.l.bf16 %v258
      %v275 = vadd.f32 %v227, %v259
      %v276 = vadd.f32 %v228, %v260
      %v277 = vadd.f32 %v229, %v261
      %v278 = vadd.f32 %v230, %v262
      %v279 = vadd.f32 %v231, %v263
      %v280 = vadd.f32 %v232, %v264
      %v281 = vadd.f32 %v233, %v265
      %v282 = vadd.f32 %v234, %v266
      %v283 = vadd.f32 %v235, %v267
      %v284 = vadd.f32 %v236, %v268
      %v285 = vadd.f32 %v237, %v269
      %v286 = vadd.f32 %v238, %v270
      %v287 = vadd.f32 %v239, %v271
      %v288 = vadd.f32 %v240, %v272
      %v289 = vadd.f32 %v241, %v273
      %v290 = vadd.f32 %v242, %v274
      %291 = vst.msk [vmem:[#allocation3] sm:$0xff] %vm207, %v275
      %292 = vst.msk [vmem:[#allocation3 + $0x8] sm:$0xff] %vm207, %v276
      %293 = vst.msk [vmem:[#allocation3 + $0x10] sm:$0xff] %vm207, %v277
      %294 = vst.msk [vmem:[#allocation3 + $0x18] sm:$0xff] %vm207, %v278
      %295 = vst.msk [vmem:[#allocation3 + $0x20] sm:$0xff] %vm207, %v279
      %296 = vst.msk [vmem:[#allocation3 + $0x28] sm:$0xff] %vm207, %v280
      %297 = vst.msk [vmem:[#allocation3 + $0x30] sm:$0xff] %vm207, %v281
      %298 = vst.msk [vmem:[#allocation3 + $0x38] sm:$0xff] %vm207, %v282
      %299 = vst.msk [vmem:[#allocation3 + $0x40] sm:$0xff] %vm207, %v283
      %300 = vst.msk [vmem:[#allocation3 + $0x48] sm:$0xff] %vm207, %v284
      %301 = vst.msk [vmem:[#allocation3 + $0x50] sm:$0xff] %vm207, %v285
      %302 = vst.msk [vmem:[#allocation3 + $0x58] sm:$0xff] %vm207, %v286
      %303 = vst.msk [vmem:[#allocation3 + $0x60] sm:$0xff] %vm207, %v287
      %304 = vst.msk [vmem:[#allocation3 + $0x68] sm:$0xff] %vm207, %v288
      %305 = vst.msk [vmem:[#allocation3 + $0x70] sm:$0xff] %vm207, %v289
      %306 = vst.msk [vmem:[#allocation3 + $0x78] sm:$0xff] %vm207, %v290
    $region21: #{residual_unit_fwd.7} parent=1 // pred_fallthru
      _
    // Predicated region
    $region22: #{residual_unit_fwd.7} parent=1 // pred_check
      _
    $region23: #{residual_unit_fwd.7} parent=1 // pred_check_branch
      %308 = sbr.rel (0) target = $region25
    $region24: #{residual_unit_fwd.7} parent=1 // pred_region
      %310 = vsyncadd [#allocation4], 0
      %s311 = sshll.u32 [#allocation3], 4
      %s312 = int_to_ptr.vmem [resolvable:$true] %s311
      %s313 = sshll.u32 %s3, 4
      %s314 = int_to_ptr.hbm [resolvable:$true] %s313
      %319 = dma.vmem_to_hbm [thread:$0]  %s312, 2048, %s314, [#allocation4], 128, 128, 8
    $region25: #{residual_unit_fwd.7} parent=1 // pred_fallthru
      _
    // Predicated region
    $region26: #{residual_unit_fwd.7} parent=1 // pred_check
      _
    $region27: #{residual_unit_fwd.7} parent=1 // pred_check_branch
      %321 = sbr.rel (0) target = $region29
    $region28: #{residual_unit_fwd.7} parent=1 // pred_region
      %323 = dma.done [#allocation4], 2048
    $region29: #{residual_unit_fwd.7} parent=1 // pred_fallthru
      _
    %324 = vsyncpa [#allocation4], 1

// kernel: residual_unit_fwd.6
$region0: #{residual_unit_fwd.6}
  #allocation0 [shape = 'u32[]', space=smem, size = 0x4, offset = 0x4, fixed_abs, tag = 'smem constant byte address 0x4 - core index']
  #allocation1 [shape = 'u32[72,128]{1,0:T(1,128)}', space=vmem, size = 0x9000, scoped, tag = 'internal scratch']
  %s0 = inlined_call_operand.vmem [shape: bf16[2,4,82,16], index: 0, kind: input, shape index: {}]
  %s1 = inlined_call_operand.vmem [shape: bf16[9,16,16], index: 1, kind: input, shape index: {}]
  %s2 = inlined_call_operand.vmem [shape: f32[1,16], index: 2, kind: input, shape index: {}]
  %s3 = inlined_call_operand.vmem [shape: f32[1,16], index: 3, kind: input, shape index: {}]
  %s4 = inlined_call_operand.vmem [shape: bf16[2,72,16], index: 4, kind: output, shape index: {}]
  %s5 = sld [smem:[#allocation0]]
  $region49: #{residual_unit_fwd.6} parent=0
    _
  %s7 = ssub.s32 1, %s5
  %s8 = scalar_select 0, %s7, %s5
  loop: start=0, step=1, limit=4
  $region2: #{residual_unit_fwd.6} parent=0 // loop_pre_header
    _
  $region3: #{residual_unit_fwd.6} parent=0 // loop_header
    %s10 = sphi 0, %s14
    %p11 = scmp.ge.s32.totalorder %s10, 4
    %s20 = sphi 0, %s22
    %s23 = sphi 0, %s20
    %s24 = sphi 0, %s23
    %s40 = sphi 0, %s24
    %s44 = sphi 0, %s44
    %s46 = sphi 0, %s44
    %s47 = sphi 0, %s46
    %s61 = sphi 0, %s47
    %s65 = sphi 0, %s65
    %s67 = sphi 0, %s65
    %s68 = sphi 0, %s67
    %s82 = sphi 0, %s68
    %s86 = sphi 0, %s86
    %s88 = sphi 0, %s86
    %s89 = sphi 0, %s88
    %s103 = sphi 0, %s89
    %s109 = sphi 0, %s111
    %s112 = sphi 0, %s109
    %s113 = sphi 0, %s112
    %s129 = sphi 0, %s113
  $region4: #{residual_unit_fwd.6} parent=0 // loop_header_branch
    %13 = sbr.rel (%p11) target = $region8
  $region5: #{residual_unit_fwd.6} parent=0 // loop_body
    %s15 = ssub.s32 %s10, 1
    %s16 = ssub.s32 %s10, 2
    %s17 = sadd.s32 %s10, 1
    %s18 = ssub.s32 %s10, %s17
    %p19 = scmp.eq.s32.totalorder %s18, 0
    %s21 = sadd.s32 %s20, 1
    %s22 = scalar_select %p19, %s20, %s21
    %p25 = pneg %p19
    %p26 = scmp.eq.s32.totalorder %s10, 1
    %p27 = por %p25, %p26
    %p28 = scmp.ne.s32.totalorder %s20, %s23
    %p29 = scmp.eq.s32.totalorder %s10, 0
    %p30 = por %p28, %p29
    %p31 = scmp.ne.s32.totalorder %s20, %s23
    %p32 = scmp.eq.s32.totalorder %s15, 1
    %p33 = por %p31, %p32
    %p34 = scmp.ne.s32.totalorder %s23, %s24
    %p35 = scmp.eq.s32.totalorder %s15, 0
    %p36 = por %p34, %p35
    %p37 = scmp.ne.s32.totalorder %s23, %s24
    %p38 = scmp.eq.s32.totalorder %s16, 1
    %p39 = por %p37, %p38
    %p41 = scmp.ne.s32.totalorder %s24, %s40
    %p42 = scmp.eq.s32.totalorder %s16, 0
    %p43 = por %p41, %p42
    %s45 = sadd.s32 %s44, 1
    %p48 = scmp.eq.s32.totalorder %s10, 1
    %p49 = scmp.ne.s32.totalorder %s44, %s46
    %p50 = scmp.eq.s32.totalorder %s10, 0
    %p51 = por %p49, %p50
    %p52 = scmp.ne.s32.totalorder %s44, %s46
    %p53 = scmp.eq.s32.totalorder %s15, 1
    %p54 = por %p52, %p53
    %p55 = scmp.ne.s32.totalorder %s46, %s47
    %p56 = scmp.eq.s32.totalorder %s15, 0
    %p57 = por %p55, %p56
    %p58 = scmp.ne.s32.totalorder %s46, %s47
    %p59 = scmp.eq.s32.totalorder %s16, 1
    %p60 = por %p58, %p59
    %p62 = scmp.ne.s32.totalorder %s47, %s61
    %p63 = scmp.eq.s32.totalorder %s16, 0
    %p64 = por %p62, %p63
    %s66 = sadd.s32 %s65, 1
    %p69 = scmp.eq.s32.totalorder %s10, 1
    %p70 = scmp.ne.s32.totalorder %s65, %s67
    %p71 = scmp.eq.s32.totalorder %s10, 0
    %p72 = por %p70, %p71
    %p73 = scmp.ne.s32.totalorder %s65, %s67
    %p74 = scmp.eq.s32.totalorder %s15, 1
    %p75 = por %p73, %p74
    %p76 = scmp.ne.s32.totalorder %s67, %s68
    %p77 = scmp.eq.s32.totalorder %s15, 0
    %p78 = por %p76, %p77
    %p79 = scmp.ne.s32.totalorder %s67, %s68
    %p80 = scmp.eq.s32.totalorder %s16, 1
    %p81 = por %p79, %p80
    %p83 = scmp.ne.s32.totalorder %s68, %s82
    %p84 = scmp.eq.s32.totalorder %s16, 0
    %p85 = por %p83, %p84
    %s87 = sadd.s32 %s86, 1
    %p90 = scmp.eq.s32.totalorder %s10, 1
    %p91 = scmp.ne.s32.totalorder %s86, %s88
    %p92 = scmp.eq.s32.totalorder %s10, 0
    %p93 = por %p91, %p92
    %p94 = scmp.ne.s32.totalorder %s86, %s88
    %p95 = scmp.eq.s32.totalorder %s15, 1
    %p96 = por %p94, %p95
    %p97 = scmp.ne.s32.totalorder %s88, %s89
    %p98 = scmp.eq.s32.totalorder %s15, 0
    %p99 = por %p97, %p98
    %p100 = scmp.ne.s32.totalorder %s88, %s89
    %p101 = scmp.eq.s32.totalorder %s16, 1
    %p102 = por %p100, %p101
    %p104 = scmp.ne.s32.totalorder %s89, %s103
    %p105 = scmp.eq.s32.totalorder %s16, 0
    %p106 = por %p104, %p105
    %s107 = ssub.s32 %s10, %s17
    %p108 = scmp.eq.s32.totalorder %s107, 0
    %s110 = sadd.s32 %s109, 1
    %s111 = scalar_select %p108, %s109, %s110
    %p114 = pneg %p108
    %p115 = scmp.eq.s32.totalorder %s10, 1
    %p116 = por %p114, %p115
    %p117 = scmp.ne.s32.totalorder %s109, %s112
    %p118 = scmp.eq.s32.totalorder %s10, 0
    %p119 = por %p117, %p118
    %p120 = scmp.ne.s32.totalorder %s109, %s112
    %p121 = scmp.eq.s32.totalorder %s15, 1
    %p122 = por %p120, %p121
    %p123 = scmp.ne.s32.totalorder %s112, %s113
    %p124 = scmp.eq.s32.totalorder %s15, 0
    %p125 = por %p123, %p124
    %p126 = scmp.ne.s32.totalorder %s112, %s113
    %p127 = scmp.eq.s32.totalorder %s16, 1
    %p128 = por %p126, %p127
    %p130 = scmp.ne.s32.totalorder %s113, %s129
    %p131 = scmp.eq.s32.totalorder %s16, 0
    %p132 = por %p130, %p131
    %p133 = scmp.le.s32.totalorder 1, %s10
    %p134 = scmp.lt.s32.totalorder %s10, 3
    %p135 = pnand %p133, %p134
    %p136 = pneg %p135
    // Predicated region
    $region9: #{residual_unit_fwd.6} parent=5 // pred_check
      _
    $region10: #{residual_unit_fwd.6} parent=5 // pred_check_branch
      %138 = sbr.rel (%p135) target = $region12
    $region11: #{residual_unit_fwd.6} parent=5 // pred_region
      %s139 = ssub.s32 %s10, 1
      // Predicated region
      $region13: #{residual_unit_fwd.6} parent=11 // pred_check
        %p140 = pneg %p57
      $region14: #{residual_unit_fwd.6} parent=11 // pred_check_branch
        %142 = sbr.rel (%p140) target = $region16
      $region15: #{residual_unit_fwd.6} parent=11 // pred_region
        _
      $region16: #{residual_unit_fwd.6} parent=11 // pred_fallthru
        _
      // Predicated region
      $region17: #{residual_unit_fwd.6} parent=11 // pred_check
        %p143 = pneg %p78
      $region18: #{residual_unit_fwd.6} parent=11 // pred_check_branch
        %145 = sbr.rel (%p143) target = $region20
      $region19: #{residual_unit_fwd.6} parent=11 // pred_region
        _
      $region20: #{residual_unit_fwd.6} parent=11 // pred_fallthru
        _
      // Predicated region
      $region21: #{residual_unit_fwd.6} parent=11 // pred_check
        %p146 = pneg %p99
      $region22: #{residual_unit_fwd.6} parent=11 // pred_check_branch
        %148 = sbr.rel (%p146) target = $region24
      $region23: #{residual_unit_fwd.6} parent=11 // pred_region
        _
      $region24: #{residual_unit_fwd.6} parent=11 // pred_fallthru
        _
    $region12: #{residual_unit_fwd.6} parent=5 // pred_fallthru
      _
    %p149 = scmp.lt.s32.totalorder %s10, 2
    // Predicated region
    $region25: #{residual_unit_fwd.6} parent=5 // pred_check
      %p150 = pneg %p149
    $region26: #{residual_unit_fwd.6} parent=5 // pred_check_branch
      %152 = sbr.rel (%p150) target = $region28
    $region27: #{residual_unit_fwd.6} parent=5 // pred_region
      // Predicated region
      $region29: #{residual_unit_fwd.6} parent=27 // pred_check
        %p153 = pneg %p30
      $region30: #{residual_unit_fwd.6} parent=27 // pred_check_branch
        %155 = sbr.rel (%p153) target = $region32
      $region31: #{residual_unit_fwd.6} parent=27 // pred_region
        %p156 = scmp.lt.s32.totalorder %s10, 1
        %s157 = scalar_select %p156, %s10, 1
        %s158 = smul.addr %s157, 44
        %s159 = smul.addr %s158, 4
        %s160 = scalar_lea.vmem %s0, %s159
      $region32: #{residual_unit_fwd.6} parent=27 // pred_fallthru
        _
    $region28: #{residual_unit_fwd.6} parent=5 // pred_fallthru
      _
    %p161 = scmp.le.s32.totalorder 1, %s10
    %p162 = scmp.lt.s32.totalorder %s10, 3
    %p163 = pnand %p161, %p162
    %p164 = pneg %p163
    // Predicated region
    $region33: #{residual_unit_fwd.6} parent=5 // pred_check
      _
    $region34: #{residual_unit_fwd.6} parent=5 // pred_check_branch
      %166 = sbr.rel (%p163) target = $region36
    $region35: #{residual_unit_fwd.6} parent=5 // pred_region
      %s167 = ssub.s32 %s10, 1
      %p168 = scmp.lt.s32.totalorder %s15, 1
      %s169 = scalar_select %p168, %s15, 1
      %s170 = smul.addr %s169, 44
      %s171 = smul.addr %s170, 4
      %s172 = scalar_lea.vmem %s0, %s171
      %p173 = pneg %p36
      %p174 = pneg %p33
      %p175 = pneg %p57
      %p176 = pneg %p54
      %p177 = pneg %p78
      %p178 = pneg %p75
      %p179 = pneg %p99
      %p180 = pneg %p96
      %p181 = pneg %p125
      %p182 = pneg %p122
      %p183 = scmp.lt.s32.totalorder %s15, 1
      %s184 = scalar_select %p183, %s15, 1
      %s185 = smul.addr %s184, 9
      %s186 = smul.addr %s185, 4
      %s187 = scalar_lea.vmem %s4, %s186
      %p188 = scmp.lt.s32.totalorder %s15, 1
      %s189 = scalar_select %p188, %s15, 1
      %s190 = smul.addr %s189, 44
      %s191 = smul.addr %s190, 4
      %s192 = scalar_lea.vmem %s0, %s191
      %p193 = scmp.lt.s32.totalorder %s15, 1
      %s194 = scalar_select %p193, %s15, 1
      %s195 = smul.addr %s194, 9
      %s196 = smul.addr %s195, 4
      %s197 = scalar_lea.vmem %s4, %s196
      %v199 = vld [vmem:[%s192] sm:$0xf]
      %v200 = vld [vmem:[%s192 + $0x4] sm:$0xf]
      %v201 = vld [vmem:[%s192 + $0x8] sm:$0xf]
      %v202 = vld [vmem:[%s192 + $0xc] sm:$0xf]
      %v203 = vld [vmem:[%s192 + $0x10] sm:$0xf]
      %v204 = vld [vmem:[%s192 + $0x14] sm:$0xf]
      %v205 = vld [vmem:[%s192 + $0x18] sm:$0xf]
      %v206 = vld [vmem:[%s192 + $0x1c] sm:$0xf]
      %v207 = vld [vmem:[%s192 + $0x20] sm:$0xf]
      %v208 = vld [vmem:[%s1] sm:$0xf]
      %v209 = vld [vmem:[%s1 + $0x4] sm:$0xf]
      %s210 = scalar_lea.vmem %s192, 44
      %v211 = vld [vmem:[%s210] sm:$0xf]
      %v212 = vld [vmem:[%s210 + $0x4] sm:$0xf]
      %v213 = vld [vmem:[%s210 + $0x8] sm:$0xf]
      %v214 = vld [vmem:[%s210 + $0xc] sm:$0xf]
      %v215 = vld [vmem:[%s210 + $0x10] sm:$0xf]
      %v216 = vld [vmem:[%s210 + $0x14] sm:$0xf]
      %v217 = vld [vmem:[%s210 + $0x18] sm:$0xf]
      %v218 = vld [vmem:[%s210 + $0x1c] sm:$0xf]
      %v219 = vld [vmem:[%s210 + $0x20] sm:$0xf]
      %s220 = scalar_lea.vmem %s1, 8
      %v221 = vld [vmem:[%s220] sm:$0xf]
      %v222 = vld [vmem:[%s220 + $0x4] sm:$0xf]
      %v232 = vunpack.c.l.b16 %v211
      %v233 = vunpack.c.l.b16 %v212
      %v234 = vunpack.c.l.b16 %v213
      %v235 = vunpack.c.l.b16 %v214
      %v236 = vunpack.c.l.b16 %v215
      %v237 = vunpack.c.l.b16 %v216
      %v238 = vunpack.c.l.b16 %v217
      %v239 = vunpack.c.l.b16 %v218
      %v240 = vunpack.c.l.b16 %v219
      %v241 = vpack.c.b16 %v233, %v232
      %v242 = vpack.c.b16 %v235, %v234
      %v243 = vpack.c.b16 %v237, %v236
      %v244 = vpack.c.b16 %v239, %v238
      %v245 = vpack.c.b16 %v240, %v240
      %v248 = vunpack.c.l.b16 %v221
      %v249 = vunpack.c.l.b16 %v222
      %v250 = vpack.c.b16 %v249, %v248
      %vm252 = vcmask 130048
      %v254 = vsel %vm252, %v241, 0
      %v257 = vsel %vm252, %v242, 0
      %v260 = vsel %vm252, %v243, 0
      %v263 = vsel %vm252, %v244, 0
      %v266 = vsel %vm252, %v245, 0
      %268 = vmatpush.bf16.msra.mxu0 0
      %269 = vmatpush.bf16.msra.mxu0 0
      %270 = vmatpush.bf16.msra.mxu0 0
      %271 = vmatpush.bf16.msra.mxu0 0
      %272 = vmatpush.bf16.msra.mxu0 0
      %273 = vmatpush.bf16.msra.mxu0 0
      %274 = vmatpush.bf16.msra.mxu0 0
      %275 = vmatpush.bf16.msra.mxu0 %v250
      %276 = vmatmul.bf16.gmra.mxu0 %v254
      %v277 = vpop.f32.mrf.mxu0
      %v278 = vadd.f32 0.0, %v277
      %v279 = vpop.f32.mrf.mxu0
      %v280 = vadd.f32 0.0, %v279
      %281 = vmatmul.bf16.gmra.mxu0 %v257
      %v282 = vpop.f32.mrf.mxu0
      %v283 = vadd.f32 0.0, %v282
      %v284 = vpop.f32.mrf.mxu0
      %v285 = vadd.f32 0.0, %v284
      %286 = vmatmul.bf16.gmra.mxu0 %v260
      %v287 = vpop.f32.mrf.mxu0
      %v288 = vadd.f32 0.0, %v287
      %v289 = vpop.f32.mrf.mxu0
      %v290 = vadd.f32 0.0, %v289
      %291 = vmatmul.bf16.gmra.mxu0 %v263
      %v292 = vpop.f32.mrf.mxu0
      %v293 = vadd.f32 0.0, %v292
      %v294 = vpop.f32.mrf.mxu0
      %v295 = vadd.f32 0.0, %v294
      %296 = vmatmul.bf16.gmra.mxu0 %v266
      %v297 = vpop.f32.mrf.mxu0
      %v298 = vadd.f32 0.0, %v297
      %v299 = vpop.f32.mrf.mxu0
      %300 = vdwg.mxu0
      %v310 = vunpack.c.l.b16 %v199
      %v311 = vunpack.c.l.b16 %v200
      %v312 = vunpack.c.l.b16 %v201
      %v313 = vunpack.c.l.b16 %v202
      %v314 = vunpack.c.l.b16 %v203
      %v315 = vunpack.c.l.b16 %v204
      %v316 = vunpack.c.l.b16 %v205
      %v317 = vunpack.c.l.b16 %v206
      %v318 = vunpack.c.l.b16 %v207
      %v319 = vpack.c.b16 %v311, %v310
      %v320 = vpack.c.b16 %v313, %v312
      %v321 = vpack.c.b16 %v315, %v314
      %v322 = vpack.c.b16 %v317, %v316
      %v323 = vpack.c.b16 %v318, %v318
      %v326 = vunpack.c.l.b16 %v208
      %v327 = vunpack.c.l.b16 %v209
      %v328 = vpack.c.b16 %v327, %v326
      %v331 = vsel %vm252, %v319, 0
      %v334 = vsel %vm252, %v320, 0
      %v337 = vsel %vm252, %v321, 0
      %v340 = vsel %vm252, %v322, 0
      %v343 = vsel %vm252, %v323, 0
      %345 = vmatpush.bf16.msra.mxu0 0
      %346 = vmatpush.bf16.msra.mxu0 0
      %347 = vmatpush.bf16.msra.mxu0 0
      %348 = vmatpush.bf16.msra.mxu0 0
      %349 = vmatpush.bf16.msra.mxu0 0
      %350 = vmatpush.bf16.msra.mxu0 0
      %351 = vmatpush.bf16.msra.mxu0 0
      %352 = vmatpush.bf16.msra.mxu0 %v328
      %353 = vmatmul.bf16.gmra.mxu0 %v331
      %v354 = vpop.f32.mrf.mxu0
      %v355 = vadd.f32 %v278, %v354
      %v356 = vpop.f32.mrf.mxu0
      %v357 = vadd.f32 %v280, %v356
      %358 = vmatmul.bf16.gmra.mxu0 %v334
      %v359 = vpop.f32.mrf.mxu0
      %v360 = vadd.f32 %v283, %v359
      %v361 = vpop.f32.mrf.mxu0
      %v362 = vadd.f32 %v285, %v361
      %363 = vmatmul.bf16.gmra.mxu0 %v337
      %v364 = vpop.f32.mrf.mxu0
      %v365 = vadd.f32 %v288, %v364
      %v366 = vpop.f32.mrf.mxu0
      %v367 = vadd.f32 %v290, %v366
      %368 = vmatmul.bf16.gmra.mxu0 %v340
      %v369 = vpop.f32.mrf.mxu0
      %v370 = vadd.f32 %v293, %v369
      %v371 = vpop.f32.mrf.mxu0
      %v372 = vadd.f32 %v295, %v371
      %373 = vmatmul.bf16.gmra.mxu0 %v343
      %v374 = vpop.f32.mrf.mxu0
      %v375 = vadd.f32 %v298, %v374
      %v376 = vpop.f32.mrf.mxu0
      %377 = vdwg.mxu0
      %v378 = vld [vmem:[%s192] sm:$0xf]
      %v379 = vld [vmem:[%s192 + $0x4] sm:$0xf]
      %v380 = vld [vmem:[%s192 + $0x8] sm:$0xf]
      %v381 = vld [vmem:[%s192 + $0xc] sm:$0xf]
      %v382 = vld [vmem:[%s192 + $0x10] sm:$0xf]
      %v383 = vld [vmem:[%s192 + $0x14] sm:$0xf]
      %v384 = vld [vmem:[%s192 + $0x18] sm:$0xf]
      %v385 = vld [vmem:[%s192 + $0x1c] sm:$0xf]
      %v386 = vld [vmem:[%s192 + $0x20] sm:$0xf]
      %v387 = vld [vmem:[%s192 + $0x24] sm:$0x1]
      %s388 = scalar_lea.vmem %s1, 16
      %v389 = vld [vmem:[%s388] sm:$0xf]
      %v390 = vld [vmem:[%s388 + $0x4] sm:$0xf]
      %v401 = vunpack.c.l.b16 %v378
      %v402 = vunpack.c.l.b16 %v379
      %v403 = vunpack.c.l.b16 %v380
      %v404 = vunpack.c.l.b16 %v381
      %v405 = vunpack.c.l.b16 %v382
      %v406 = vunpack.c.l.b16 %v383
      %v407 = vunpack.c.l.b16 %v384
      %v408 = vunpack.c.l.b16 %v385
      %v409 = vunpack.c.l.b16 %v386
      %v410 = vunpack.c.l.b16 %v387
      %v411 = vpack.c.b16 %v402, %v401
      %v412 = vpack.c.b16 %v404, %v403
      %v413 = vpack.c.b16 %v406, %v405
      %v414 = vpack.c.b16 %v408, %v407
      %v415 = vpack.c.b16 %v410, %v409
      %vm416 = vsmask.f32 7424
      %v418 = vshrl.u32 %v411, 16
      %v420 = vshll.u32 %v411, 16
      %v422 = vrot.slane %v420, 1
      %v423 = vor.u32 %v418, %v422
      %v425 = vshll.u32 %v412, 16
      %v427 = vrot.slane %v425, 1
      %v428 = vsel %vm416, %v423, %v427
      %v429 = vshrl.u32 %v412, 16
      %v431 = vor.u32 %v429, %v427
      %v433 = vshll.u32 %v413, 16
      %v435 = vrot.slane %v433, 1
      %v436 = vsel %vm416, %v431, %v435
      %v437 = vshrl.u32 %v413, 16
      %v439 = vor.u32 %v437, %v435
      %v441 = vshll.u32 %v414, 16
      %v443 = vrot.slane %v441, 1
      %v444 = vsel %vm416, %v439, %v443
      %v445 = vshrl.u32 %v414, 16
      %v447 = vor.u32 %v445, %v443
      %v449 = vshll.u32 %v415, 16
      %v451 = vrot.slane %v449, 1
      %v452 = vsel %vm416, %v447, %v451
      %v453 = vshrl.u32 %v415, 16
      %v455 = vor.u32 %v453, %v451
      %v458 = vunpack.c.l.b16 %v389
      %v459 = vunpack.c.l.b16 %v390
      %v460 = vpack.c.b16 %v459, %v458
      %v463 = vsel %vm252, %v428, 0
      %v466 = vsel %vm252, %v436, 0
      %v469 = vsel %vm252, %v444, 0
      %v472 = vsel %vm252, %v452, 0
      %v475 = vsel %vm252, %v455, 0
      %477 = vmatpush.bf16.msra.mxu0 0
      %478 = vmatpush.bf16.msra.mxu0 0
      %479 = vmatpush.bf16.msra.mxu0 0
      %480 = vmatpush.bf16.msra.mxu0 0
      %481 = vmatpush.bf16.msra.mxu0 0
      %482 = vmatpush.bf16.msra.mxu0 0
      %483 = vmatpush.bf16.msra.mxu0 0
      %484 = vmatpush.bf16.msra.mxu0 %v460
      %485 = vmatmul.bf16.gmra.mxu0 %v463
      %v486 = vpop.f32.mrf.mxu0
      %v487 = vadd.f32 0.0, %v486
      %v488 = vpop.f32.mrf.mxu0
      %v489 = vadd.f32 0.0, %v488
      %490 = vmatmul.bf16.gmra.mxu0 %v466
      %v491 = vpop.f32.mrf.mxu0
      %v492 = vadd.f32 0.0, %v491
      %v493 = vpop.f32.mrf.mxu0
      %v494 = vadd.f32 0.0, %v493
      %495 = vmatmul.bf16.gmra.mxu0 %v469
      %v496 = vpop.f32.mrf.mxu0
      %v497 = vadd.f32 0.0, %v496
      %v498 = vpop.f32.mrf.mxu0
      %v499 = vadd.f32 0.0, %v498
      %500 = vmatmul.bf16.gmra.mxu0 %v472
      %v501 = vpop.f32.mrf.mxu0
      %v502 = vadd.f32 0.0, %v501
      %v503 = vpop.f32.mrf.mxu0
      %v504 = vadd.f32 0.0, %v503
      %505 = vmatmul.bf16.gmra.mxu0 %v475
      %v506 = vpop.f32.mrf.mxu0
      %v507 = vadd.f32 0.0, %v506
      %v508 = vpop.f32.mrf.mxu0
      %509 = vdwg.mxu0
      %v510 = vadd.f32 %v355, %v487
      %v511 = vadd.f32 %v357, %v489
      %v512 = vadd.f32 %v360, %v492
      %v513 = vadd.f32 %v362, %v494
      %v514 = vadd.f32 %v365, %v497
      %v515 = vadd.f32 %v367, %v499
      %v516 = vadd.f32 %v370, %v502
      %v517 = vadd.f32 %v372, %v504
      %v518 = vadd.f32 %v375, %v507
      %s519 = scalar_lea.vmem %s192, 88
      %v520 = vld [vmem:[%s519] sm:$0xf]
      %v521 = vld [vmem:[%s519 + $0x4] sm:$0xf]
      %v522 = vld [vmem:[%s519 + $0x8] sm:$0xf]
      %v523 = vld [vmem:[%s519 + $0xc] sm:$0xf]
      %v524 = vld [vmem:[%s519 + $0x10] sm:$0xf]
      %v525 = vld [vmem:[%s519 + $0x14] sm:$0xf]
      %v526 = vld [vmem:[%s519 + $0x18] sm:$0xf]
      %v527 = vld [vmem:[%s519 + $0x1c] sm:$0xf]
      %v528 = vld [vmem:[%s519 + $0x20] sm:$0xf]
      %s529 = scalar_lea.vmem %s1, 24
      %v530 = vld [vmem:[%s529] sm:$0xf]
      %v531 = vld [vmem:[%s529 + $0x4] sm:$0xf]
      %v541 = vunpack.c.l.b16 %v520
      %v542 = vunpack.c.l.b16 %v521
      %v543 = vunpack.c.l.b16 %v522
      %v544 = vunpack.c.l.b16 %v523
      %v545 = vunpack.c.l.b16 %v524
      %v546 = vunpack.c.l.b16 %v525
      %v547 = vunpack.c.l.b16 %v526
      %v548 = vunpack.c.l.b16 %v527
      %v549 = vunpack.c.l.b16 %v528
      %v550 = vpack.c.b16 %v542, %v541
      %v551 = vpack.c.b16 %v544, %v543
      %v552 = vpack.c.b16 %v546, %v545
      %v553 = vpack.c.b16 %v548, %v547
      %v554 = vpack.c.b16 %v549, %v549
      %v557 = vunpack.c.l.b16 %v530
      %v558 = vunpack.c.l.b16 %v531
      %v559 = vpack.c.b16 %v558, %v557
      %v562 = vsel %vm252, %v550, 0
      %v565 = vsel %vm252, %v551, 0
      %v568 = vsel %vm252, %v552, 0
      %v571 = vsel %vm252, %v553, 0
      %v574 = vsel %vm252, %v554, 0
      %576 = vmatpush.bf16.msra.mxu0 0
      %577 = vmatpush.bf16.msra.mxu0 0
      %578 = vmatpush.bf16.msra.mxu0 0
      %579 = vmatpush.bf16.msra.mxu0 0
      %580 = vmatpush.bf16.msra.mxu0 0
      %581 = vmatpush.bf16.msra.mxu0 0
      %582 = vmatpush.bf16.msra.mxu0 0
      %583 = vmatpush.bf16.msra.mxu0 %v559
      %584 = vmatmul.bf16.gmra.mxu0 %v562
      %v585 = vpop.f32.mrf.mxu0
      %v586 = vadd.f32 0.0, %v585
      %v587 = vpop.f32.mrf.mxu0
      %v588 = vadd.f32 0.0, %v587
      %589 = vmatmul.bf16.gmra.mxu0 %v565
      %v590 = vpop.f32.mrf.mxu0
      %v591 = vadd.f32 0.0, %v590
      %v592 = vpop.f32.mrf.mxu0
      %v593 = vadd.f32 0.0, %v592
      %594 = vmatmul.bf16.gmra.mxu0 %v568
      %v595 = vpop.f32.mrf.mxu0
      %v596 = vadd.f32 0.0, %v595
      %v597 = vpop.f32.mrf.mxu0
      %v598 = vadd.f32 0.0, %v597
      %599 = vmatmul.bf16.gmra.mxu0 %v571
      %v600 = vpop.f32.mrf.mxu0
      %v601 = vadd.f32 0.0, %v600
      %v602 = vpop.f32.mrf.mxu0
      %v603 = vadd.f32 0.0, %v602
      %604 = vmatmul.bf16.gmra.mxu0 %v574
      %v605 = vpop.f32.mrf.mxu0
      %v606 = vadd.f32 0.0, %v605
      %v607 = vpop.f32.mrf.mxu0
      %608 = vdwg.mxu0
      %v609 = vadd.f32 %v510, %v586
      %v610 = vadd.f32 %v511, %v588
      %v611 = vadd.f32 %v512, %v591
      %v612 = vadd.f32 %v513, %v593
      %v613 = vadd.f32 %v514, %v596
      %v614 = vadd.f32 %v515, %v598
      %v615 = vadd.f32 %v516, %v601
      %v616 = vadd.f32 %v517, %v603
      %v617 = vadd.f32 %v518, %v606
      %s618 = scalar_lea.vmem %s192, 132
      %v619 = vld [vmem:[%s618] sm:$0xf]
      %v620 = vld [vmem:[%s618 + $0x4] sm:$0xf]
      %v621 = vld [vmem:[%s618 + $0x8] sm:$0xf]
      %v622 = vld [vmem:[%s618 + $0xc] sm:$0xf]
      %v623 = vld [vmem:[%s618 + $0x10] sm:$0xf]
      %v624 = vld [vmem:[%s618 + $0x14] sm:$0xf]
      %v625 = vld [vmem:[%s618 + $0x18] sm:$0xf]
      %v626 = vld [vmem:[%s618 + $0x1c] sm:$0xf]
      %v627 = vld [vmem:[%s618 + $0x20] sm:$0xf]
      %s628 = scalar_lea.vmem %s1, 32
      %v629 = vld [vmem:[%s628] sm:$0xf]
      %v630 = vld [vmem:[%s628 + $0x4] sm:$0xf]
      %v640 = vunpack.c.l.b16 %v619
      %v641 = vunpack.c.l.b16 %v620
      %v642 = vunpack.c.l.b16 %v621
      %v643 = vunpack.c.l.b16 %v622
      %v644 = vunpack.c.l.b16 %v623
      %v645 = vunpack.c.l.b16 %v624
      %v646 = vunpack.c.l.b16 %v625
      %v647 = vunpack.c.l.b16 %v626
      %v648 = vunpack.c.l.b16 %v627
      %v649 = vpack.c.b16 %v641, %v640
      %v650 = vpack.c.b16 %v643, %v642
      %v651 = vpack.c.b16 %v645, %v644
      %v652 = vpack.c.b16 %v647, %v646
      %v653 = vpack.c.b16 %v648, %v648
      %v656 = vunpack.c.l.b16 %v629
      %v657 = vunpack.c.l.b16 %v630
      %v658 = vpack.c.b16 %v657, %v656
      %v661 = vsel %vm252, %v649, 0
      %v664 = vsel %vm252, %v650, 0
      %v667 = vsel %vm252, %v651, 0
      %v670 = vsel %vm252, %v652, 0
      %v673 = vsel %vm252, %v653, 0
      %675 = vmatpush.bf16.msra.mxu0 0
      %676 = vmatpush.bf16.msra.mxu0 0
      %677 = vmatpush.bf16.msra.mxu0 0
      %678 = vmatpush.bf16.msra.mxu0 0
      %679 = vmatpush.bf16.msra.mxu0 0
      %680 = vmatpush.bf16.msra.mxu0 0
      %681 = vmatpush.bf16.msra.mxu0 0
      %682 = vmatpush.bf16.msra.mxu0 %v658
      %683 = vmatmul.bf16.gmra.mxu0 %v661
      %v684 = vpop.f32.mrf.mxu0
      %v685 = vadd.f32 0.0, %v684
      %v686 = vpop.f32.mrf.mxu0
      %v687 = vadd.f32 0.0, %v686
      %688 = vmatmul.bf16.gmra.mxu0 %v664
      %v689 = vpop.f32.mrf.mxu0
      %v690 = vadd.f32 0.0, %v689
      %v691 = vpop.f32.mrf.mxu0
      %v692 = vadd.f32 0.0, %v691
      %693 = vmatmul.bf16.gmra.mxu0 %v667
      %v694 = vpop.f32.mrf.mxu0
      %v695 = vadd.f32 0.0, %v694
      %v696 = vpop.f32.mrf.mxu0
      %v697 = vadd.f32 0.0, %v696
      %698 = vmatmul.bf16.gmra.mxu0 %v670
      %v699 = vpop.f32.mrf.mxu0
      %v700 = vadd.f32 0.0, %v699
      %v701 = vpop.f32.mrf.mxu0
      %v702 = vadd.f32 0.0, %v701
      %703 = vmatmul.bf16.gmra.mxu0 %v673
      %v704 = vpop.f32.mrf.mxu0
      %v705 = vadd.f32 0.0, %v704
      %v706 = vpop.f32.mrf.mxu0
      %707 = vdwg.mxu0
      %v708 = vadd.f32 %v609, %v685
      %v709 = vadd.f32 %v610, %v687
      %v710 = vadd.f32 %v611, %v690
      %v711 = vadd.f32 %v612, %v692
      %v712 = vadd.f32 %v613, %v695
      %v713 = vadd.f32 %v614, %v697
      %v714 = vadd.f32 %v615, %v700
      %v715 = vadd.f32 %v616, %v702
      %v716 = vadd.f32 %v617, %v705
      %v717 = vld [vmem:[%s519] sm:$0xf]
      %v718 = vld [vmem:[%s519 + $0x4] sm:$0xf]
      %v719 = vld [vmem:[%s519 + $0x8] sm:$0xf]
      %v720 = vld [vmem:[%s519 + $0xc] sm:$0xf]
      %v721 = vld [vmem:[%s519 + $0x10] sm:$0xf]
      %v722 = vld [vmem:[%s519 + $0x14] sm:$0xf]
      %v723 = vld [vmem:[%s519 + $0x18] sm:$0xf]
      %v724 = vld [vmem:[%s519 + $0x1c] sm:$0xf]
      %v725 = vld [vmem:[%s519 + $0x20] sm:$0xf]
      %v726 = vld [vmem:[%s519 + $0x24] sm:$0x1]
      %s727 = scalar_lea.vmem %s1, 40
      %v728 = vld [vmem:[%s727] sm:$0xf]
      %v729 = vld [vmem:[%s727 + $0x4] sm:$0xf]
      %v740 = vunpack.c.l.b16 %v717
      %v741 = vunpack.c.l.b16 %v718
      %v742 = vunpack.c.l.b16 %v719
      %v743 = vunpack.c.l.b16 %v720
      %v744 = vunpack.c.l.b16 %v721
      %v745 = vunpack.c.l.b16 %v722
      %v746 = vunpack.c.l.b16 %v723
      %v747 = vunpack.c.l.b16 %v724
      %v748 = vunpack.c.l.b16 %v725
      %v749 = vunpack.c.l.b16 %v726
      %v750 = vpack.c.b16 %v741, %v740
      %v751 = vpack.c.b16 %v743, %v742
      %v752 = vpack.c.b16 %v745, %v744
      %v753 = vpack.c.b16 %v747, %v746
      %v754 = vpack.c.b16 %v749, %v748
      %v756 = vshrl.u32 %v750, 16
      %v758 = vshll.u32 %v750, 16
      %v760 = vrot.slane %v758, 1
      %v761 = vor.u32 %v756, %v760
      %v763 = vshll.u32 %v751, 16
      %v765 = vrot.slane %v763, 1
      %v766 = vsel %vm416, %v761, %v765
      %v767 = vshrl.u32 %v751, 16
      %v769 = vor.u32 %v767, %v765
      %v771 = vshll.u32 %v752, 16
      %v773 = vrot.slane %v771, 1
      %v774 = vsel %vm416, %v769, %v773
      %v775 = vshrl.u32 %v752, 16
      %v777 = vor.u32 %v775, %v773
      %v779 = vshll.u32 %v753, 16
      %v781 = vrot.slane %v779, 1
      %v782 = vsel %vm416, %v777, %v781
      %v783 = vshrl.u32 %v753, 16
      %v785 = vor.u32 %v783, %v781
      %v787 = vshll.u32 %v754, 16
      %v789 = vrot.slane %v787, 1
      %v790 = vsel %vm416, %v785, %v789
      %v791 = vshrl.u32 %v754, 16
      %v793 = vor.u32 %v791, %v789
      %v796 = vunpack.c.l.b16 %v728
      %v797 = vunpack.c.l.b16 %v729
      %v798 = vpack.c.b16 %v797, %v796
      %v801 = vsel %vm252, %v766, 0
      %v804 = vsel %vm252, %v774, 0
      %v807 = vsel %vm252, %v782, 0
      %v810 = vsel %vm252, %v790, 0
      %v813 = vsel %vm252, %v793, 0
      %815 = vmatpush.bf16.msra.mxu0 0
      %816 = vmatpush.bf16.msra.mxu0 0
      %817 = vmatpush.bf16.msra.mxu0 0
      %818 = vmatpush.bf16.msra.mxu0 0
      %819 = vmatpush.bf16.msra.mxu0 0
      %820 = vmatpush.bf16.msra.mxu0 0
      %821 = vmatpush.bf16.msra.mxu0 0
      %822 = vmatpush.bf16.msra.mxu0 %v798
      %823 = vmatmul.bf16.gmra.mxu0 %v801
      %v824 = vpop.f32.mrf.mxu0
      %v825 = vadd.f32 0.0, %v824
      %v826 = vpop.f32.mrf.mxu0
      %v827 = vadd.f32 0.0, %v826
      %828 = vmatmul.bf16.gmra.mxu0 %v804
      %v829 = vpop.f32.mrf.mxu0
      %v830 = vadd.f32 0.0, %v829
      %v831 = vpop.f32.mrf.mxu0
      %v832 = vadd.f32 0.0, %v831
      %833 = vmatmul.bf16.gmra.mxu0 %v807
      %v834 = vpop.f32.mrf.mxu0
      %v835 = vadd.f32 0.0, %v834
      %v836 = vpop.f32.mrf.mxu0
      %v837 = vadd.f32 0.0, %v836
      %838 = vmatmul.bf16.gmra.mxu0 %v810
      %v839 = vpop.f32.mrf.mxu0
      %v840 = vadd.f32 0.0, %v839
      %v841 = vpop.f32.mrf.mxu0
      %v842 = vadd.f32 0.0, %v841
      %843 = vmatmul.bf16.gmra.mxu0 %v813
      %v844 = vpop.f32.mrf.mxu0
      %v845 = vadd.f32 0.0, %v844
      %v846 = vpop.f32.mrf.mxu0
      %847 = vdwg.mxu0
      %v848 = vadd.f32 %v708, %v825
      %v849 = vadd.f32 %v709, %v827
      %v850 = vadd.f32 %v710, %v830
      %v851 = vadd.f32 %v711, %v832
      %v852 = vadd.f32 %v712, %v835
      %v853 = vadd.f32 %v713, %v837
      %v854 = vadd.f32 %v714, %v840
      %v855 = vadd.f32 %v715, %v842
      %v856 = vadd.f32 %v716, %v845
      %v857 = vld [vmem:[%s192 + $0x4] sm:$0xf]
      %v858 = vld [vmem:[%s192 + $0x8] sm:$0xf]
      %v859 = vld [vmem:[%s192 + $0xc] sm:$0xf]
      %v860 = vld [vmem:[%s192 + $0x10] sm:$0xf]
      %v861 = vld [vmem:[%s192 + $0x14] sm:$0xf]
      %v862 = vld [vmem:[%s192 + $0x18] sm:$0xf]
      %v863 = vld [vmem:[%s192 + $0x1c] sm:$0xf]
      %v864 = vld [vmem:[%s192 + $0x20] sm:$0xf]
      %v865 = vld [vmem:[%s192 + $0x24] sm:$0xf]
      %v866 = vld [vmem:[%s192 + $0x28] sm:$0x1]
      %s867 = scalar_lea.vmem %s1, 48
      %v868 = vld [vmem:[%s867] sm:$0xf]
      %v869 = vld [vmem:[%s867 + $0x4] sm:$0xf]
      %v880 = vunpack.c.l.b16 %v857
      %v881 = vunpack.c.l.b16 %v858
      %v882 = vunpack.c.l.b16 %v859
      %v883 = vunpack.c.l.b16 %v860
      %v884 = vunpack.c.l.b16 %v861
      %v885 = vunpack.c.l.b16 %v862
      %v886 = vunpack.c.l.b16 %v863
      %v887 = vunpack.c.l.b16 %v864
      %v888 = vunpack.c.l.b16 %v865
      %v889 = vunpack.c.l.b16 %v866
      %v890 = vpack.c.b16 %v881, %v880
      %v891 = vpack.c.b16 %v883, %v882
      %v892 = vpack.c.b16 %v885, %v884
      %v893 = vpack.c.b16 %v887, %v886
      %v894 = vpack.c.b16 %v889, %v888
      %v896 = vshrl.u32 %v890, 16
      %v898 = vshll.u32 %v890, 16
      %v900 = vrot.slane %v898, 1
      %v901 = vor.u32 %v896, %v900
      %v903 = vshll.u32 %v891, 16
      %v905 = vrot.slane %v903, 1
      %v906 = vsel %vm416, %v901, %v905
      %v907 = vshrl.u32 %v891, 16
      %v909 = vor.u32 %v907, %v905
      %v911 = vshll.u32 %v892, 16
      %v913 = vrot.slane %v911, 1
      %v914 = vsel %vm416, %v909, %v913
      %v915 = vshrl.u32 %v892, 16
      %v917 = vor.u32 %v915, %v913
      %v919 = vshll.u32 %v893, 16
      %v921 = vrot.slane %v919, 1
      %v922 = vsel %vm416, %v917, %v921
      %v923 = vshrl.u32 %v893, 16
      %v925 = vor.u32 %v923, %v921
      %v927 = vshll.u32 %v894, 16
      %v929 = vrot.slane %v927, 1
      %v930 = vsel %vm416, %v925, %v929
      %v931 = vshrl.u32 %v894, 16
      %v933 = vor.u32 %v931, %v929
      %v936 = vunpack.c.l.b16 %v868
      %v937 = vunpack.c.l.b16 %v869
      %v938 = vpack.c.b16 %v937, %v936
      %v941 = vsel %vm252, %v906, 0
      %v944 = vsel %vm252, %v914, 0
      %v947 = vsel %vm252, %v922, 0
      %v950 = vsel %vm252, %v930, 0
      %v953 = vsel %vm252, %v933, 0
      %955 = vmatpush.bf16.msra.mxu0 0
      %956 = vmatpush.bf16.msra.mxu0 0
      %957 = vmatpush.bf16.msra.mxu0 0
      %958 = vmatpush.bf16.msra.mxu0 0
      %959 = vmatpush.bf16.msra.mxu0 0
      %960 = vmatpush.bf16.msra.mxu0 0
      %961 = vmatpush.bf16.msra.mxu0 0
      %962 = vmatpush.bf16.msra.mxu0 %v938
      %963 = vmatmul.bf16.gmra.mxu0 %v941
      %v964 = vpop.f32.mrf.mxu0
      %v965 = vadd.f32 0.0, %v964
      %v966 = vpop.f32.mrf.mxu0
      %v967 = vadd.f32 0.0, %v966
      %968 = vmatmul.bf16.gmra.mxu0 %v944
      %v969 = vpop.f32.mrf.mxu0
      %v970 = vadd.f32 0.0, %v969
      %v971 = vpop.f32.mrf.mxu0
      %v972 = vadd.f32 0.0, %v971
      %973 = vmatmul.bf16.gmra.mxu0 %v947
      %v974 = vpop.f32.mrf.mxu0
      %v975 = vadd.f32 0.0, %v974
      %v976 = vpop.f32.mrf.mxu0
      %v977 = vadd.f32 0.0, %v976
      %978 = vmatmul.bf16.gmra.mxu0 %v950
      %v979 = vpop.f32.mrf.mxu0
      %v980 = vadd.f32 0.0, %v979
      %v981 = vpop.f32.mrf.mxu0
      %v982 = vadd.f32 0.0, %v981
      %983 = vmatmul.bf16.gmra.mxu0 %v953
      %v984 = vpop.f32.mrf.mxu0
      %v985 = vadd.f32 0.0, %v984
      %v986 = vpop.f32.mrf.mxu0
      %987 = vdwg.mxu0
      %v988 = vadd.f32 %v848, %v965
      %v989 = vadd.f32 %v849, %v967
      %v990 = vadd.f32 %v850, %v970
      %v991 = vadd.f32 %v851, %v972
      %v992 = vadd.f32 %v852, %v975
      %v993 = vadd.f32 %v853, %v977
      %v994 = vadd.f32 %v854, %v980
      %v995 = vadd.f32 %v855, %v982
      %v996 = vadd.f32 %v856, %v985
      %v997 = vld [vmem:[%s210 + $0x4] sm:$0xf]
      %v998 = vld [vmem:[%s210 + $0x8] sm:$0xf]
      %v999 = vld [vmem:[%s210 + $0xc] sm:$0xf]
      %v1000 = vld [vmem:[%s210 + $0x10] sm:$0xf]
      %v1001 = vld [vmem:[%s210 + $0x14] sm:$0xf]
      %v1002 = vld [vmem:[%s210 + $0x18] sm:$0xf]
      %v1003 = vld [vmem:[%s210 + $0x1c] sm:$0xf]
      %v1004 = vld [vmem:[%s210 + $0x20] sm:$0xf]
      %v1005 = vld [vmem:[%s210 + $0x24] sm:$0xf]
      %v1006 = vld [vmem:[%s210 + $0x28] sm:$0x1]
      %s1007 = scalar_lea.vmem %s1, 56
      %v1008 = vld [vmem:[%s1007] sm:$0xf]
      %v1009 = vld [vmem:[%s1007 + $0x4] sm:$0xf]
      %v1020 = vunpack.c.l.b16 %v997
      %v1021 = vunpack.c.l.b16 %v998
      %v1022 = vunpack.c.l.b16 %v999
      %v1023 = vunpack.c.l.b16 %v1000
      %v1024 = vunpack.c.l.b16 %v1001
      %v1025 = vunpack.c.l.b16 %v1002
      %v1026 = vunpack.c.l.b16 %v1003
      %v1027 = vunpack.c.l.b16 %v1004
      %v1028 = vunpack.c.l.b16 %v1005
      %v1029 = vunpack.c.l.b16 %v1006
      %v1030 = vpack.c.b16 %v1021, %v1020
      %v1031 = vpack.c.b16 %v1023, %v1022
      %v1032 = vpack.c.b16 %v1025, %v1024
      %v1033 = vpack.c.b16 %v1027, %v1026
      %v1034 = vpack.c.b16 %v1029, %v1028
      %v1036 = vshrl.u32 %v1030, 16
      %v1038 = vshll.u32 %v1030, 16
      %v1040 = vrot.slane %v1038, 1
      %v1041 = vor.u32 %v1036, %v1040
      %v1043 = vshll.u32 %v1031, 16
      %v1045 = vrot.slane %v1043, 1
      %v1046 = vsel %vm416, %v1041, %v1045
      %v1047 = vshrl.u32 %v1031, 16
      %v1049 = vor.u32 %v1047, %v1045
      %v1051 = vshll.u32 %v1032, 16
      %v1053 = vrot.slane %v1051, 1
      %v1054 = vsel %vm416, %v1049, %v1053
      %v1055 = vshrl.u32 %v1032, 16
      %v1057 = vor.u32 %v1055, %v1053
      %v1059 = vshll.u32 %v1033, 16
      %v1061 = vrot.slane %v1059, 1
      %v1062 = vsel %vm416, %v1057, %v1061
      %v1063 = vshrl.u32 %v1033, 16
      %v1065 = vor.u32 %v1063, %v1061
      %v1067 = vshll.u32 %v1034, 16
      %v1069 = vrot.slane %v1067, 1
      %v1070 = vsel %vm416, %v1065, %v1069
      %v1071 = vshrl.u32 %v1034, 16
      %v1073 = vor.u32 %v1071, %v1069
      %v1076 = vunpack.c.l.b16 %v1008
      %v1077 = vunpack.c.l.b16 %v1009
      %v1078 = vpack.c.b16 %v1077, %v1076
      %v1081 = vsel %vm252, %v1046, 0
      %v1084 = vsel %vm252, %v1054, 0
      %v1087 = vsel %vm252, %v1062, 0
      %v1090 = vsel %vm252, %v1070, 0
      %v1093 = vsel %vm252, %v1073, 0
      %1095 = vmatpush.bf16.msra.mxu0 0
      %1096 = vmatpush.bf16.msra.mxu0 0
      %1097 = vmatpush.bf16.msra.mxu0 0
      %1098 = vmatpush.bf16.msra.mxu0 0
      %1099 = vmatpush.bf16.msra.mxu0 0
      %1100 = vmatpush.bf16.msra.mxu0 0
      %1101 = vmatpush.bf16.msra.mxu0 0
      %1102 = vmatpush.bf16.msra.mxu0 %v1078
      %1103 = vmatmul.bf16.gmra.mxu0 %v1081
      %v1104 = vpop.f32.mrf.mxu0
      %v1105 = vadd.f32 0.0, %v1104
      %v1106 = vpop.f32.mrf.mxu0
      %v1107 = vadd.f32 0.0, %v1106
      %1108 = vmatmul.bf16.gmra.mxu0 %v1084
      %v1109 = vpop.f32.mrf.mxu0
      %v1110 = vadd.f32 0.0, %v1109
      %v1111 = vpop.f32.mrf.mxu0
      %v1112 = vadd.f32 0.0, %v1111
      %1113 = vmatmul.bf16.gmra.mxu0 %v1087
      %v1114 = vpop.f32.mrf.mxu0
      %v1115 = vadd.f32 0.0, %v1114
      %v1116 = vpop.f32.mrf.mxu0
      %v1117 = vadd.f32 0.0, %v1116
      %1118 = vmatmul.bf16.gmra.mxu0 %v1090
      %v1119 = vpop.f32.mrf.mxu0
      %v1120 = vadd.f32 0.0, %v1119
      %v1121 = vpop.f32.mrf.mxu0
      %v1122 = vadd.f32 0.0, %v1121
      %1123 = vmatmul.bf16.gmra.mxu0 %v1093
      %v1124 = vpop.f32.mrf.mxu0
      %v1125 = vadd.f32 0.0, %v1124
      %v1126 = vpop.f32.mrf.mxu0
      %1127 = vdwg.mxu0
      %v1128 = vadd.f32 %v988, %v1105
      %v1129 = vadd.f32 %v989, %v1107
      %v1130 = vadd.f32 %v990, %v1110
      %v1131 = vadd.f32 %v991, %v1112
      %v1132 = vadd.f32 %v992, %v1115
      %v1133 = vadd.f32 %v993, %v1117
      %v1134 = vadd.f32 %v994, %v1120
      %v1135 = vadd.f32 %v995, %v1122
      %v1136 = vadd.f32 %v996, %v1125
      %v1137 = vld [vmem:[%s192 + $0x4] sm:$0xe]
      %s1138 = scalar_lea.vmem %s1, 64
      %v1139 = vld [vmem:[%s1138] sm:$0xf]
      %v1140 = vld [vmem:[%s1138 + $0x4] sm:$0xf]
      %v1142 = vunpack.c.l.b16 %v1137
      %v1143 = vpack.c.b16 %v881, %v1142
      %vm1144 = vcmask 1046528
      %v1145 = vrot.slane %v1143, 1
      %v1146 = vrot.slane %v891, 1
      %v1147 = vsel %vm1144, %v1145, %v1146
      %v1148 = vrot.slane %v892, 1
      %v1149 = vsel %vm1144, %v1146, %v1148
      %v1150 = vrot.slane %v893, 1
      %v1151 = vsel %vm1144, %v1148, %v1150
      %v1152 = vrot.slane %v894, 1
      %v1153 = vsel %vm1144, %v1150, %v1152
      %v1156 = vunpack.c.l.b16 %v1139
      %v1157 = vunpack.c.l.b16 %v1140
      %v1158 = vpack.c.b16 %v1157, %v1156
      %v1161 = vsel %vm252, %v1147, 0
      %v1164 = vsel %vm252, %v1149, 0
      %v1167 = vsel %vm252, %v1151, 0
      %v1170 = vsel %vm252, %v1153, 0
      %v1173 = vsel %vm252, %v1152, 0
      %1175 = vmatpush.bf16.msra.mxu0 0
      %1176 = vmatpush.bf16.msra.mxu0 0
      %1177 = vmatpush.bf16.msra.mxu0 0
      %1178 = vmatpush.bf16.msra.mxu0 0
      %1179 = vmatpush.bf16.msra.mxu0 0
      %1180 = vmatpush.bf16.msra.mxu0 0
      %1181 = vmatpush.bf16.msra.mxu0 0
      %1182 = vmatpush.bf16.msra.mxu0 %v1158
      %1183 = vmatmul.bf16.gmra.mxu0 %v1161
      %v1184 = vpop.f32.mrf.mxu0
      %v1185 = vadd.f32 0.0, %v1184
      %v1186 = vpop.f32.mrf.mxu0
      %v1187 = vadd.f32 0.0, %v1186
      %1188 = vmatmul.bf16.gmra.mxu0 %v1164
      %v1189 = vpop.f32.mrf.mxu0
      %v1190 = vadd.f32 0.0, %v1189
      %v1191 = vpop.f32.mrf.mxu0
      %v1192 = vadd.f32 0.0, %v1191
      %1193 = vmatmul.bf16.gmra.mxu0 %v1167
      %v1194 = vpop.f32.mrf.mxu0
      %v1195 = vadd.f32 0.0, %v1194
      %v1196 = vpop.f32.mrf.mxu0
      %v1197 = vadd.f32 0.0, %v1196
      %1198 = vmatmul.bf16.gmra.mxu0 %v1170
      %v1199 = vpop.f32.mrf.mxu0
      %v1200 = vadd.f32 0.0, %v1199
      %v1201 = vpop.f32.mrf.mxu0
      %v1202 = vadd.f32 0.0, %v1201
      %1203 = vmatmul.bf16.gmra.mxu0 %v1173
      %v1204 = vpop.f32.mrf.mxu0
      %v1205 = vadd.f32 0.0, %v1204
      %v1206 = vpop.f32.mrf.mxu0
      %1207 = vdwg.mxu0
      %v1208 = vadd.f32 %v1128, %v1185
      %v1209 = vadd.f32 %v1129, %v1187
      %v1210 = vadd.f32 %v1130, %v1190
      %v1211 = vadd.f32 %v1131, %v1192
      %v1212 = vadd.f32 %v1132, %v1195
      %v1213 = vadd.f32 %v1133, %v1197
      %v1214 = vadd.f32 %v1134, %v1200
      %v1215 = vadd.f32 %v1135, %v1202
      %v1216 = vadd.f32 %v1136, %v1205
      %v1217 = vld [vmem:[%s2] sm:$0x1]
      %v1219 = vperm.slane %v1217, 0
      %v1221 = vmul.f32 %v1208, %v1219
      %v1222 = vmul.f32 %v1209, %v1219
      %v1223 = vmul.f32 %v1210, %v1219
      %v1224 = vmul.f32 %v1211, %v1219
      %v1225 = vmul.f32 %v1212, %v1219
      %v1226 = vmul.f32 %v1213, %v1219
      %v1227 = vmul.f32 %v1214, %v1219
      %v1228 = vmul.f32 %v1215, %v1219
      %v1229 = vmul.f32 %v1216, %v1219
      %v1230 = vld [vmem:[%s3] sm:$0x1]
      %v1232 = vperm.slane %v1230, 0
      %v1234 = vadd.f32 %v1221, %v1232
      %v1235 = vadd.f32 %v1222, %v1232
      %v1236 = vadd.f32 %v1223, %v1232
      %v1237 = vadd.f32 %v1224, %v1232
      %v1238 = vadd.f32 %v1225, %v1232
      %v1239 = vadd.f32 %v1226, %v1232
      %v1240 = vadd.f32 %v1227, %v1232
      %v1241 = vadd.f32 %v1228, %v1232
      %v1242 = vadd.f32 %v1229, %v1232
      %v1243 = vmax.f32 %v1234, 0.0
      %v1244 = vmax.f32 %v1235, 0.0
      %v1245 = vmax.f32 %v1236, 0.0
      %v1246 = vmax.f32 %v1237, 0.0
      %v1247 = vmax.f32 %v1238, 0.0
      %v1248 = vmax.f32 %v1239, 0.0
      %v1249 = vmax.f32 %v1240, 0.0
      %v1250 = vmax.f32 %v1241, 0.0
      %v1251 = vmax.f32 %v1242, 0.0
      %v1252 = vpack.c.bf16 %v1243, %v1243
      %v1253 = vpack.c.bf16 %v1244, %v1244
      %v1254 = vpack.c.bf16 %v1245, %v1245
      %v1255 = vpack.c.bf16 %v1246, %v1246
      %v1256 = vpack.c.bf16 %v1247, %v1247
      %v1257 = vpack.c.bf16 %v1248, %v1248
      %v1258 = vpack.c.bf16 %v1249, %v1249
      %v1259 = vpack.c.bf16 %v1250, %v1250
      %v1260 = vpack.c.bf16 %v1251, %v1251
      %vm1261 = vcmask 125952
      %1262 = vst.msk [vmem:[%s197] sm:$0xf] %vm1261, %v1252
      %1263 = vst.msk [vmem:[%s197 + $0x4] sm:$0xf] %vm1261, %v1253
      %1264 = vst.msk [vmem:[%s197 + $0x8] sm:$0xf] %vm1261, %v1254
      %1265 = vst.msk [vmem:[%s197 + $0xc] sm:$0xf] %vm1261, %v1255
      %1266 = vst.msk [vmem:[%s197 + $0x10] sm:$0xf] %vm1261, %v1256
      %1267 = vst.msk [vmem:[%s197 + $0x14] sm:$0xf] %vm1261, %v1257
      %1268 = vst.msk [vmem:[%s197 + $0x18] sm:$0xf] %vm1261, %v1258
      %1269 = vst.msk [vmem:[%s197 + $0x1c] sm:$0xf] %vm1261, %v1259
      %1270 = vst.msk [vmem:[%s197 + $0x20] sm:$0xf] %vm1261, %v1260
      %p1271 = scmp.lt.s32.totalorder %s15, 1
      %s1272 = scalar_select %p1271, %s15, 1
      %s1273 = smul.addr %s1272, 9
      %s1274 = smul.addr %s1273, 4
      %s1275 = scalar_lea.vmem %s4, %s1274
      // Predicated region
      $region37: #{residual_unit_fwd.6} parent=35 // pred_check
        %p1276 = pneg %p122
      $region38: #{residual_unit_fwd.6} parent=35 // pred_check_branch
        %1278 = sbr.rel (%p1276) target = $region40
      $region39: #{residual_unit_fwd.6} parent=35 // pred_region
        _
      $region40: #{residual_unit_fwd.6} parent=35 // pred_fallthru
        _
    $region36: #{residual_unit_fwd.6} parent=5 // pred_fallthru
      _
    %p1279 = scmp.le.s32.totalorder 2, %s10
    // Predicated region
    $region41: #{residual_unit_fwd.6} parent=5 // pred_check
      %p1280 = pneg %p1279
    $region42: #{residual_unit_fwd.6} parent=5 // pred_check_branch
      %1282 = sbr.rel (%p1280) target = $region44
    $region43: #{residual_unit_fwd.6} parent=5 // pred_region
      %s1283 = ssub.s32 %s10, 2
      // Predicated region
      $region45: #{residual_unit_fwd.6} parent=43 // pred_check
        %p1284 = pneg %p128
      $region46: #{residual_unit_fwd.6} parent=43 // pred_check_branch
        %1286 = sbr.rel (%p1284) target = $region48
      $region47: #{residual_unit_fwd.6} parent=43 // pred_region
        %p1287 = scmp.lt.s32.totalorder %s16, 1
        %s1288 = scalar_select %p1287, %s16, 1
        %s1289 = smul.addr %s1288, 9
        %s1290 = smul.addr %s1289, 4
        %s1291 = scalar_lea.vmem %s4, %s1290
      $region48: #{residual_unit_fwd.6} parent=43 // pred_fallthru
        _
    $region44: #{residual_unit_fwd.6} parent=5 // pred_fallthru
      _
  $region6: #{residual_unit_fwd.6} parent=0 // loop_footer
    %s14 = sadd.s32 1, %s10
  $region7: #{residual_unit_fwd.6} parent=0 // loop_footer_branch
    %9 = sbr.rel target = $region3
  $region8: #{residual_unit_fwd.6} parent=0 // loop_exit
    _

</llo_original>
